<compile_context>
chip_gen: v7x
topology: tpu7x:2x2x1
jax: 0.10.0
libtpu: 0.0.40
codegen_flags: <defaults>
</compile_context>

<pallas_src>
import jax
import jax.numpy as jnp
from jax.experimental import pallas as pl
from jax.experimental.pallas import tpu as pltpu

LATENT_DIM = 32
H1, H2, H3, OUT = 256, 512, 1024, 28 * 28  # 784
OUT_PAD = 896                               # 7 * 128, lane-aligned layer-4 width


def _round_up(x, m):
    return (x + m - 1) // m * m


def decoder_kernel(z_ref, w1_ref, b1_ref, w2_ref, b2_ref,
                   w3_ref, b3_ref, w4_ref, b4_ref, out_ref):
    # Four matmuls + activations fused.  Weights arrive as bf16 (pinned in
    # VMEM across the batch grid); activations are cast to bf16 only for the
    # MXU LHS, accumulation and all elementwise work stay f32.
    h = jnp.dot(z_ref[...].astype(jnp.bfloat16), w1_ref[...],
                preferred_element_type=jnp.float32)
    h = jnp.maximum(h + b1_ref[...], 0.0)

    h = jnp.dot(h.astype(jnp.bfloat16), w2_ref[...],
                preferred_element_type=jnp.float32)
    h = jnp.maximum(h + b2_ref[...], 0.0)

    h = jnp.dot(h.astype(jnp.bfloat16), w3_ref[...],
                preferred_element_type=jnp.float32)
    h = jnp.maximum(h + b3_ref[...], 0.0)

    h = jnp.dot(h.astype(jnp.bfloat16), w4_ref[...],
                preferred_element_type=jnp.float32)
    out_ref[...] = jnp.tanh(h + b4_ref[...])      # tanh -> EUP (free slot)


def _pinned_spec(shape):
    # Weight/bias blocks: full array, constant block index -> DMA'd once,
    # stays VMEM-resident across the batch grid.
    return pl.BlockSpec(shape, lambda i: tuple(0 for _ in shape))


def decoder_forward(z, params, *, lane_pad_threshold=512):
    """z: [B, latent_dim] f32 -> returns [B, 1, 28, 28] f32."""
    (w1, b1), (w2, b2), (w3, b3), (w4, b4) = params
    B, latent = z.shape

    # --- weights: bf16 (halves the dominant HBM traffic); biases stay f32 ---
    w1b = w1.astype(jnp.bfloat16)
    w2b = w2.astype(jnp.bfloat16)
    w3b = w3.astype(jnp.bfloat16)
    w4b = w4.astype(jnp.bfloat16)
    b4f = b4

    # --- optional lane-aligned (multiple-of-128) output for large batches ---
    pad_out = B >= lane_pad_threshold
    out_cols = OUT_PAD if pad_out else OUT
    if pad_out:
        w4b = jnp.pad(w4b, ((0, 0), (0, OUT_PAD - OUT)))
        b4f = jnp.pad(b4f, ((0, 0), (0, OUT_PAD - OUT)))

    # --- batch tiling: stream z/out blocks, pin weights via constant index ---
    # 128 rows satisfy every MXU; for big batches a 256-row tile keeps the
    # v6e/v7x 256x256 MXU full while leaving plenty of VMEM for the pinned
    # weights + double-buffered activation tiles.
    tile_b = 256 if B >= 256 else min(128, _round_up(B, 8))
    B_pad = _round_up(B, tile_b)
    if B_pad != B:
        z = jnp.pad(z, ((0, B_pad - B), (0, 0)))
    grid = (B_pad // tile_b,)

    flat = pl.pallas_call(
        decoder_kernel,
        out_shape=jax.ShapeDtypeStruct((B_pad, out_cols), jnp.float32),
        grid=grid,
        in_specs=[
            pl.BlockSpec((tile_b, latent), lambda i: (i, 0)),   # z: streamed
            _pinned_spec(w1b.shape), _pinned_spec(b1.shape),
            _pinned_spec(w2b.shape), _pinned_spec(b2.shape),
            _pinned_spec(w3b.shape), _pinned_spec(b3.shape),
            _pinned_spec(w4b.shape), _pinned_spec(b4f.shape),
        ],
        out_specs=pl.BlockSpec((tile_b, out_cols), lambda i: (i, 0)),
        compiler_params=pltpu.CompilerParams(
            dimension_semantics=("parallel",),   # shard batch over v7x's 2 TCs
            vmem_limit_bytes=32 << 20,
        ),
    )(z, w1b, b1, w2b, b2, w3b, b3, w4b, b4f)

    if pad_out:
        flat = flat[:, :OUT]
    # Glue: drop batch padding + NCHW reshape (matches .view(-1, 1, 28, 28)).
    return flat[:B].reshape(B, 1, 28, 28)


def init_params(key, latent_dim=LATENT_DIM):
    """Deterministic synthetic init (shapes mirror nn.Linear layers)."""
    dims = [(latent_dim, H1), (H1, H2), (H2, H3), (H3, OUT)]
    params = []
    for i, (fan_in, fan_out) in enumerate(dims):
        kw, kb = jax.random.split(jax.random.fold_in(key, i))
        scale = 1.0 / jnp.sqrt(jnp.float32(fan_in))
        w = jax.random.uniform(kw, (fan_in, fan_out), jnp.float32, -scale, scale)
        b = jax.random.uniform(kb, (1, fan_out), jnp.float32, -scale, scale)
        params.append((w, b))
    return params


def decoder_reference(z, params):
    """Plain-JAX f32 reference for correctness check."""
    (w1, b1), (w2, b2), (w3, b3), (w4, b4) = params
    h = jnp.maximum(z @ w1 + b1, 0.0)
    h = jnp.maximum(h @ w2 + b2, 0.0)
    h = jnp.maximum(h @ w3 + b3, 0.0)
    h = jnp.tanh(h @ w4 + b4)
    return h.reshape(-1, 1, 28, 28)


if __name__ == "__main__":
    key = jax.random.PRNGKey(0)
    k_z, k_p = jax.random.split(key)

    B = 2
    z = jax.random.normal(k_z, (B, LATENT_DIM), jnp.float32)
    params = init_params(k_p)

    out = decoder_forward(z, params)
    out = jax.block_until_ready(out)

    assert out.shape == (B, 1, 28, 28), out.shape
    ref = decoder_reference(z, params)
    # bf16 weights / MXU LHS -> relaxed tolerance vs. the f32 reference.
    assert jnp.allclose(out, ref, atol=3e-2, rtol=3e-2), "mismatch vs reference"

    print("KERNEL_OK")
</pallas_src>

<mosaic_0001>
module attributes {stable_mosaic.version = 11 : i64} {
  func.func @decoder_kernel(%arg0: i32, %arg1: memref<8x32xf32, #tpu.memory_space<vmem>>, %arg2: memref<32x256xbf16, #tpu.memory_space<vmem>>, %arg3: memref<1x256xf32, #tpu.memory_space<vmem>>, %arg4: memref<256x512xbf16, #tpu.memory_space<vmem>>, %arg5: memref<1x512xf32, #tpu.memory_space<vmem>>, %arg6: memref<512x1024xbf16, #tpu.memory_space<vmem>>, %arg7: memref<1x1024xf32, #tpu.memory_space<vmem>>, %arg8: memref<1024x784xbf16, #tpu.memory_space<vmem>>, %arg9: memref<1x784xf32, #tpu.memory_space<vmem>>, %arg10: memref<8x784xf32, #tpu.memory_space<vmem>>) attributes {dimension_semantics = [#tpu.dimension_semantics<parallel>], iteration_bounds = array<i64: 1>, scalar_prefetch = 0 : i64, scratch_operands = 0 : i64, tpu.core_type = #tpu.core_type<tc>, window_params = [{transform_indices = @transform_0, window_bounds = array<i64: 8, 32>}, {pipeline_mode = #tpu.pipeline_mode<synchronous>, transform_indices = @transform_1, window_bounds = array<i64: 32, 256>}, {pipeline_mode = #tpu.pipeline_mode<synchronous>, transform_indices = @transform_2, window_bounds = array<i64: 1, 256>}, {pipeline_mode = #tpu.pipeline_mode<synchronous>, transform_indices = @transform_3, window_bounds = array<i64: 256, 512>}, {pipeline_mode = #tpu.pipeline_mode<synchronous>, transform_indices = @transform_4, window_bounds = array<i64: 1, 512>}, {pipeline_mode = #tpu.pipeline_mode<synchronous>, transform_indices = @transform_5, window_bounds = array<i64: 512, 1024>}, {pipeline_mode = #tpu.pipeline_mode<synchronous>, transform_indices = @transform_6, window_bounds = array<i64: 1, 1024>}, {pipeline_mode = #tpu.pipeline_mode<synchronous>, transform_indices = @transform_7, window_bounds = array<i64: 1024, 784>}, {pipeline_mode = #tpu.pipeline_mode<synchronous>, transform_indices = @transform_8, window_bounds = array<i64: 1, 784>}, {transform_indices = @transform_9, window_bounds = array<i64: 8, 784>}]} {
    %c0 = arith.constant 0 : index
    %c0_0 = arith.constant 0 : index
    %0 = vector.load %arg1[%c0, %c0_0] : memref<8x32xf32, #tpu.memory_space<vmem>>, vector<8x32xf32>
    %1 = arith.truncf %0 : vector<8x32xf32> to vector<8x32xbf16>
    %c0_1 = arith.constant 0 : index
    %c0_2 = arith.constant 0 : index
    %2 = vector.load %arg2[%c0_1, %c0_2] : memref<32x256xbf16, #tpu.memory_space<vmem>>, vector<32x256xbf16>
    %cst = arith.constant dense<0.000000e+00> : vector<8x256xf32>
    %3 = tpu.matmul %1, %2, %cst {dimension_numbers = #tpu.dot_dimension_numbers<[1], [0], [0], [1], [0, 0, 1, 1], [], []>} : vector<8x32xbf16>, vector<32x256xbf16>, vector<8x256xf32> -> vector<8x256xf32>
    %c0_3 = arith.constant 0 : index
    %c0_4 = arith.constant 0 : index
    %4 = vector.load %arg3[%c0_3, %c0_4] : memref<1x256xf32, #tpu.memory_space<vmem>>, vector<1x256xf32>
    %5 = vector.broadcast %4 : vector<1x256xf32> to vector<8x256xf32>
    %6 = arith.addf %3, %5 : vector<8x256xf32>
    %cst_5 = arith.constant 0.000000e+00 : f32
    %7 = vector.broadcast %cst_5 : f32 to vector<8x256xf32>
    %8 = arith.maximumf %6, %7 : vector<8x256xf32>
    %9 = arith.truncf %8 : vector<8x256xf32> to vector<8x256xbf16>
    %c0_6 = arith.constant 0 : index
    %c0_7 = arith.constant 0 : index
    %10 = vector.load %arg4[%c0_6, %c0_7] : memref<256x512xbf16, #tpu.memory_space<vmem>>, vector<256x512xbf16>
    %cst_8 = arith.constant dense<0.000000e+00> : vector<8x512xf32>
    %11 = tpu.matmul %9, %10, %cst_8 {dimension_numbers = #tpu.dot_dimension_numbers<[1], [0], [0], [1], [0, 0, 1, 1], [], []>} : vector<8x256xbf16>, vector<256x512xbf16>, vector<8x512xf32> -> vector<8x512xf32>
    %c0_9 = arith.constant 0 : index
    %c0_10 = arith.constant 0 : index
    %12 = vector.load %arg5[%c0_9, %c0_10] : memref<1x512xf32, #tpu.memory_space<vmem>>, vector<1x512xf32>
    %13 = vector.broadcast %12 : vector<1x512xf32> to vector<8x512xf32>
    %14 = arith.addf %11, %13 : vector<8x512xf32>
    %cst_11 = arith.constant 0.000000e+00 : f32
    %15 = vector.broadcast %cst_11 : f32 to vector<8x512xf32>
    %16 = arith.maximumf %14, %15 : vector<8x512xf32>
    %17 = arith.truncf %16 : vector<8x512xf32> to vector<8x512xbf16>
    %c0_12 = arith.constant 0 : index
    %c0_13 = arith.constant 0 : index
    %18 = vector.load %arg6[%c0_12, %c0_13] : memref<512x1024xbf16, #tpu.memory_space<vmem>>, vector<512x1024xbf16>
    %cst_14 = arith.constant dense<0.000000e+00> : vector<8x1024xf32>
    %19 = tpu.matmul %17, %18, %cst_14 {dimension_numbers = #tpu.dot_dimension_numbers<[1], [0], [0], [1], [0, 0, 1, 1], [], []>} : vector<8x512xbf16>, vector<512x1024xbf16>, vector<8x1024xf32> -> vector<8x1024xf32>
    %c0_15 = arith.constant 0 : index
    %c0_16 = arith.constant 0 : index
    %20 = vector.load %arg7[%c0_15, %c0_16] : memref<1x1024xf32, #tpu.memory_space<vmem>>, vector<1x1024xf32>
    %21 = vector.broadcast %20 : vector<1x1024xf32> to vector<8x1024xf32>
    %22 = arith.addf %19, %21 : vector<8x1024xf32>
    %cst_17 = arith.constant 0.000000e+00 : f32
    %23 = vector.broadcast %cst_17 : f32 to vector<8x1024xf32>
    %24 = arith.maximumf %22, %23 : vector<8x1024xf32>
    %25 = arith.truncf %24 : vector<8x1024xf32> to vector<8x1024xbf16>
    %c0_18 = arith.constant 0 : index
    %c0_19 = arith.constant 0 : index
    %26 = vector.load %arg8[%c0_18, %c0_19] : memref<1024x784xbf16, #tpu.memory_space<vmem>>, vector<1024x784xbf16>
    %cst_20 = arith.constant dense<0.000000e+00> : vector<8x784xf32>
    %27 = tpu.matmul %25, %26, %cst_20 {dimension_numbers = #tpu.dot_dimension_numbers<[1], [0], [0], [1], [0, 0, 1, 1], [], []>} : vector<8x1024xbf16>, vector<1024x784xbf16>, vector<8x784xf32> -> vector<8x784xf32>
    %c0_21 = arith.constant 0 : index
    %c0_22 = arith.constant 0 : index
    %28 = vector.load %arg9[%c0_21, %c0_22] : memref<1x784xf32, #tpu.memory_space<vmem>>, vector<1x784xf32>
    %29 = vector.broadcast %28 : vector<1x784xf32> to vector<8x784xf32>
    %30 = arith.addf %27, %29 : vector<8x784xf32>
    %31 = math.tanh %30 : vector<8x784xf32>
    %c0_23 = arith.constant 0 : index
    %c0_24 = arith.constant 0 : index
    %32 = vector.load %arg10[%c0_23, %c0_24] : memref<8x784xf32, #tpu.memory_space<vmem>>, vector<8x784xf32>
    tpu.vector_store %arg10[%c0_23, %c0_24], %31 {strides = array<i32>} : memref<8x784xf32, #tpu.memory_space<vmem>>, vector<8x784xf32>,
    return
  }
  func.func @transform_0(%arg0: i32) -> (i32, i32) {
    %c0_i32 = arith.constant 0 : i32
    %c0_i32_0 = arith.constant 0 : i32
    return %arg0, %c0_i32 : i32, i32
  }
  func.func @transform_1(%arg0: i32) -> (i32, i32) {
    %c0_i32 = arith.constant 0 : i32
    %c0_i32_0 = arith.constant 0 : i32
    %c0_i32_1 = arith.constant 0 : i32
    return %c0_i32, %c0_i32_0 : i32, i32
  }
  func.func @transform_2(%arg0: i32) -> (i32, i32) {
    %c0_i32 = arith.constant 0 : i32
    %c0_i32_0 = arith.constant 0 : i32
    %c0_i32_1 = arith.constant 0 : i32
    return %c0_i32, %c0_i32_0 : i32, i32
  }
  func.func @transform_3(%arg0: i32) -> (i32, i32) {
    %c0_i32 = arith.constant 0 : i32
    %c0_i32_0 = arith.constant 0 : i32
    %c0_i32_1 = arith.constant 0 : i32
    return %c0_i32, %c0_i32_0 : i32, i32
  }
  func.func @transform_4(%arg0: i32) -> (i32, i32) {
    %c0_i32 = arith.constant 0 : i32
    %c0_i32_0 = arith.constant 0 : i32
    %c0_i32_1 = arith.constant 0 : i32
    return %c0_i32, %c0_i32_0 : i32, i32
  }
  func.func @transform_5(%arg0: i32) -> (i32, i32) {
    %c0_i32 = arith.constant 0 : i32
    %c0_i32_0 = arith.constant 0 : i32
    %c0_i32_1 = arith.constant 0 : i32
    return %c0_i32, %c0_i32_0 : i32, i32
  }
  func.func @transform_6(%arg0: i32) -> (i32, i32) {
    %c0_i32 = arith.constant 0 : i32
    %c0_i32_0 = arith.constant 0 : i32
    %c0_i32_1 = arith.constant 0 : i32
    return %c0_i32, %c0_i32_0 : i32, i32
  }
  func.func @transform_7(%arg0: i32) -> (i32, i32) {
    %c0_i32 = arith.constant 0 : i32
    %c0_i32_0 = arith.constant 0 : i32
    %c0_i32_1 = arith.constant 0 : i32
    return %c0_i32, %c0_i32_0 : i32, i32
  }
  func.func @transform_8(%arg0: i32) -> (i32, i32) {
    %c0_i32 = arith.constant 0 : i32
    %c0_i32_0 = arith.constant 0 : i32
    %c0_i32_1 = arith.constant 0 : i32
    return %c0_i32, %c0_i32_0 : i32, i32
  }
  func.func @transform_9(%arg0: i32) -> (i32, i32) {
    %c0_i32 = arith.constant 0 : i32
    %c0_i32_0 = arith.constant 0 : i32
    return %arg0, %c0_i32 : i32, i32
  }
}

</mosaic_0001>

<llo_original>
// kernel: tpu_custom_call.1
$region0: #{tpu_custom_call.1}
  #allocation0 [shape = 'u32[]', space=smem, size = 0x4, offset = 0x4, fixed_abs, tag = 'smem constant byte address 0x4 - core index']
  #allocation1 [shape = 'u32[144,128]{1,0:T(1,128)}', space=vmem, size = 0x12000, scoped, tag = 'internal scratch']
  %s0 = inlined_call_operand.vmem [shape: f32[8,32], index: 0, kind: input, shape index: {}]
  %s1 = inlined_call_operand.vmem [shape: bf16[32,256], index: 1, kind: input, shape index: {}]
  %s2 = inlined_call_operand.vmem [shape: f32[1,256], index: 2, kind: input, shape index: {}]
  %s3 = inlined_call_operand.vmem [shape: bf16[256,512], index: 3, kind: input, shape index: {}]
  %s4 = inlined_call_operand.vmem [shape: f32[1,512], index: 4, kind: input, shape index: {}]
  %s5 = inlined_call_operand.vmem [shape: bf16[512,1024], index: 5, kind: input, shape index: {}]
  %s6 = inlined_call_operand.vmem [shape: f32[1,1024], index: 6, kind: input, shape index: {}]
  %s7 = inlined_call_operand.vmem [shape: bf16[1024,784], index: 7, kind: input, shape index: {}]
  %s8 = inlined_call_operand.vmem [shape: f32[1,784], index: 8, kind: input, shape index: {}]
  %s9 = inlined_call_operand.hbm [shape: f32[8,784], index: 9, kind: output, shape index: {}]
  %s10 = sld [smem:[#allocation0]]
  $region46: #{tpu_custom_call.1} parent=0
    _
  %s12 = ssub.s32 1, %s10
  %s13 = scalar_select 0, %s12, %s10
  $region1: #{tpu_custom_call.1} parent=0
    #allocation2 [shape = 'u8[28672]{0}', space=vmem, size = 0x7000, scoped, tag = 'output window, operand 0, single buffered']
    #allocation3 [shape = 's32[1]{0}', space=sflag, size = 0x4, scoped, tag = 'scoped memory for tpu_custom_call.1']
    %14 = vsyncpa [#allocation3], 0
    // Predicated region
    $region2: #{tpu_custom_call.1} parent=1 // pred_check
      _
    $region3: #{tpu_custom_call.1} parent=1 // pred_check_branch
      %16 = sbr.rel (0) target = $region5
    $region4: #{tpu_custom_call.1} parent=1 // pred_region
      _
    $region5: #{tpu_custom_call.1} parent=1 // pred_fallthru
      _
    // Predicated region
    $region6: #{tpu_custom_call.1} parent=1 // pred_check
      _
    $region7: #{tpu_custom_call.1} parent=1 // pred_check_branch
      %18 = sbr.rel (0) target = $region9
    $region8: #{tpu_custom_call.1} parent=1 // pred_region
      _
    $region9: #{tpu_custom_call.1} parent=1 // pred_fallthru
      _
    // Predicated region
    $region10: #{tpu_custom_call.1} parent=1 // pred_check
      _
    $region11: #{tpu_custom_call.1} parent=1 // pred_check_branch
      %20 = sbr.rel (0) target = $region13
    $region12: #{tpu_custom_call.1} parent=1 // pred_region
      _
    $region13: #{tpu_custom_call.1} parent=1 // pred_fallthru
      _
    // Predicated region
    $region14: #{tpu_custom_call.1} parent=1 // pred_check
      _
    $region15: #{tpu_custom_call.1} parent=1 // pred_check_branch
      %22 = sbr.rel (0) target = $region17
    $region16: #{tpu_custom_call.1} parent=1 // pred_region
      _
    $region17: #{tpu_custom_call.1} parent=1 // pred_fallthru
      _
    // Predicated region
    $region18: #{tpu_custom_call.1} parent=1 // pred_check
      _
    $region19: #{tpu_custom_call.1} parent=1 // pred_check_branch
      %24 = sbr.rel (0) target = $region21
    $region20: #{tpu_custom_call.1} parent=1 // pred_region
      _
    $region21: #{tpu_custom_call.1} parent=1 // pred_fallthru
      _
    // Predicated region
    $region22: #{tpu_custom_call.1} parent=1 // pred_check
      _
    $region23: #{tpu_custom_call.1} parent=1 // pred_check_branch
      %26 = sbr.rel (0) target = $region25
    $region24: #{tpu_custom_call.1} parent=1 // pred_region
      _
    $region25: #{tpu_custom_call.1} parent=1 // pred_fallthru
      _
    // Predicated region
    $region26: #{tpu_custom_call.1} parent=1 // pred_check
      _
    $region27: #{tpu_custom_call.1} parent=1 // pred_check_branch
      %28 = sbr.rel (0) target = $region29
    $region28: #{tpu_custom_call.1} parent=1 // pred_region
      _
    $region29: #{tpu_custom_call.1} parent=1 // pred_fallthru
      _
    // Predicated region
    $region30: #{tpu_custom_call.1} parent=1 // pred_check
      _
    $region31: #{tpu_custom_call.1} parent=1 // pred_check_branch
      %30 = sbr.rel (0) target = $region33
    $region32: #{tpu_custom_call.1} parent=1 // pred_region
      _
    $region33: #{tpu_custom_call.1} parent=1 // pred_fallthru
      _
    // Predicated region
    $region34: #{tpu_custom_call.1} parent=1 // pred_check
      _
    $region35: #{tpu_custom_call.1} parent=1 // pred_check_branch
      %32 = sbr.rel (0) target = $region37
    $region36: #{tpu_custom_call.1} parent=1 // pred_region
      _
    $region37: #{tpu_custom_call.1} parent=1 // pred_fallthru
      _
    %v34 = vld [vmem:[%s0] sm:$0xff]
    %v35 = vpack.c.bf16 %v34, %v34
    %v36 = vld [vmem:[%s1] sm:$0xff]
    %v37 = vld [vmem:[%s1 + $0x8] sm:$0xff]
    %v38 = vld [vmem:[%s1 + $0x10] sm:$0xff]
    %v39 = vld [vmem:[%s1 + $0x18] sm:$0xff]
    %v40 = vld [vmem:[%s2] sm:$0x3]
    %v42 = vlaneseq
    %v43 = vshrl.u32 %v42, 7
    %v44 = vsub.s32 0, %v43
    %v45 = vrot.slane %v40, %v44
    %v46 = vlaneseq
    %v47 = vshrl.u32 %v46, 7
    %v48 = vsub.s32 1, %v47
    %v49 = vrot.slane %v40, %v48
    %v56 = vunpack.c.l.b16 %v36
    %v57 = vunpack.c.h.b16 %v36
    %v58 = vunpack.c.l.b16 %v37
    %v59 = vunpack.c.h.b16 %v37
    %v60 = vunpack.c.l.b16 %v38
    %v61 = vunpack.c.h.b16 %v38
    %v62 = vunpack.c.l.b16 %v39
    %v63 = vunpack.c.h.b16 %v39
    %v64 = vpack.c.b16 %v58, %v56
    %v65 = vpack.c.b16 %v59, %v57
    %v66 = vpack.c.b16 %v62, %v60
    %v67 = vpack.c.b16 %v63, %v61
    %vm72 = vcmask 261120
    %v74 = vsel %vm72, %v35, 0
    %76 = vmatprep.subr.bf16.mxu0 %v65
    %77 = vmatpush1.bf16.msra.mxu0 %v64
    %78 = vmatprep.subr.bf16.mxu0 %v67
    %79 = vmatpush1.bf16.msra.mxu0 %v66
    %80 = vmatprep.subr.bf16.mxu0 0
    %81 = vmatpush1.bf16.msra.mxu0 0
    %82 = vmatprep.subr.bf16.mxu0 0
    %83 = vmatpush1.bf16.msra.mxu0 0
    %84 = vmatprep.subr.bf16.mxu0 0
    %85 = vmatpush1.bf16.msra.mxu0 0
    %86 = vmatprep.subr.bf16.mxu0 0
    %87 = vmatpush1.bf16.msra.mxu0 0
    %88 = vmatprep.subr.bf16.mxu0 0
    %89 = vmatpush1.bf16.msra.mxu0 0
    %90 = vmatprep.subr.bf16.mxu0 0
    %91 = vmatpush1.bf16.msra.mxu0 0
    %92 = vmatprep.subr.bf16.mxu0 0
    %93 = vmatpush1.bf16.msra.mxu0 0
    %94 = vmatprep.subr.bf16.mxu0 0
    %95 = vmatpush1.bf16.msra.mxu0 0
    %96 = vmatprep.subr.bf16.mxu0 0
    %97 = vmatpush1.bf16.msra.mxu0 0
    %98 = vmatprep.subr.bf16.mxu0 0
    %99 = vmatpush1.bf16.msra.mxu0 0
    %100 = vmatprep.subr.bf16.mxu0 0
    %101 = vmatpush1.bf16.msra.mxu0 0
    %102 = vmatprep.subr.bf16.mxu0 0
    %103 = vmatpush1.bf16.msra.mxu0 0
    %104 = vmatprep.subr.bf16.mxu0 0
    %105 = vmatpush1.bf16.msra.mxu0 0
    %106 = vmatprep.subr.bf16.mxu0 0
    %107 = vmatpush1.bf16.msra.mxu0 0
    %108 = vmatprep.mubr.bf16.mxu0 0
    %109 = vmatmul.mubr.bf16.gmra.mrb[0].mxu0 %v74
    %v110 = vpop.f32.mrb[0].mxu0
    %v111 = vadd.f32 %v45, %v110
    %v112 = vpop.f32.mrb[0].mxu0
    %v113 = vadd.f32 %v49, %v112
    %v114 = vpop.f32.mrb[0].mxu0
    %v115 = vpop.f32.mrb[0].mxu0
    %116 = vdwg.mxu0
    %v117 = vmax.f32 %v111, 0.0
    %v118 = vmax.f32 %v113, 0.0
    %v119 = vpack.c.bf16 %v117, %v117
    %v120 = vpack.c.bf16 %v118, %v118
    %v121 = vld [vmem:[%s3] sm:$0xff]
    %v122 = vld [vmem:[%s3 + $0x8] sm:$0xff]
    %v123 = vld [vmem:[%s3 + $0x10] sm:$0xff]
    %v124 = vld [vmem:[%s3 + $0x18] sm:$0xff]
    %v125 = vld [vmem:[%s3 + $0x20] sm:$0xff]
    %v126 = vld [vmem:[%s3 + $0x28] sm:$0xff]
    %v127 = vld [vmem:[%s3 + $0x30] sm:$0xff]
    %v128 = vld [vmem:[%s3 + $0x38] sm:$0xff]
    %v129 = vld [vmem:[%s3 + $0x40] sm:$0xff]
    %v130 = vld [vmem:[%s3 + $0x48] sm:$0xff]
    %v131 = vld [vmem:[%s3 + $0x50] sm:$0xff]
    %v132 = vld [vmem:[%s3 + $0x58] sm:$0xff]
    %v133 = vld [vmem:[%s3 + $0x60] sm:$0xff]
    %v134 = vld [vmem:[%s3 + $0x68] sm:$0xff]
    %v135 = vld [vmem:[%s3 + $0x70] sm:$0xff]
    %v136 = vld [vmem:[%s3 + $0x78] sm:$0xff]
    %v137 = vld [vmem:[%s3 + $0x80] sm:$0xff]
    %v138 = vld [vmem:[%s3 + $0x88] sm:$0xff]
    %v139 = vld [vmem:[%s3 + $0x90] sm:$0xff]
    %v140 = vld [vmem:[%s3 + $0x98] sm:$0xff]
    %v141 = vld [vmem:[%s3 + $0xa0] sm:$0xff]
    %v142 = vld [vmem:[%s3 + $0xa8] sm:$0xff]
    %v143 = vld [vmem:[%s3 + $0xb0] sm:$0xff]
    %v144 = vld [vmem:[%s3 + $0xb8] sm:$0xff]
    %v145 = vld [vmem:[%s3 + $0xc0] sm:$0xff]
    %v146 = vld [vmem:[%s3 + $0xc8] sm:$0xff]
    %v147 = vld [vmem:[%s3 + $0xd0] sm:$0xff]
    %v148 = vld [vmem:[%s3 + $0xd8] sm:$0xff]
    %v149 = vld [vmem:[%s3 + $0xe0] sm:$0xff]
    %v150 = vld [vmem:[%s3 + $0xe8] sm:$0xff]
    %v151 = vld [vmem:[%s3 + $0xf0] sm:$0xff]
    %v152 = vld [vmem:[%s3 + $0xf8] sm:$0xff]
    %v153 = vld [vmem:[%s3 + $0x100] sm:$0xff]
    %v154 = vld [vmem:[%s3 + $0x108] sm:$0xff]
    %v155 = vld [vmem:[%s3 + $0x110] sm:$0xff]
    %v156 = vld [vmem:[%s3 + $0x118] sm:$0xff]
    %v157 = vld [vmem:[%s3 + $0x120] sm:$0xff]
    %v158 = vld [vmem:[%s3 + $0x128] sm:$0xff]
    %v159 = vld [vmem:[%s3 + $0x130] sm:$0xff]
    %v160 = vld [vmem:[%s3 + $0x138] sm:$0xff]
    %v161 = vld [vmem:[%s3 + $0x140] sm:$0xff]
    %v162 = vld [vmem:[%s3 + $0x148] sm:$0xff]
    %v163 = vld [vmem:[%s3 + $0x150] sm:$0xff]
    %v164 = vld [vmem:[%s3 + $0x158] sm:$0xff]
    %v165 = vld [vmem:[%s3 + $0x160] sm:$0xff]
    %v166 = vld [vmem:[%s3 + $0x168] sm:$0xff]
    %v167 = vld [vmem:[%s3 + $0x170] sm:$0xff]
    %v168 = vld [vmem:[%s3 + $0x178] sm:$0xff]
    %v169 = vld [vmem:[%s3 + $0x180] sm:$0xff]
    %v170 = vld [vmem:[%s3 + $0x188] sm:$0xff]
    %v171 = vld [vmem:[%s3 + $0x190] sm:$0xff]
    %v172 = vld [vmem:[%s3 + $0x198] sm:$0xff]
    %v173 = vld [vmem:[%s3 + $0x1a0] sm:$0xff]
    %v174 = vld [vmem:[%s3 + $0x1a8] sm:$0xff]
    %v175 = vld [vmem:[%s3 + $0x1b0] sm:$0xff]
    %v176 = vld [vmem:[%s3 + $0x1b8] sm:$0xff]
    %v177 = vld [vmem:[%s3 + $0x1c0] sm:$0xff]
    %v178 = vld [vmem:[%s3 + $0x1c8] sm:$0xff]
    %v179 = vld [vmem:[%s3 + $0x1d0] sm:$0xff]
    %v180 = vld [vmem:[%s3 + $0x1d8] sm:$0xff]
    %v181 = vld [vmem:[%s3 + $0x1e0] sm:$0xff]
    %v182 = vld [vmem:[%s3 + $0x1e8] sm:$0xff]
    %v183 = vld [vmem:[%s3 + $0x1f0] sm:$0xff]
    %v184 = vld [vmem:[%s3 + $0x1f8] sm:$0xff]
    %v185 = vld [vmem:[%s4] sm:$0xf]
    %v187 = vlaneseq
    %v188 = vshrl.u32 %v187, 7
    %v189 = vsub.s32 0, %v188
    %v190 = vrot.slane %v185, %v189
    %v191 = vlaneseq
    %v192 = vshrl.u32 %v191, 7
    %v193 = vsub.s32 1, %v192
    %v194 = vrot.slane %v185, %v193
    %v195 = vlaneseq
    %v196 = vshrl.u32 %v195, 7
    %v197 = vsub.s32 2, %v196
    %v198 = vrot.slane %v185, %v197
    %v199 = vlaneseq
    %v200 = vshrl.u32 %v199, 7
    %v201 = vsub.s32 3, %v200
    %v202 = vrot.slane %v185, %v201
    %v271 = vunpack.c.l.b16 %v121
    %v272 = vunpack.c.h.b16 %v121
    %v273 = vunpack.c.l.b16 %v122
    %v274 = vunpack.c.h.b16 %v122
    %v275 = vunpack.c.l.b16 %v123
    %v276 = vunpack.c.h.b16 %v123
    %v277 = vunpack.c.l.b16 %v124
    %v278 = vunpack.c.h.b16 %v124
    %v279 = vunpack.c.l.b16 %v125
    %v280 = vunpack.c.h.b16 %v125
    %v281 = vunpack.c.l.b16 %v126
    %v282 = vunpack.c.h.b16 %v126
    %v283 = vunpack.c.l.b16 %v127
    %v284 = vunpack.c.h.b16 %v127
    %v285 = vunpack.c.l.b16 %v128
    %v286 = vunpack.c.h.b16 %v128
    %v287 = vunpack.c.l.b16 %v129
    %v288 = vunpack.c.h.b16 %v129
    %v289 = vunpack.c.l.b16 %v130
    %v290 = vunpack.c.h.b16 %v130
    %v291 = vunpack.c.l.b16 %v131
    %v292 = vunpack.c.h.b16 %v131
    %v293 = vunpack.c.l.b16 %v132
    %v294 = vunpack.c.h.b16 %v132
    %v295 = vunpack.c.l.b16 %v133
    %v296 = vunpack.c.h.b16 %v133
    %v297 = vunpack.c.l.b16 %v134
    %v298 = vunpack.c.h.b16 %v134
    %v299 = vunpack.c.l.b16 %v135
    %v300 = vunpack.c.h.b16 %v135
    %v301 = vunpack.c.l.b16 %v136
    %v302 = vunpack.c.h.b16 %v136
    %v303 = vunpack.c.l.b16 %v137
    %v304 = vunpack.c.h.b16 %v137
    %v305 = vunpack.c.l.b16 %v138
    %v306 = vunpack.c.h.b16 %v138
    %v307 = vunpack.c.l.b16 %v139
    %v308 = vunpack.c.h.b16 %v139
    %v309 = vunpack.c.l.b16 %v140
    %v310 = vunpack.c.h.b16 %v140
    %v311 = vunpack.c.l.b16 %v141
    %v312 = vunpack.c.h.b16 %v141
    %v313 = vunpack.c.l.b16 %v142
    %v314 = vunpack.c.h.b16 %v142
    %v315 = vunpack.c.l.b16 %v143
    %v316 = vunpack.c.h.b16 %v143
    %v317 = vunpack.c.l.b16 %v144
    %v318 = vunpack.c.h.b16 %v144
    %v319 = vunpack.c.l.b16 %v145
    %v320 = vunpack.c.h.b16 %v145
    %v321 = vunpack.c.l.b16 %v146
    %v322 = vunpack.c.h.b16 %v146
    %v323 = vunpack.c.l.b16 %v147
    %v324 = vunpack.c.h.b16 %v147
    %v325 = vunpack.c.l.b16 %v148
    %v326 = vunpack.c.h.b16 %v148
    %v327 = vunpack.c.l.b16 %v149
    %v328 = vunpack.c.h.b16 %v149
    %v329 = vunpack.c.l.b16 %v150
    %v330 = vunpack.c.h.b16 %v150
    %v331 = vunpack.c.l.b16 %v151
    %v332 = vunpack.c.h.b16 %v151
    %v333 = vunpack.c.l.b16 %v152
    %v334 = vunpack.c.h.b16 %v152
    %v335 = vunpack.c.l.b16 %v153
    %v336 = vunpack.c.h.b16 %v153
    %v337 = vunpack.c.l.b16 %v154
    %v338 = vunpack.c.h.b16 %v154
    %v339 = vunpack.c.l.b16 %v155
    %v340 = vunpack.c.h.b16 %v155
    %v341 = vunpack.c.l.b16 %v156
    %v342 = vunpack.c.h.b16 %v156
    %v343 = vunpack.c.l.b16 %v157
    %v344 = vunpack.c.h.b16 %v157
    %v345 = vunpack.c.l.b16 %v158
    %v346 = vunpack.c.h.b16 %v158
    %v347 = vunpack.c.l.b16 %v159
    %v348 = vunpack.c.h.b16 %v159
    %v349 = vunpack.c.l.b16 %v160
    %v350 = vunpack.c.h.b16 %v160
    %v351 = vunpack.c.l.b16 %v161
    %v352 = vunpack.c.h.b16 %v161
    %v353 = vunpack.c.l.b16 %v162
    %v354 = vunpack.c.h.b16 %v162
    %v355 = vunpack.c.l.b16 %v163
    %v356 = vunpack.c.h.b16 %v163
    %v357 = vunpack.c.l.b16 %v164
    %v358 = vunpack.c.h.b16 %v164
    %v359 = vunpack.c.l.b16 %v165
    %v360 = vunpack.c.h.b16 %v165
    %v361 = vunpack.c.l.b16 %v166
    %v362 = vunpack.c.h.b16 %v166
    %v363 = vunpack.c.l.b16 %v167
    %v364 = vunpack.c.h.b16 %v167
    %v365 = vunpack.c.l.b16 %v168
    %v366 = vunpack.c.h.b16 %v168
    %v367 = vunpack.c.l.b16 %v169
    %v368 = vunpack.c.h.b16 %v169
    %v369 = vunpack.c.l.b16 %v170
    %v370 = vunpack.c.h.b16 %v170
    %v371 = vunpack.c.l.b16 %v171
    %v372 = vunpack.c.h.b16 %v171
    %v373 = vunpack.c.l.b16 %v172
    %v374 = vunpack.c.h.b16 %v172
    %v375 = vunpack.c.l.b16 %v173
    %v376 = vunpack.c.h.b16 %v173
    %v377 = vunpack.c.l.b16 %v174
    %v378 = vunpack.c.h.b16 %v174
    %v379 = vunpack.c.l.b16 %v175
    %v380 = vunpack.c.h.b16 %v175
    %v381 = vunpack.c.l.b16 %v176
    %v382 = vunpack.c.h.b16 %v176
    %v383 = vunpack.c.l.b16 %v177
    %v384 = vunpack.c.h.b16 %v177
    %v385 = vunpack.c.l.b16 %v178
    %v386 = vunpack.c.h.b16 %v178
    %v387 = vunpack.c.l.b16 %v179
    %v388 = vunpack.c.h.b16 %v179
    %v389 = vunpack.c.l.b16 %v180
    %v390 = vunpack.c.h.b16 %v180
    %v391 = vunpack.c.l.b16 %v181
    %v392 = vunpack.c.h.b16 %v181
    %v393 = vunpack.c.l.b16 %v182
    %v394 = vunpack.c.h.b16 %v182
    %v395 = vunpack.c.l.b16 %v183
    %v396 = vunpack.c.h.b16 %v183
    %v397 = vunpack.c.l.b16 %v184
    %v398 = vunpack.c.h.b16 %v184
    %v399 = vpack.c.b16 %v275, %v271
    %v400 = vpack.c.b16 %v276, %v272
    %v401 = vpack.c.b16 %v277, %v273
    %v402 = vpack.c.b16 %v278, %v274
    %v403 = vpack.c.b16 %v283, %v279
    %v404 = vpack.c.b16 %v284, %v280
    %v405 = vpack.c.b16 %v285, %v281
    %v406 = vpack.c.b16 %v286, %v282
    %v407 = vpack.c.b16 %v291, %v287
    %v408 = vpack.c.b16 %v292, %v288
    %v409 = vpack.c.b16 %v293, %v289
    %v410 = vpack.c.b16 %v294, %v290
    %v411 = vpack.c.b16 %v299, %v295
    %v412 = vpack.c.b16 %v300, %v296
    %v413 = vpack.c.b16 %v301, %v297
    %v414 = vpack.c.b16 %v302, %v298
    %v415 = vpack.c.b16 %v307, %v303
    %v416 = vpack.c.b16 %v308, %v304
    %v417 = vpack.c.b16 %v309, %v305
    %v418 = vpack.c.b16 %v310, %v306
    %v419 = vpack.c.b16 %v315, %v311
    %v420 = vpack.c.b16 %v316, %v312
    %v421 = vpack.c.b16 %v317, %v313
    %v422 = vpack.c.b16 %v318, %v314
    %v423 = vpack.c.b16 %v323, %v319
    %v424 = vpack.c.b16 %v324, %v320
    %v425 = vpack.c.b16 %v325, %v321
    %v426 = vpack.c.b16 %v326, %v322
    %v427 = vpack.c.b16 %v331, %v327
    %v428 = vpack.c.b16 %v332, %v328
    %v429 = vpack.c.b16 %v333, %v329
    %v430 = vpack.c.b16 %v334, %v330
    %v431 = vpack.c.b16 %v339, %v335
    %v432 = vpack.c.b16 %v340, %v336
    %v433 = vpack.c.b16 %v341, %v337
    %v434 = vpack.c.b16 %v342, %v338
    %v435 = vpack.c.b16 %v347, %v343
    %v436 = vpack.c.b16 %v348, %v344
    %v437 = vpack.c.b16 %v349, %v345
    %v438 = vpack.c.b16 %v350, %v346
    %v439 = vpack.c.b16 %v355, %v351
    %v440 = vpack.c.b16 %v356, %v352
    %v441 = vpack.c.b16 %v357, %v353
    %v442 = vpack.c.b16 %v358, %v354
    %v443 = vpack.c.b16 %v363, %v359
    %v444 = vpack.c.b16 %v364, %v360
    %v445 = vpack.c.b16 %v365, %v361
    %v446 = vpack.c.b16 %v366, %v362
    %v447 = vpack.c.b16 %v371, %v367
    %v448 = vpack.c.b16 %v372, %v368
    %v449 = vpack.c.b16 %v373, %v369
    %v450 = vpack.c.b16 %v374, %v370
    %v451 = vpack.c.b16 %v379, %v375
    %v452 = vpack.c.b16 %v380, %v376
    %v453 = vpack.c.b16 %v381, %v377
    %v454 = vpack.c.b16 %v382, %v378
    %v455 = vpack.c.b16 %v387, %v383
    %v456 = vpack.c.b16 %v388, %v384
    %v457 = vpack.c.b16 %v389, %v385
    %v458 = vpack.c.b16 %v390, %v386
    %v459 = vpack.c.b16 %v395, %v391
    %v460 = vpack.c.b16 %v396, %v392
    %v461 = vpack.c.b16 %v397, %v393
    %v462 = vpack.c.b16 %v398, %v394
    %527 = vmatprep.subr.bf16.mxu0 %v400
    %528 = vmatpush1.bf16.msra.mxu0 %v399
    %529 = vmatprep.subr.bf16.mxu0 %v404
    %530 = vmatpush1.bf16.msra.mxu0 %v403
    %531 = vmatprep.subr.bf16.mxu0 %v408
    %532 = vmatpush1.bf16.msra.mxu0 %v407
    %533 = vmatprep.subr.bf16.mxu0 %v412
    %534 = vmatpush1.bf16.msra.mxu0 %v411
    %535 = vmatprep.subr.bf16.mxu0 %v416
    %536 = vmatpush1.bf16.msra.mxu0 %v415
    %537 = vmatprep.subr.bf16.mxu0 %v420
    %538 = vmatpush1.bf16.msra.mxu0 %v419
    %539 = vmatprep.subr.bf16.mxu0 %v424
    %540 = vmatpush1.bf16.msra.mxu0 %v423
    %541 = vmatprep.subr.bf16.mxu0 %v428
    %542 = vmatpush1.bf16.msra.mxu0 %v427
    %543 = vmatprep.subr.bf16.mxu0 %v432
    %544 = vmatpush1.bf16.msra.mxu0 %v431
    %545 = vmatprep.subr.bf16.mxu0 %v436
    %546 = vmatpush1.bf16.msra.mxu0 %v435
    %547 = vmatprep.subr.bf16.mxu0 %v440
    %548 = vmatpush1.bf16.msra.mxu0 %v439
    %549 = vmatprep.subr.bf16.mxu0 %v444
    %550 = vmatpush1.bf16.msra.mxu0 %v443
    %551 = vmatprep.subr.bf16.mxu0 %v448
    %552 = vmatpush1.bf16.msra.mxu0 %v447
    %553 = vmatprep.subr.bf16.mxu0 %v452
    %554 = vmatpush1.bf16.msra.mxu0 %v451
    %555 = vmatprep.subr.bf16.mxu0 %v456
    %556 = vmatpush1.bf16.msra.mxu0 %v455
    %557 = vmatprep.subr.bf16.mxu0 %v460
    %558 = vmatpush1.bf16.msra.mxu0 %v459
    %559 = vmatprep.mubr.bf16.mxu0 %v120
    %560 = vmatmul.mubr.bf16.gmra.mrb[0].mxu0 %v119
    %v561 = vpop.f32.mrb[0].mxu0
    %v562 = vadd.f32 %v190, %v561
    %v563 = vpop.f32.mrb[0].mxu0
    %v564 = vadd.f32 %v194, %v563
    %v565 = vpop.f32.mrb[0].mxu0
    %v566 = vpop.f32.mrb[0].mxu0
    %567 = vdwg.mxu0
    %568 = vmatprep.subr.bf16.mxu0 %v402
    %569 = vmatpush1.bf16.msra.mxu0 %v401
    %570 = vmatprep.subr.bf16.mxu0 %v406
    %571 = vmatpush1.bf16.msra.mxu0 %v405
    %572 = vmatprep.subr.bf16.mxu0 %v410
    %573 = vmatpush1.bf16.msra.mxu0 %v409
    %574 = vmatprep.subr.bf16.mxu0 %v414
    %575 = vmatpush1.bf16.msra.mxu0 %v413
    %576 = vmatprep.subr.bf16.mxu0 %v418
    %577 = vmatpush1.bf16.msra.mxu0 %v417
    %578 = vmatprep.subr.bf16.mxu0 %v422
    %579 = vmatpush1.bf16.msra.mxu0 %v421
    %580 = vmatprep.subr.bf16.mxu0 %v426
    %581 = vmatpush1.bf16.msra.mxu0 %v425
    %582 = vmatprep.subr.bf16.mxu0 %v430
    %583 = vmatpush1.bf16.msra.mxu0 %v429
    %584 = vmatprep.subr.bf16.mxu0 %v434
    %585 = vmatpush1.bf16.msra.mxu0 %v433
    %586 = vmatprep.subr.bf16.mxu0 %v438
    %587 = vmatpush1.bf16.msra.mxu0 %v437
    %588 = vmatprep.subr.bf16.mxu0 %v442
    %589 = vmatpush1.bf16.msra.mxu0 %v441
    %590 = vmatprep.subr.bf16.mxu0 %v446
    %591 = vmatpush1.bf16.msra.mxu0 %v445
    %592 = vmatprep.subr.bf16.mxu0 %v450
    %593 = vmatpush1.bf16.msra.mxu0 %v449
    %594 = vmatprep.subr.bf16.mxu0 %v454
    %595 = vmatpush1.bf16.msra.mxu0 %v453
    %596 = vmatprep.subr.bf16.mxu0 %v458
    %597 = vmatpush1.bf16.msra.mxu0 %v457
    %598 = vmatprep.subr.bf16.mxu0 %v462
    %599 = vmatpush1.bf16.msra.mxu0 %v461
    %600 = vmatprep.mubr.bf16.mxu0 %v120
    %601 = vmatmul.mubr.bf16.gmra.mrb[0].mxu0 %v119
    %v602 = vpop.f32.mrb[0].mxu0
    %v603 = vadd.f32 %v198, %v602
    %v604 = vpop.f32.mrb[0].mxu0
    %v605 = vadd.f32 %v202, %v604
    %v606 = vpop.f32.mrb[0].mxu0
    %v607 = vpop.f32.mrb[0].mxu0
    %608 = vdwg.mxu0
    %v609 = vmax.f32 %v562, 0.0
    %v610 = vmax.f32 %v564, 0.0
    %v611 = vmax.f32 %v603, 0.0
    %v612 = vmax.f32 %v605, 0.0
    %v613 = vpack.c.bf16 %v609, %v609
    %v614 = vpack.c.bf16 %v610, %v610
    %v615 = vpack.c.bf16 %v611, %v611
    %v616 = vpack.c.bf16 %v612, %v612
    %v617 = vld [vmem:[%s5] sm:$0xff]
    %v618 = vld [vmem:[%s5 + $0x8] sm:$0xff]
    %v619 = vld [vmem:[%s5 + $0x10] sm:$0xff]
    %v620 = vld [vmem:[%s5 + $0x18] sm:$0xff]
    %v621 = vld [vmem:[%s5 + $0x20] sm:$0xff]
    %v622 = vld [vmem:[%s5 + $0x28] sm:$0xff]
    %v623 = vld [vmem:[%s5 + $0x30] sm:$0xff]
    %v624 = vld [vmem:[%s5 + $0x38] sm:$0xff]
    %v625 = vld [vmem:[%s5 + $0x40] sm:$0xff]
    %v626 = vld [vmem:[%s5 + $0x48] sm:$0xff]
    %v627 = vld [vmem:[%s5 + $0x50] sm:$0xff]
    %v628 = vld [vmem:[%s5 + $0x58] sm:$0xff]
    %v629 = vld [vmem:[%s5 + $0x60] sm:$0xff]
    %v630 = vld [vmem:[%s5 + $0x68] sm:$0xff]
    %v631 = vld [vmem:[%s5 + $0x70] sm:$0xff]
    %v632 = vld [vmem:[%s5 + $0x78] sm:$0xff]
    %v633 = vld [vmem:[%s5 + $0x80] sm:$0xff]
    %v634 = vld [vmem:[%s5 + $0x88] sm:$0xff]
    %v635 = vld [vmem:[%s5 + $0x90] sm:$0xff]
    %v636 = vld [vmem:[%s5 + $0x98] sm:$0xff]
    %v637 = vld [vmem:[%s5 + $0xa0] sm:$0xff]
    %v638 = vld [vmem:[%s5 + $0xa8] sm:$0xff]
    %v639 = vld [vmem:[%s5 + $0xb0] sm:$0xff]
    %v640 = vld [vmem:[%s5 + $0xb8] sm:$0xff]
    %v641 = vld [vmem:[%s5 + $0xc0] sm:$0xff]
    %v642 = vld [vmem:[%s5 + $0xc8] sm:$0xff]
    %v643 = vld [vmem:[%s5 + $0xd0] sm:$0xff]
    %v644 = vld [vmem:[%s5 + $0xd8] sm:$0xff]
    %v645 = vld [vmem:[%s5 + $0xe0] sm:$0xff]
    %v646 = vld [vmem:[%s5 + $0xe8] sm:$0xff]
    %v647 = vld [vmem:[%s5 + $0xf0] sm:$0xff]
    %v648 = vld [vmem:[%s5 + $0xf8] sm:$0xff]
    %v649 = vld [vmem:[%s5 + $0x100] sm:$0xff]
    %v650 = vld [vmem:[%s5 + $0x108] sm:$0xff]
    %v651 = vld [vmem:[%s5 + $0x110] sm:$0xff]
    %v652 = vld [vmem:[%s5 + $0x118] sm:$0xff]
    %v653 = vld [vmem:[%s5 + $0x120] sm:$0xff]
    %v654 = vld [vmem:[%s5 + $0x128] sm:$0xff]
    %v655 = vld [vmem:[%s5 + $0x130] sm:$0xff]
    %v656 = vld [vmem:[%s5 + $0x138] sm:$0xff]
    %v657 = vld [vmem:[%s5 + $0x140] sm:$0xff]
    %v658 = vld [vmem:[%s5 + $0x148] sm:$0xff]
    %v659 = vld [vmem:[%s5 + $0x150] sm:$0xff]
    %v660 = vld [vmem:[%s5 + $0x158] sm:$0xff]
    %v661 = vld [vmem:[%s5 + $0x160] sm:$0xff]
    %v662 = vld [vmem:[%s5 + $0x168] sm:$0xff]
    %v663 = vld [vmem:[%s5 + $0x170] sm:$0xff]
    %v664 = vld [vmem:[%s5 + $0x178] sm:$0xff]
    %v665 = vld [vmem:[%s5 + $0x180] sm:$0xff]
    %v666 = vld [vmem:[%s5 + $0x188] sm:$0xff]
    %v667 = vld [vmem:[%s5 + $0x190] sm:$0xff]
    %v668 = vld [vmem:[%s5 + $0x198] sm:$0xff]
    %v669 = vld [vmem:[%s5 + $0x1a0] sm:$0xff]
    %v670 = vld [vmem:[%s5 + $0x1a8] sm:$0xff]
    %v671 = vld [vmem:[%s5 + $0x1b0] sm:$0xff]
    %v672 = vld [vmem:[%s5 + $0x1b8] sm:$0xff]
    %v673 = vld [vmem:[%s5 + $0x1c0] sm:$0xff]
    %v674 = vld [vmem:[%s5 + $0x1c8] sm:$0xff]
    %v675 = vld [vmem:[%s5 + $0x1d0] sm:$0xff]
    %v676 = vld [vmem:[%s5 + $0x1d8] sm:$0xff]
    %v677 = vld [vmem:[%s5 + $0x1e0] sm:$0xff]
    %v678 = vld [vmem:[%s5 + $0x1e8] sm:$0xff]
    %v679 = vld [vmem:[%s5 + $0x1f0] sm:$0xff]
    %v680 = vld [vmem:[%s5 + $0x1f8] sm:$0xff]
    %v681 = vld [vmem:[%s5 + $0x200] sm:$0xff]
    %v682 = vld [vmem:[%s5 + $0x208] sm:$0xff]
    %v683 = vld [vmem:[%s5 + $0x210] sm:$0xff]
    %v684 = vld [vmem:[%s5 + $0x218] sm:$0xff]
    %v685 = vld [vmem:[%s5 + $0x220] sm:$0xff]
    %v686 = vld [vmem:[%s5 + $0x228] sm:$0xff]
    %v687 = vld [vmem:[%s5 + $0x230] sm:$0xff]
    %v688 = vld [vmem:[%s5 + $0x238] sm:$0xff]
    %v689 = vld [vmem:[%s5 + $0x240] sm:$0xff]
    %v690 = vld [vmem:[%s5 + $0x248] sm:$0xff]
    %v691 = vld [vmem:[%s5 + $0x250] sm:$0xff]
    %v692 = vld [vmem:[%s5 + $0x258] sm:$0xff]
    %v693 = vld [vmem:[%s5 + $0x260] sm:$0xff]
    %v694 = vld [vmem:[%s5 + $0x268] sm:$0xff]
    %v695 = vld [vmem:[%s5 + $0x270] sm:$0xff]
    %v696 = vld [vmem:[%s5 + $0x278] sm:$0xff]
    %v697 = vld [vmem:[%s5 + $0x280] sm:$0xff]
    %v698 = vld [vmem:[%s5 + $0x288] sm:$0xff]
    %v699 = vld [vmem:[%s5 + $0x290] sm:$0xff]
    %v700 = vld [vmem:[%s5 + $0x298] sm:$0xff]
    %v701 = vld [vmem:[%s5 + $0x2a0] sm:$0xff]
    %v702 = vld [vmem:[%s5 + $0x2a8] sm:$0xff]
    %v703 = vld [vmem:[%s5 + $0x2b0] sm:$0xff]
    %v704 = vld [vmem:[%s5 + $0x2b8] sm:$0xff]
    %v705 = vld [vmem:[%s5 + $0x2c0] sm:$0xff]
    %v706 = vld [vmem:[%s5 + $0x2c8] sm:$0xff]
    %v707 = vld [vmem:[%s5 + $0x2d0] sm:$0xff]
    %v708 = vld [vmem:[%s5 + $0x2d8] sm:$0xff]
    %v709 = vld [vmem:[%s5 + $0x2e0] sm:$0xff]
    %v710 = vld [vmem:[%s5 + $0x2e8] sm:$0xff]
    %v711 = vld [vmem:[%s5 + $0x2f0] sm:$0xff]
    %v712 = vld [vmem:[%s5 + $0x2f8] sm:$0xff]
    %v713 = vld [vmem:[%s5 + $0x300] sm:$0xff]
    %v714 = vld [vmem:[%s5 + $0x308] sm:$0xff]
    %v715 = vld [vmem:[%s5 + $0x310] sm:$0xff]
    %v716 = vld [vmem:[%s5 + $0x318] sm:$0xff]
    %v717 = vld [vmem:[%s5 + $0x320] sm:$0xff]
    %v718 = vld [vmem:[%s5 + $0x328] sm:$0xff]
    %v719 = vld [vmem:[%s5 + $0x330] sm:$0xff]
    %v720 = vld [vmem:[%s5 + $0x338] sm:$0xff]
    %v721 = vld [vmem:[%s5 + $0x340] sm:$0xff]
    %v722 = vld [vmem:[%s5 + $0x348] sm:$0xff]
    %v723 = vld [vmem:[%s5 + $0x350] sm:$0xff]
    %v724 = vld [vmem:[%s5 + $0x358] sm:$0xff]
    %v725 = vld [vmem:[%s5 + $0x360] sm:$0xff]
    %v726 = vld [vmem:[%s5 + $0x368] sm:$0xff]
    %v727 = vld [vmem:[%s5 + $0x370] sm:$0xff]
    %v728 = vld [vmem:[%s5 + $0x378] sm:$0xff]
    %v729 = vld [vmem:[%s5 + $0x380] sm:$0xff]
    %v730 = vld [vmem:[%s5 + $0x388] sm:$0xff]
    %v731 = vld [vmem:[%s5 + $0x390] sm:$0xff]
    %v732 = vld [vmem:[%s5 + $0x398] sm:$0xff]
    %v733 = vld [vmem:[%s5 + $0x3a0] sm:$0xff]
    %v734 = vld [vmem:[%s5 + $0x3a8] sm:$0xff]
    %v735 = vld [vmem:[%s5 + $0x3b0] sm:$0xff]
    %v736 = vld [vmem:[%s5 + $0x3b8] sm:$0xff]
    %v737 = vld [vmem:[%s5 + $0x3c0] sm:$0xff]
    %v738 = vld [vmem:[%s5 + $0x3c8] sm:$0xff]
    %v739 = vld [vmem:[%s5 + $0x3d0] sm:$0xff]
    %v740 = vld [vmem:[%s5 + $0x3d8] sm:$0xff]
    %v741 = vld [vmem:[%s5 + $0x3e0] sm:$0xff]
    %v742 = vld [vmem:[%s5 + $0x3e8] sm:$0xff]
    %v743 = vld [vmem:[%s5 + $0x3f0] sm:$0xff]
    %v744 = vld [vmem:[%s5 + $0x3f8] sm:$0xff]
    %v745 = vld [vmem:[%s5 + $0x400] sm:$0xff]
    %v746 = vld [vmem:[%s5 + $0x408] sm:$0xff]
    %v747 = vld [vmem:[%s5 + $0x410] sm:$0xff]
    %v748 = vld [vmem:[%s5 + $0x418] sm:$0xff]
    %v749 = vld [vmem:[%s5 + $0x420] sm:$0xff]
    %v750 = vld [vmem:[%s5 + $0x428] sm:$0xff]
    %v751 = vld [vmem:[%s5 + $0x430] sm:$0xff]
    %v752 = vld [vmem:[%s5 + $0x438] sm:$0xff]
    %v753 = vld [vmem:[%s5 + $0x440] sm:$0xff]
    %v754 = vld [vmem:[%s5 + $0x448] sm:$0xff]
    %v755 = vld [vmem:[%s5 + $0x450] sm:$0xff]
    %v756 = vld [vmem:[%s5 + $0x458] sm:$0xff]
    %v757 = vld [vmem:[%s5 + $0x460] sm:$0xff]
    %v758 = vld [vmem:[%s5 + $0x468] sm:$0xff]
    %v759 = vld [vmem:[%s5 + $0x470] sm:$0xff]
    %v760 = vld [vmem:[%s5 + $0x478] sm:$0xff]
    %v761 = vld [vmem:[%s5 + $0x480] sm:$0xff]
    %v762 = vld [vmem:[%s5 + $0x488] sm:$0xff]
    %v763 = vld [vmem:[%s5 + $0x490] sm:$0xff]
    %v764 = vld [vmem:[%s5 + $0x498] sm:$0xff]
    %v765 = vld [vmem:[%s5 + $0x4a0] sm:$0xff]
    %v766 = vld [vmem:[%s5 + $0x4a8] sm:$0xff]
    %v767 = vld [vmem:[%s5 + $0x4b0] sm:$0xff]
    %v768 = vld [vmem:[%s5 + $0x4b8] sm:$0xff]
    %v769 = vld [vmem:[%s5 + $0x4c0] sm:$0xff]
    %v770 = vld [vmem:[%s5 + $0x4c8] sm:$0xff]
    %v771 = vld [vmem:[%s5 + $0x4d0] sm:$0xff]
    %v772 = vld [vmem:[%s5 + $0x4d8] sm:$0xff]
    %v773 = vld [vmem:[%s5 + $0x4e0] sm:$0xff]
    %v774 = vld [vmem:[%s5 + $0x4e8] sm:$0xff]
    %v775 = vld [vmem:[%s5 + $0x4f0] sm:$0xff]
    %v776 = vld [vmem:[%s5 + $0x4f8] sm:$0xff]
    %v777 = vld [vmem:[%s5 + $0x500] sm:$0xff]
    %v778 = vld [vmem:[%s5 + $0x508] sm:$0xff]
    %v779 = vld [vmem:[%s5 + $0x510] sm:$0xff]
    %v780 = vld [vmem:[%s5 + $0x518] sm:$0xff]
    %v781 = vld [vmem:[%s5 + $0x520] sm:$0xff]
    %v782 = vld [vmem:[%s5 + $0x528] sm:$0xff]
    %v783 = vld [vmem:[%s5 + $0x530] sm:$0xff]
    %v784 = vld [vmem:[%s5 + $0x538] sm:$0xff]
    %v785 = vld [vmem:[%s5 + $0x540] sm:$0xff]
    %v786 = vld [vmem:[%s5 + $0x548] sm:$0xff]
    %v787 = vld [vmem:[%s5 + $0x550] sm:$0xff]
    %v788 = vld [vmem:[%s5 + $0x558] sm:$0xff]
    %v789 = vld [vmem:[%s5 + $0x560] sm:$0xff]
    %v790 = vld [vmem:[%s5 + $0x568] sm:$0xff]
    %v791 = vld [vmem:[%s5 + $0x570] sm:$0xff]
    %v792 = vld [vmem:[%s5 + $0x578] sm:$0xff]
    %v793 = vld [vmem:[%s5 + $0x580] sm:$0xff]
    %v794 = vld [vmem:[%s5 + $0x588] sm:$0xff]
    %v795 = vld [vmem:[%s5 + $0x590] sm:$0xff]
    %v796 = vld [vmem:[%s5 + $0x598] sm:$0xff]
    %v797 = vld [vmem:[%s5 + $0x5a0] sm:$0xff]
    %v798 = vld [vmem:[%s5 + $0x5a8] sm:$0xff]
    %v799 = vld [vmem:[%s5 + $0x5b0] sm:$0xff]
    %v800 = vld [vmem:[%s5 + $0x5b8] sm:$0xff]
    %v801 = vld [vmem:[%s5 + $0x5c0] sm:$0xff]
    %v802 = vld [vmem:[%s5 + $0x5c8] sm:$0xff]
    %v803 = vld [vmem:[%s5 + $0x5d0] sm:$0xff]
    %v804 = vld [vmem:[%s5 + $0x5d8] sm:$0xff]
    %v805 = vld [vmem:[%s5 + $0x5e0] sm:$0xff]
    %v806 = vld [vmem:[%s5 + $0x5e8] sm:$0xff]
    %v807 = vld [vmem:[%s5 + $0x5f0] sm:$0xff]
    %v808 = vld [vmem:[%s5 + $0x5f8] sm:$0xff]
    %v809 = vld [vmem:[%s5 + $0x600] sm:$0xff]
    %v810 = vld [vmem:[%s5 + $0x608] sm:$0xff]
    %v811 = vld [vmem:[%s5 + $0x610] sm:$0xff]
    %v812 = vld [vmem:[%s5 + $0x618] sm:$0xff]
    %v813 = vld [vmem:[%s5 + $0x620] sm:$0xff]
    %v814 = vld [vmem:[%s5 + $0x628] sm:$0xff]
    %v815 = vld [vmem:[%s5 + $0x630] sm:$0xff]
    %v816 = vld [vmem:[%s5 + $0x638] sm:$0xff]
    %v817 = vld [vmem:[%s5 + $0x640] sm:$0xff]
    %v818 = vld [vmem:[%s5 + $0x648] sm:$0xff]
    %v819 = vld [vmem:[%s5 + $0x650] sm:$0xff]
    %v820 = vld [vmem:[%s5 + $0x658] sm:$0xff]
    %v821 = vld [vmem:[%s5 + $0x660] sm:$0xff]
    %v822 = vld [vmem:[%s5 + $0x668] sm:$0xff]
    %v823 = vld [vmem:[%s5 + $0x670] sm:$0xff]
    %v824 = vld [vmem:[%s5 + $0x678] sm:$0xff]
    %v825 = vld [vmem:[%s5 + $0x680] sm:$0xff]
    %v826 = vld [vmem:[%s5 + $0x688] sm:$0xff]
    %v827 = vld [vmem:[%s5 + $0x690] sm:$0xff]
    %v828 = vld [vmem:[%s5 + $0x698] sm:$0xff]
    %v829 = vld [vmem:[%s5 + $0x6a0] sm:$0xff]
    %v830 = vld [vmem:[%s5 + $0x6a8] sm:$0xff]
    %v831 = vld [vmem:[%s5 + $0x6b0] sm:$0xff]
    %v832 = vld [vmem:[%s5 + $0x6b8] sm:$0xff]
    %v833 = vld [vmem:[%s5 + $0x6c0] sm:$0xff]
    %v834 = vld [vmem:[%s5 + $0x6c8] sm:$0xff]
    %v835 = vld [vmem:[%s5 + $0x6d0] sm:$0xff]
    %v836 = vld [vmem:[%s5 + $0x6d8] sm:$0xff]
    %v837 = vld [vmem:[%s5 + $0x6e0] sm:$0xff]
    %v838 = vld [vmem:[%s5 + $0x6e8] sm:$0xff]
    %v839 = vld [vmem:[%s5 + $0x6f0] sm:$0xff]
    %v840 = vld [vmem:[%s5 + $0x6f8] sm:$0xff]
    %v841 = vld [vmem:[%s5 + $0x700] sm:$0xff]
    %v842 = vld [vmem:[%s5 + $0x708] sm:$0xff]
    %v843 = vld [vmem:[%s5 + $0x710] sm:$0xff]
    %v844 = vld [vmem:[%s5 + $0x718] sm:$0xff]
    %v845 = vld [vmem:[%s5 + $0x720] sm:$0xff]
    %v846 = vld [vmem:[%s5 + $0x728] sm:$0xff]
    %v847 = vld [vmem:[%s5 + $0x730] sm:$0xff]
    %v848 = vld [vmem:[%s5 + $0x738] sm:$0xff]
    %v849 = vld [vmem:[%s5 + $0x740] sm:$0xff]
    %v850 = vld [vmem:[%s5 + $0x748] sm:$0xff]
    %v851 = vld [vmem:[%s5 + $0x750] sm:$0xff]
    %v852 = vld [vmem:[%s5 + $0x758] sm:$0xff]
    %v853 = vld [vmem:[%s5 + $0x760] sm:$0xff]
    %v854 = vld [vmem:[%s5 + $0x768] sm:$0xff]
    %v855 = vld [vmem:[%s5 + $0x770] sm:$0xff]
    %v856 = vld [vmem:[%s5 + $0x778] sm:$0xff]
    %v857 = vld [vmem:[%s5 + $0x780] sm:$0xff]
    %v858 = vld [vmem:[%s5 + $0x788] sm:$0xff]
    %v859 = vld [vmem:[%s5 + $0x790] sm:$0xff]
    %v860 = vld [vmem:[%s5 + $0x798] sm:$0xff]
    %v861 = vld [vmem:[%s5 + $0x7a0] sm:$0xff]
    %v862 = vld [vmem:[%s5 + $0x7a8] sm:$0xff]
    %v863 = vld [vmem:[%s5 + $0x7b0] sm:$0xff]
    %v864 = vld [vmem:[%s5 + $0x7b8] sm:$0xff]
    %v865 = vld [vmem:[%s5 + $0x7c0] sm:$0xff]
    %v866 = vld [vmem:[%s5 + $0x7c8] sm:$0xff]
    %v867 = vld [vmem:[%s5 + $0x7d0] sm:$0xff]
    %v868 = vld [vmem:[%s5 + $0x7d8] sm:$0xff]
    %v869 = vld [vmem:[%s5 + $0x7e0] sm:$0xff]
    %v870 = vld [vmem:[%s5 + $0x7e8] sm:$0xff]
    %v871 = vld [vmem:[%s5 + $0x7f0] sm:$0xff]
    %v872 = vld [vmem:[%s5 + $0x7f8] sm:$0xff]
    %v873 = vld [vmem:[%s6] sm:$0xff]
    %v875 = vlaneseq
    %v876 = vshrl.u32 %v875, 7
    %v877 = vsub.s32 0, %v876
    %v878 = vrot.slane %v873, %v877
    %v879 = vlaneseq
    %v880 = vshrl.u32 %v879, 7
    %v881 = vsub.s32 1, %v880
    %v882 = vrot.slane %v873, %v881
    %v883 = vlaneseq
    %v884 = vshrl.u32 %v883, 7
    %v885 = vsub.s32 2, %v884
    %v886 = vrot.slane %v873, %v885
    %v887 = vlaneseq
    %v888 = vshrl.u32 %v887, 7
    %v889 = vsub.s32 3, %v888
    %v890 = vrot.slane %v873, %v889
    %v891 = vlaneseq
    %v892 = vshrl.u32 %v891, 7
    %v893 = vsub.s32 4, %v892
    %v894 = vrot.slane %v873, %v893
    %v895 = vlaneseq
    %v896 = vshrl.u32 %v895, 7
    %v897 = vsub.s32 5, %v896
    %v898 = vrot.slane %v873, %v897
    %v899 = vlaneseq
    %v900 = vshrl.u32 %v899, 7
    %v901 = vsub.s32 6, %v900
    %v902 = vrot.slane %v873, %v901
    %v903 = vlaneseq
    %v904 = vshrl.u32 %v903, 7
    %v905 = vsub.s32 7, %v904
    %v906 = vrot.slane %v873, %v905
    %v1171 = vunpack.c.l.b16 %v617
    %v1172 = vunpack.c.h.b16 %v617
    %v1173 = vunpack.c.l.b16 %v618
    %v1174 = vunpack.c.h.b16 %v618
    %v1175 = vunpack.c.l.b16 %v619
    %v1176 = vunpack.c.h.b16 %v619
    %v1177 = vunpack.c.l.b16 %v620
    %v1178 = vunpack.c.h.b16 %v620
    %v1179 = vunpack.c.l.b16 %v621
    %v1180 = vunpack.c.h.b16 %v621
    %v1181 = vunpack.c.l.b16 %v622
    %v1182 = vunpack.c.h.b16 %v622
    %v1183 = vunpack.c.l.b16 %v623
    %v1184 = vunpack.c.h.b16 %v623
    %v1185 = vunpack.c.l.b16 %v624
    %v1186 = vunpack.c.h.b16 %v624
    %v1187 = vunpack.c.l.b16 %v625
    %v1188 = vunpack.c.h.b16 %v625
    %v1189 = vunpack.c.l.b16 %v626
    %v1190 = vunpack.c.h.b16 %v626
    %v1191 = vunpack.c.l.b16 %v627
    %v1192 = vunpack.c.h.b16 %v627
    %v1193 = vunpack.c.l.b16 %v628
    %v1194 = vunpack.c.h.b16 %v628
    %v1195 = vunpack.c.l.b16 %v629
    %v1196 = vunpack.c.h.b16 %v629
    %v1197 = vunpack.c.l.b16 %v630
    %v1198 = vunpack.c.h.b16 %v630
    %v1199 = vunpack.c.l.b16 %v631
    %v1200 = vunpack.c.h.b16 %v631
    %v1201 = vunpack.c.l.b16 %v632
    %v1202 = vunpack.c.h.b16 %v632
    %v1203 = vunpack.c.l.b16 %v633
    %v1204 = vunpack.c.h.b16 %v633
    %v1205 = vunpack.c.l.b16 %v634
    %v1206 = vunpack.c.h.b16 %v634
    %v1207 = vunpack.c.l.b16 %v635
    %v1208 = vunpack.c.h.b16 %v635
    %v1209 = vunpack.c.l.b16 %v636
    %v1210 = vunpack.c.h.b16 %v636
    %v1211 = vunpack.c.l.b16 %v637
    %v1212 = vunpack.c.h.b16 %v637
    %v1213 = vunpack.c.l.b16 %v638
    %v1214 = vunpack.c.h.b16 %v638
    %v1215 = vunpack.c.l.b16 %v639
    %v1216 = vunpack.c.h.b16 %v639
    %v1217 = vunpack.c.l.b16 %v640
    %v1218 = vunpack.c.h.b16 %v640
    %v1219 = vunpack.c.l.b16 %v641
    %v1220 = vunpack.c.h.b16 %v641
    %v1221 = vunpack.c.l.b16 %v642
    %v1222 = vunpack.c.h.b16 %v642
    %v1223 = vunpack.c.l.b16 %v643
    %v1224 = vunpack.c.h.b16 %v643
    %v1225 = vunpack.c.l.b16 %v644
    %v1226 = vunpack.c.h.b16 %v644
    %v1227 = vunpack.c.l.b16 %v645
    %v1228 = vunpack.c.h.b16 %v645
    %v1229 = vunpack.c.l.b16 %v646
    %v1230 = vunpack.c.h.b16 %v646
    %v1231 = vunpack.c.l.b16 %v647
    %v1232 = vunpack.c.h.b16 %v647
    %v1233 = vunpack.c.l.b16 %v648
    %v1234 = vunpack.c.h.b16 %v648
    %v1235 = vunpack.c.l.b16 %v649
    %v1236 = vunpack.c.h.b16 %v649
    %v1237 = vunpack.c.l.b16 %v650
    %v1238 = vunpack.c.h.b16 %v650
    %v1239 = vunpack.c.l.b16 %v651
    %v1240 = vunpack.c.h.b16 %v651
    %v1241 = vunpack.c.l.b16 %v652
    %v1242 = vunpack.c.h.b16 %v652
    %v1243 = vunpack.c.l.b16 %v653
    %v1244 = vunpack.c.h.b16 %v653
    %v1245 = vunpack.c.l.b16 %v654
    %v1246 = vunpack.c.h.b16 %v654
    %v1247 = vunpack.c.l.b16 %v655
    %v1248 = vunpack.c.h.b16 %v655
    %v1249 = vunpack.c.l.b16 %v656
    %v1250 = vunpack.c.h.b16 %v656
    %v1251 = vunpack.c.l.b16 %v657
    %v1252 = vunpack.c.h.b16 %v657
    %v1253 = vunpack.c.l.b16 %v658
    %v1254 = vunpack.c.h.b16 %v658
    %v1255 = vunpack.c.l.b16 %v659
    %v1256 = vunpack.c.h.b16 %v659
    %v1257 = vunpack.c.l.b16 %v660
    %v1258 = vunpack.c.h.b16 %v660
    %v1259 = vunpack.c.l.b16 %v661
    %v1260 = vunpack.c.h.b16 %v661
    %v1261 = vunpack.c.l.b16 %v662
    %v1262 = vunpack.c.h.b16 %v662
    %v1263 = vunpack.c.l.b16 %v663
    %v1264 = vunpack.c.h.b16 %v663
    %v1265 = vunpack.c.l.b16 %v664
    %v1266 = vunpack.c.h.b16 %v664
    %v1267 = vunpack.c.l.b16 %v665
    %v1268 = vunpack.c.h.b16 %v665
    %v1269 = vunpack.c.l.b16 %v666
    %v1270 = vunpack.c.h.b16 %v666
    %v1271 = vunpack.c.l.b16 %v667
    %v1272 = vunpack.c.h.b16 %v667
    %v1273 = vunpack.c.l.b16 %v668
    %v1274 = vunpack.c.h.b16 %v668
    %v1275 = vunpack.c.l.b16 %v669
    %v1276 = vunpack.c.h.b16 %v669
    %v1277 = vunpack.c.l.b16 %v670
    %v1278 = vunpack.c.h.b16 %v670
    %v1279 = vunpack.c.l.b16 %v671
    %v1280 = vunpack.c.h.b16 %v671
    %v1281 = vunpack.c.l.b16 %v672
    %v1282 = vunpack.c.h.b16 %v672
    %v1283 = vunpack.c.l.b16 %v673
    %v1284 = vunpack.c.h.b16 %v673
    %v1285 = vunpack.c.l.b16 %v674
    %v1286 = vunpack.c.h.b16 %v674
    %v1287 = vunpack.c.l.b16 %v675
    %v1288 = vunpack.c.h.b16 %v675
    %v1289 = vunpack.c.l.b16 %v676
    %v1290 = vunpack.c.h.b16 %v676
    %v1291 = vunpack.c.l.b16 %v677
    %v1292 = vunpack.c.h.b16 %v677
    %v1293 = vunpack.c.l.b16 %v678
    %v1294 = vunpack.c.h.b16 %v678
    %v1295 = vunpack.c.l.b16 %v679
    %v1296 = vunpack.c.h.b16 %v679
    %v1297 = vunpack.c.l.b16 %v680
    %v1298 = vunpack.c.h.b16 %v680
    %v1299 = vunpack.c.l.b16 %v681
    %v1300 = vunpack.c.h.b16 %v681
    %v1301 = vunpack.c.l.b16 %v682
    %v1302 = vunpack.c.h.b16 %v682
    %v1303 = vunpack.c.l.b16 %v683
    %v1304 = vunpack.c.h.b16 %v683
    %v1305 = vunpack.c.l.b16 %v684
    %v1306 = vunpack.c.h.b16 %v684
    %v1307 = vunpack.c.l.b16 %v685
    %v1308 = vunpack.c.h.b16 %v685
    %v1309 = vunpack.c.l.b16 %v686
    %v1310 = vunpack.c.h.b16 %v686
    %v1311 = vunpack.c.l.b16 %v687
    %v1312 = vunpack.c.h.b16 %v687
    %v1313 = vunpack.c.l.b16 %v688
    %v1314 = vunpack.c.h.b16 %v688
    %v1315 = vunpack.c.l.b16 %v689
    %v1316 = vunpack.c.h.b16 %v689
    %v1317 = vunpack.c.l.b16 %v690
    %v1318 = vunpack.c.h.b16 %v690
    %v1319 = vunpack.c.l.b16 %v691
    %v1320 = vunpack.c.h.b16 %v691
    %v1321 = vunpack.c.l.b16 %v692
    %v1322 = vunpack.c.h.b16 %v692
    %v1323 = vunpack.c.l.b16 %v693
    %v1324 = vunpack.c.h.b16 %v693
    %v1325 = vunpack.c.l.b16 %v694
    %v1326 = vunpack.c.h.b16 %v694
    %v1327 = vunpack.c.l.b16 %v695
    %v1328 = vunpack.c.h.b16 %v695
    %v1329 = vunpack.c.l.b16 %v696
    %v1330 = vunpack.c.h.b16 %v696
    %v1331 = vunpack.c.l.b16 %v697
    %v1332 = vunpack.c.h.b16 %v697
    %v1333 = vunpack.c.l.b16 %v698
    %v1334 = vunpack.c.h.b16 %v698
    %v1335 = vunpack.c.l.b16 %v699
    %v1336 = vunpack.c.h.b16 %v699
    %v1337 = vunpack.c.l.b16 %v700
    %v1338 = vunpack.c.h.b16 %v700
    %v1339 = vunpack.c.l.b16 %v701
    %v1340 = vunpack.c.h.b16 %v701
    %v1341 = vunpack.c.l.b16 %v702
    %v1342 = vunpack.c.h.b16 %v702
    %v1343 = vunpack.c.l.b16 %v703
    %v1344 = vunpack.c.h.b16 %v703
    %v1345 = vunpack.c.l.b16 %v704
    %v1346 = vunpack.c.h.b16 %v704
    %v1347 = vunpack.c.l.b16 %v705
    %v1348 = vunpack.c.h.b16 %v705
    %v1349 = vunpack.c.l.b16 %v706
    %v1350 = vunpack.c.h.b16 %v706
    %v1351 = vunpack.c.l.b16 %v707
    %v1352 = vunpack.c.h.b16 %v707
    %v1353 = vunpack.c.l.b16 %v708
    %v1354 = vunpack.c.h.b16 %v708
    %v1355 = vunpack.c.l.b16 %v709
    %v1356 = vunpack.c.h.b16 %v709
    %v1357 = vunpack.c.l.b16 %v710
    %v1358 = vunpack.c.h.b16 %v710
    %v1359 = vunpack.c.l.b16 %v711
    %v1360 = vunpack.c.h.b16 %v711
    %v1361 = vunpack.c.l.b16 %v712
    %v1362 = vunpack.c.h.b16 %v712
    %v1363 = vunpack.c.l.b16 %v713
    %v1364 = vunpack.c.h.b16 %v713
    %v1365 = vunpack.c.l.b16 %v714
    %v1366 = vunpack.c.h.b16 %v714
    %v1367 = vunpack.c.l.b16 %v715
    %v1368 = vunpack.c.h.b16 %v715
    %v1369 = vunpack.c.l.b16 %v716
    %v1370 = vunpack.c.h.b16 %v716
    %v1371 = vunpack.c.l.b16 %v717
    %v1372 = vunpack.c.h.b16 %v717
    %v1373 = vunpack.c.l.b16 %v718
    %v1374 = vunpack.c.h.b16 %v718
    %v1375 = vunpack.c.l.b16 %v719
    %v1376 = vunpack.c.h.b16 %v719
    %v1377 = vunpack.c.l.b16 %v720
    %v1378 = vunpack.c.h.b16 %v720
    %v1379 = vunpack.c.l.b16 %v721
    %v1380 = vunpack.c.h.b16 %v721
    %v1381 = vunpack.c.l.b16 %v722
    %v1382 = vunpack.c.h.b16 %v722
    %v1383 = vunpack.c.l.b16 %v723
    %v1384 = vunpack.c.h.b16 %v723
    %v1385 = vunpack.c.l.b16 %v724
    %v1386 = vunpack.c.h.b16 %v724
    %v1387 = vunpack.c.l.b16 %v725
    %v1388 = vunpack.c.h.b16 %v725
    %v1389 = vunpack.c.l.b16 %v726
    %v1390 = vunpack.c.h.b16 %v726
    %v1391 = vunpack.c.l.b16 %v727
    %v1392 = vunpack.c.h.b16 %v727
    %v1393 = vunpack.c.l.b16 %v728
    %v1394 = vunpack.c.h.b16 %v728
    %v1395 = vunpack.c.l.b16 %v729
    %v1396 = vunpack.c.h.b16 %v729
    %v1397 = vunpack.c.l.b16 %v730
    %v1398 = vunpack.c.h.b16 %v730
    %v1399 = vunpack.c.l.b16 %v731
    %v1400 = vunpack.c.h.b16 %v731
    %v1401 = vunpack.c.l.b16 %v732
    %v1402 = vunpack.c.h.b16 %v732
    %v1403 = vunpack.c.l.b16 %v733
    %v1404 = vunpack.c.h.b16 %v733
    %v1405 = vunpack.c.l.b16 %v734
    %v1406 = vunpack.c.h.b16 %v734
    %v1407 = vunpack.c.l.b16 %v735
    %v1408 = vunpack.c.h.b16 %v735
    %v1409 = vunpack.c.l.b16 %v736
    %v1410 = vunpack.c.h.b16 %v736
    %v1411 = vunpack.c.l.b16 %v737
    %v1412 = vunpack.c.h.b16 %v737
    %v1413 = vunpack.c.l.b16 %v738
    %v1414 = vunpack.c.h.b16 %v738
    %v1415 = vunpack.c.l.b16 %v739
    %v1416 = vunpack.c.h.b16 %v739
    %v1417 = vunpack.c.l.b16 %v740
    %v1418 = vunpack.c.h.b16 %v740
    %v1419 = vunpack.c.l.b16 %v741
    %v1420 = vunpack.c.h.b16 %v741
    %v1421 = vunpack.c.l.b16 %v742
    %v1422 = vunpack.c.h.b16 %v742
    %v1423 = vunpack.c.l.b16 %v743
    %v1424 = vunpack.c.h.b16 %v743
    %v1425 = vunpack.c.l.b16 %v744
    %v1426 = vunpack.c.h.b16 %v744
    %v1427 = vunpack.c.l.b16 %v745
    %v1428 = vunpack.c.h.b16 %v745
    %v1429 = vunpack.c.l.b16 %v746
    %v1430 = vunpack.c.h.b16 %v746
    %v1431 = vunpack.c.l.b16 %v747
    %v1432 = vunpack.c.h.b16 %v747
    %v1433 = vunpack.c.l.b16 %v748
    %v1434 = vunpack.c.h.b16 %v748
    %v1435 = vunpack.c.l.b16 %v749
    %v1436 = vunpack.c.h.b16 %v749
    %v1437 = vunpack.c.l.b16 %v750
    %v1438 = vunpack.c.h.b16 %v750
    %v1439 = vunpack.c.l.b16 %v751
    %v1440 = vunpack.c.h.b16 %v751
    %v1441 = vunpack.c.l.b16 %v752
    %v1442 = vunpack.c.h.b16 %v752
    %v1443 = vunpack.c.l.b16 %v753
    %v1444 = vunpack.c.h.b16 %v753
    %v1445 = vunpack.c.l.b16 %v754
    %v1446 = vunpack.c.h.b16 %v754
    %v1447 = vunpack.c.l.b16 %v755
    %v1448 = vunpack.c.h.b16 %v755
    %v1449 = vunpack.c.l.b16 %v756
    %v1450 = vunpack.c.h.b16 %v756
    %v1451 = vunpack.c.l.b16 %v757
    %v1452 = vunpack.c.h.b16 %v757
    %v1453 = vunpack.c.l.b16 %v758
    %v1454 = vunpack.c.h.b16 %v758
    %v1455 = vunpack.c.l.b16 %v759
    %v1456 = vunpack.c.h.b16 %v759
    %v1457 = vunpack.c.l.b16 %v760
    %v1458 = vunpack.c.h.b16 %v760
    %v1459 = vunpack.c.l.b16 %v761
    %v1460 = vunpack.c.h.b16 %v761
    %v1461 = vunpack.c.l.b16 %v762
    %v1462 = vunpack.c.h.b16 %v762
    %v1463 = vunpack.c.l.b16 %v763
    %v1464 = vunpack.c.h.b16 %v763
    %v1465 = vunpack.c.l.b16 %v764
    %v1466 = vunpack.c.h.b16 %v764
    %v1467 = vunpack.c.l.b16 %v765
    %v1468 = vunpack.c.h.b16 %v765
    %v1469 = vunpack.c.l.b16 %v766
    %v1470 = vunpack.c.h.b16 %v766
    %v1471 = vunpack.c.l.b16 %v767
    %v1472 = vunpack.c.h.b16 %v767
    %v1473 = vunpack.c.l.b16 %v768
    %v1474 = vunpack.c.h.b16 %v768
    %v1475 = vunpack.c.l.b16 %v769
    %v1476 = vunpack.c.h.b16 %v769
    %v1477 = vunpack.c.l.b16 %v770
    %v1478 = vunpack.c.h.b16 %v770
    %v1479 = vunpack.c.l.b16 %v771
    %v1480 = vunpack.c.h.b16 %v771
    %v1481 = vunpack.c.l.b16 %v772
    %v1482 = vunpack.c.h.b16 %v772
    %v1483 = vunpack.c.l.b16 %v773
    %v1484 = vunpack.c.h.b16 %v773
    %v1485 = vunpack.c.l.b16 %v774
    %v1486 = vunpack.c.h.b16 %v774
    %v1487 = vunpack.c.l.b16 %v775
    %v1488 = vunpack.c.h.b16 %v775
    %v1489 = vunpack.c.l.b16 %v776
    %v1490 = vunpack.c.h.b16 %v776
    %v1491 = vunpack.c.l.b16 %v777
    %v1492 = vunpack.c.h.b16 %v777
    %v1493 = vunpack.c.l.b16 %v778
    %v1494 = vunpack.c.h.b16 %v778
    %v1495 = vunpack.c.l.b16 %v779
    %v1496 = vunpack.c.h.b16 %v779
    %v1497 = vunpack.c.l.b16 %v780
    %v1498 = vunpack.c.h.b16 %v780
    %v1499 = vunpack.c.l.b16 %v781
    %v1500 = vunpack.c.h.b16 %v781
    %v1501 = vunpack.c.l.b16 %v782
    %v1502 = vunpack.c.h.b16 %v782
    %v1503 = vunpack.c.l.b16 %v783
    %v1504 = vunpack.c.h.b16 %v783
    %v1505 = vunpack.c.l.b16 %v784
    %v1506 = vunpack.c.h.b16 %v784
    %v1507 = vunpack.c.l.b16 %v785
    %v1508 = vunpack.c.h.b16 %v785
    %v1509 = vunpack.c.l.b16 %v786
    %v1510 = vunpack.c.h.b16 %v786
    %v1511 = vunpack.c.l.b16 %v787
    %v1512 = vunpack.c.h.b16 %v787
    %v1513 = vunpack.c.l.b16 %v788
    %v1514 = vunpack.c.h.b16 %v788
    %v1515 = vunpack.c.l.b16 %v789
    %v1516 = vunpack.c.h.b16 %v789
    %v1517 = vunpack.c.l.b16 %v790
    %v1518 = vunpack.c.h.b16 %v790
    %v1519 = vunpack.c.l.b16 %v791
    %v1520 = vunpack.c.h.b16 %v791
    %v1521 = vunpack.c.l.b16 %v792
    %v1522 = vunpack.c.h.b16 %v792
    %v1523 = vunpack.c.l.b16 %v793
    %v1524 = vunpack.c.h.b16 %v793
    %v1525 = vunpack.c.l.b16 %v794
    %v1526 = vunpack.c.h.b16 %v794
    %v1527 = vunpack.c.l.b16 %v795
    %v1528 = vunpack.c.h.b16 %v795
    %v1529 = vunpack.c.l.b16 %v796
    %v1530 = vunpack.c.h.b16 %v796
    %v1531 = vunpack.c.l.b16 %v797
    %v1532 = vunpack.c.h.b16 %v797
    %v1533 = vunpack.c.l.b16 %v798
    %v1534 = vunpack.c.h.b16 %v798
    %v1535 = vunpack.c.l.b16 %v799
    %v1536 = vunpack.c.h.b16 %v799
    %v1537 = vunpack.c.l.b16 %v800
    %v1538 = vunpack.c.h.b16 %v800
    %v1539 = vunpack.c.l.b16 %v801
    %v1540 = vunpack.c.h.b16 %v801
    %v1541 = vunpack.c.l.b16 %v802
    %v1542 = vunpack.c.h.b16 %v802
    %v1543 = vunpack.c.l.b16 %v803
    %v1544 = vunpack.c.h.b16 %v803
    %v1545 = vunpack.c.l.b16 %v804
    %v1546 = vunpack.c.h.b16 %v804
    %v1547 = vunpack.c.l.b16 %v805
    %v1548 = vunpack.c.h.b16 %v805
    %v1549 = vunpack.c.l.b16 %v806
    %v1550 = vunpack.c.h.b16 %v806
    %v1551 = vunpack.c.l.b16 %v807
    %v1552 = vunpack.c.h.b16 %v807
    %v1553 = vunpack.c.l.b16 %v808
    %v1554 = vunpack.c.h.b16 %v808
    %v1555 = vunpack.c.l.b16 %v809
    %v1556 = vunpack.c.h.b16 %v809
    %v1557 = vunpack.c.l.b16 %v810
    %v1558 = vunpack.c.h.b16 %v810
    %v1559 = vunpack.c.l.b16 %v811
    %v1560 = vunpack.c.h.b16 %v811
    %v1561 = vunpack.c.l.b16 %v812
    %v1562 = vunpack.c.h.b16 %v812
    %v1563 = vunpack.c.l.b16 %v813
    %v1564 = vunpack.c.h.b16 %v813
    %v1565 = vunpack.c.l.b16 %v814
    %v1566 = vunpack.c.h.b16 %v814
    %v1567 = vunpack.c.l.b16 %v815
    %v1568 = vunpack.c.h.b16 %v815
    %v1569 = vunpack.c.l.b16 %v816
    %v1570 = vunpack.c.h.b16 %v816
    %v1571 = vunpack.c.l.b16 %v817
    %v1572 = vunpack.c.h.b16 %v817
    %v1573 = vunpack.c.l.b16 %v818
    %v1574 = vunpack.c.h.b16 %v818
    %v1575 = vunpack.c.l.b16 %v819
    %v1576 = vunpack.c.h.b16 %v819
    %v1577 = vunpack.c.l.b16 %v820
    %v1578 = vunpack.c.h.b16 %v820
    %v1579 = vunpack.c.l.b16 %v821
    %v1580 = vunpack.c.h.b16 %v821
    %v1581 = vunpack.c.l.b16 %v822
    %v1582 = vunpack.c.h.b16 %v822
    %v1583 = vunpack.c.l.b16 %v823
    %v1584 = vunpack.c.h.b16 %v823
    %v1585 = vunpack.c.l.b16 %v824
    %v1586 = vunpack.c.h.b16 %v824
    %v1587 = vunpack.c.l.b16 %v825
    %v1588 = vunpack.c.h.b16 %v825
    %v1589 = vunpack.c.l.b16 %v826
    %v1590 = vunpack.c.h.b16 %v826
    %v1591 = vunpack.c.l.b16 %v827
    %v1592 = vunpack.c.h.b16 %v827
    %v1593 = vunpack.c.l.b16 %v828
    %v1594 = vunpack.c.h.b16 %v828
    %v1595 = vunpack.c.l.b16 %v829
    %v1596 = vunpack.c.h.b16 %v829
    %v1597 = vunpack.c.l.b16 %v830
    %v1598 = vunpack.c.h.b16 %v830
    %v1599 = vunpack.c.l.b16 %v831
    %v1600 = vunpack.c.h.b16 %v831
    %v1601 = vunpack.c.l.b16 %v832
    %v1602 = vunpack.c.h.b16 %v832
    %v1603 = vunpack.c.l.b16 %v833
    %v1604 = vunpack.c.h.b16 %v833
    %v1605 = vunpack.c.l.b16 %v834
    %v1606 = vunpack.c.h.b16 %v834
    %v1607 = vunpack.c.l.b16 %v835
    %v1608 = vunpack.c.h.b16 %v835
    %v1609 = vunpack.c.l.b16 %v836
    %v1610 = vunpack.c.h.b16 %v836
    %v1611 = vunpack.c.l.b16 %v837
    %v1612 = vunpack.c.h.b16 %v837
    %v1613 = vunpack.c.l.b16 %v838
    %v1614 = vunpack.c.h.b16 %v838
    %v1615 = vunpack.c.l.b16 %v839
    %v1616 = vunpack.c.h.b16 %v839
    %v1617 = vunpack.c.l.b16 %v840
    %v1618 = vunpack.c.h.b16 %v840
    %v1619 = vunpack.c.l.b16 %v841
    %v1620 = vunpack.c.h.b16 %v841
    %v1621 = vunpack.c.l.b16 %v842
    %v1622 = vunpack.c.h.b16 %v842
    %v1623 = vunpack.c.l.b16 %v843
    %v1624 = vunpack.c.h.b16 %v843
    %v1625 = vunpack.c.l.b16 %v844
    %v1626 = vunpack.c.h.b16 %v844
    %v1627 = vunpack.c.l.b16 %v845
    %v1628 = vunpack.c.h.b16 %v845
    %v1629 = vunpack.c.l.b16 %v846
    %v1630 = vunpack.c.h.b16 %v846
    %v1631 = vunpack.c.l.b16 %v847
    %v1632 = vunpack.c.h.b16 %v847
    %v1633 = vunpack.c.l.b16 %v848
    %v1634 = vunpack.c.h.b16 %v848
    %v1635 = vunpack.c.l.b16 %v849
    %v1636 = vunpack.c.h.b16 %v849
    %v1637 = vunpack.c.l.b16 %v850
    %v1638 = vunpack.c.h.b16 %v850
    %v1639 = vunpack.c.l.b16 %v851
    %v1640 = vunpack.c.h.b16 %v851
    %v1641 = vunpack.c.l.b16 %v852
    %v1642 = vunpack.c.h.b16 %v852
    %v1643 = vunpack.c.l.b16 %v853
    %v1644 = vunpack.c.h.b16 %v853
    %v1645 = vunpack.c.l.b16 %v854
    %v1646 = vunpack.c.h.b16 %v854
    %v1647 = vunpack.c.l.b16 %v855
    %v1648 = vunpack.c.h.b16 %v855
    %v1649 = vunpack.c.l.b16 %v856
    %v1650 = vunpack.c.h.b16 %v856
    %v1651 = vunpack.c.l.b16 %v857
    %v1652 = vunpack.c.h.b16 %v857
    %v1653 = vunpack.c.l.b16 %v858
    %v1654 = vunpack.c.h.b16 %v858
    %v1655 = vunpack.c.l.b16 %v859
    %v1656 = vunpack.c.h.b16 %v859
    %v1657 = vunpack.c.l.b16 %v860
    %v1658 = vunpack.c.h.b16 %v860
    %v1659 = vunpack.c.l.b16 %v861
    %v1660 = vunpack.c.h.b16 %v861
    %v1661 = vunpack.c.l.b16 %v862
    %v1662 = vunpack.c.h.b16 %v862
    %v1663 = vunpack.c.l.b16 %v863
    %v1664 = vunpack.c.h.b16 %v863
    %v1665 = vunpack.c.l.b16 %v864
    %v1666 = vunpack.c.h.b16 %v864
    %v1667 = vunpack.c.l.b16 %v865
    %v1668 = vunpack.c.h.b16 %v865
    %v1669 = vunpack.c.l.b16 %v866
    %v1670 = vunpack.c.h.b16 %v866
    %v1671 = vunpack.c.l.b16 %v867
    %v1672 = vunpack.c.h.b16 %v867
    %v1673 = vunpack.c.l.b16 %v868
    %v1674 = vunpack.c.h.b16 %v868
    %v1675 = vunpack.c.l.b16 %v869
    %v1676 = vunpack.c.h.b16 %v869
    %v1677 = vunpack.c.l.b16 %v870
    %v1678 = vunpack.c.h.b16 %v870
    %v1679 = vunpack.c.l.b16 %v871
    %v1680 = vunpack.c.h.b16 %v871
    %v1681 = vunpack.c.l.b16 %v872
    %v1682 = vunpack.c.h.b16 %v872
    %v1683 = vpack.c.b16 %v1179, %v1171
    %v1684 = vpack.c.b16 %v1180, %v1172
    %v1685 = vpack.c.b16 %v1181, %v1173
    %v1686 = vpack.c.b16 %v1182, %v1174
    %v1687 = vpack.c.b16 %v1183, %v1175
    %v1688 = vpack.c.b16 %v1184, %v1176
    %v1689 = vpack.c.b16 %v1185, %v1177
    %v1690 = vpack.c.b16 %v1186, %v1178
    %v1691 = vpack.c.b16 %v1195, %v1187
    %v1692 = vpack.c.b16 %v1196, %v1188
    %v1693 = vpack.c.b16 %v1197, %v1189
    %v1694 = vpack.c.b16 %v1198, %v1190
    %v1695 = vpack.c.b16 %v1199, %v1191
    %v1696 = vpack.c.b16 %v1200, %v1192
    %v1697 = vpack.c.b16 %v1201, %v1193
    %v1698 = vpack.c.b16 %v1202, %v1194
    %v1699 = vpack.c.b16 %v1211, %v1203
    %v1700 = vpack.c.b16 %v1212, %v1204
    %v1701 = vpack.c.b16 %v1213, %v1205
    %v1702 = vpack.c.b16 %v1214, %v1206
    %v1703 = vpack.c.b16 %v1215, %v1207
    %v1704 = vpack.c.b16 %v1216, %v1208
    %v1705 = vpack.c.b16 %v1217, %v1209
    %v1706 = vpack.c.b16 %v1218, %v1210
    %v1707 = vpack.c.b16 %v1227, %v1219
    %v1708 = vpack.c.b16 %v1228, %v1220
    %v1709 = vpack.c.b16 %v1229, %v1221
    %v1710 = vpack.c.b16 %v1230, %v1222
    %v1711 = vpack.c.b16 %v1231, %v1223
    %v1712 = vpack.c.b16 %v1232, %v1224
    %v1713 = vpack.c.b16 %v1233, %v1225
    %v1714 = vpack.c.b16 %v1234, %v1226
    %v1715 = vpack.c.b16 %v1243, %v1235
    %v1716 = vpack.c.b16 %v1244, %v1236
    %v1717 = vpack.c.b16 %v1245, %v1237
    %v1718 = vpack.c.b16 %v1246, %v1238
    %v1719 = vpack.c.b16 %v1247, %v1239
    %v1720 = vpack.c.b16 %v1248, %v1240
    %v1721 = vpack.c.b16 %v1249, %v1241
    %v1722 = vpack.c.b16 %v1250, %v1242
    %v1723 = vpack.c.b16 %v1259, %v1251
    %v1724 = vpack.c.b16 %v1260, %v1252
    %v1725 = vpack.c.b16 %v1261, %v1253
    %v1726 = vpack.c.b16 %v1262, %v1254
    %v1727 = vpack.c.b16 %v1263, %v1255
    %v1728 = vpack.c.b16 %v1264, %v1256
    %v1729 = vpack.c.b16 %v1265, %v1257
    %v1730 = vpack.c.b16 %v1266, %v1258
    %v1731 = vpack.c.b16 %v1275, %v1267
    %v1732 = vpack.c.b16 %v1276, %v1268
    %v1733 = vpack.c.b16 %v1277, %v1269
    %v1734 = vpack.c.b16 %v1278, %v1270
    %v1735 = vpack.c.b16 %v1279, %v1271
    %v1736 = vpack.c.b16 %v1280, %v1272
    %v1737 = vpack.c.b16 %v1281, %v1273
    %v1738 = vpack.c.b16 %v1282, %v1274
    %v1739 = vpack.c.b16 %v1291, %v1283
    %v1740 = vpack.c.b16 %v1292, %v1284
    %v1741 = vpack.c.b16 %v1293, %v1285
    %v1742 = vpack.c.b16 %v1294, %v1286
    %v1743 = vpack.c.b16 %v1295, %v1287
    %v1744 = vpack.c.b16 %v1296, %v1288
    %v1745 = vpack.c.b16 %v1297, %v1289
    %v1746 = vpack.c.b16 %v1298, %v1290
    %v1747 = vpack.c.b16 %v1307, %v1299
    %v1748 = vpack.c.b16 %v1308, %v1300
    %v1749 = vpack.c.b16 %v1309, %v1301
    %v1750 = vpack.c.b16 %v1310, %v1302
    %v1751 = vpack.c.b16 %v1311, %v1303
    %v1752 = vpack.c.b16 %v1312, %v1304
    %v1753 = vpack.c.b16 %v1313, %v1305
    %v1754 = vpack.c.b16 %v1314, %v1306
    %v1755 = vpack.c.b16 %v1323, %v1315
    %v1756 = vpack.c.b16 %v1324, %v1316
    %v1757 = vpack.c.b16 %v1325, %v1317
    %v1758 = vpack.c.b16 %v1326, %v1318
    %v1759 = vpack.c.b16 %v1327, %v1319
    %v1760 = vpack.c.b16 %v1328, %v1320
    %v1761 = vpack.c.b16 %v1329, %v1321
    %v1762 = vpack.c.b16 %v1330, %v1322
    %v1763 = vpack.c.b16 %v1339, %v1331
    %v1764 = vpack.c.b16 %v1340, %v1332
    %v1765 = vpack.c.b16 %v1341, %v1333
    %v1766 = vpack.c.b16 %v1342, %v1334
    %v1767 = vpack.c.b16 %v1343, %v1335
    %v1768 = vpack.c.b16 %v1344, %v1336
    %v1769 = vpack.c.b16 %v1345, %v1337
    %v1770 = vpack.c.b16 %v1346, %v1338
    %v1771 = vpack.c.b16 %v1355, %v1347
    %v1772 = vpack.c.b16 %v1356, %v1348
    %v1773 = vpack.c.b16 %v1357, %v1349
    %v1774 = vpack.c.b16 %v1358, %v1350
    %v1775 = vpack.c.b16 %v1359, %v1351
    %v1776 = vpack.c.b16 %v1360, %v1352
    %v1777 = vpack.c.b16 %v1361, %v1353
    %v1778 = vpack.c.b16 %v1362, %v1354
    %v1779 = vpack.c.b16 %v1371, %v1363
    %v1780 = vpack.c.b16 %v1372, %v1364
    %v1781 = vpack.c.b16 %v1373, %v1365
    %v1782 = vpack.c.b16 %v1374, %v1366
    %v1783 = vpack.c.b16 %v1375, %v1367
    %v1784 = vpack.c.b16 %v1376, %v1368
    %v1785 = vpack.c.b16 %v1377, %v1369
    %v1786 = vpack.c.b16 %v1378, %v1370
    %v1787 = vpack.c.b16 %v1387, %v1379
    %v1788 = vpack.c.b16 %v1388, %v1380
    %v1789 = vpack.c.b16 %v1389, %v1381
    %v1790 = vpack.c.b16 %v1390, %v1382
    %v1791 = vpack.c.b16 %v1391, %v1383
    %v1792 = vpack.c.b16 %v1392, %v1384
    %v1793 = vpack.c.b16 %v1393, %v1385
    %v1794 = vpack.c.b16 %v1394, %v1386
    %v1795 = vpack.c.b16 %v1403, %v1395
    %v1796 = vpack.c.b16 %v1404, %v1396
    %v1797 = vpack.c.b16 %v1405, %v1397
    %v1798 = vpack.c.b16 %v1406, %v1398
    %v1799 = vpack.c.b16 %v1407, %v1399
    %v1800 = vpack.c.b16 %v1408, %v1400
    %v1801 = vpack.c.b16 %v1409, %v1401
    %v1802 = vpack.c.b16 %v1410, %v1402
    %v1803 = vpack.c.b16 %v1419, %v1411
    %v1804 = vpack.c.b16 %v1420, %v1412
    %v1805 = vpack.c.b16 %v1421, %v1413
    %v1806 = vpack.c.b16 %v1422, %v1414
    %v1807 = vpack.c.b16 %v1423, %v1415
    %v1808 = vpack.c.b16 %v1424, %v1416
    %v1809 = vpack.c.b16 %v1425, %v1417
    %v1810 = vpack.c.b16 %v1426, %v1418
    %v1811 = vpack.c.b16 %v1435, %v1427
    %v1812 = vpack.c.b16 %v1436, %v1428
    %v1813 = vpack.c.b16 %v1437, %v1429
    %v1814 = vpack.c.b16 %v1438, %v1430
    %v1815 = vpack.c.b16 %v1439, %v1431
    %v1816 = vpack.c.b16 %v1440, %v1432
    %v1817 = vpack.c.b16 %v1441, %v1433
    %v1818 = vpack.c.b16 %v1442, %v1434
    %v1819 = vpack.c.b16 %v1451, %v1443
    %v1820 = vpack.c.b16 %v1452, %v1444
    %v1821 = vpack.c.b16 %v1453, %v1445
    %v1822 = vpack.c.b16 %v1454, %v1446
    %v1823 = vpack.c.b16 %v1455, %v1447
    %v1824 = vpack.c.b16 %v1456, %v1448
    %v1825 = vpack.c.b16 %v1457, %v1449
    %v1826 = vpack.c.b16 %v1458, %v1450
    %v1827 = vpack.c.b16 %v1467, %v1459
    %v1828 = vpack.c.b16 %v1468, %v1460
    %v1829 = vpack.c.b16 %v1469, %v1461
    %v1830 = vpack.c.b16 %v1470, %v1462
    %v1831 = vpack.c.b16 %v1471, %v1463
    %v1832 = vpack.c.b16 %v1472, %v1464
    %v1833 = vpack.c.b16 %v1473, %v1465
    %v1834 = vpack.c.b16 %v1474, %v1466
    %v1835 = vpack.c.b16 %v1483, %v1475
    %v1836 = vpack.c.b16 %v1484, %v1476
    %v1837 = vpack.c.b16 %v1485, %v1477
    %v1838 = vpack.c.b16 %v1486, %v1478
    %v1839 = vpack.c.b16 %v1487, %v1479
    %v1840 = vpack.c.b16 %v1488, %v1480
    %v1841 = vpack.c.b16 %v1489, %v1481
    %v1842 = vpack.c.b16 %v1490, %v1482
    %v1843 = vpack.c.b16 %v1499, %v1491
    %v1844 = vpack.c.b16 %v1500, %v1492
    %v1845 = vpack.c.b16 %v1501, %v1493
    %v1846 = vpack.c.b16 %v1502, %v1494
    %v1847 = vpack.c.b16 %v1503, %v1495
    %v1848 = vpack.c.b16 %v1504, %v1496
    %v1849 = vpack.c.b16 %v1505, %v1497
    %v1850 = vpack.c.b16 %v1506, %v1498
    %v1851 = vpack.c.b16 %v1515, %v1507
    %v1852 = vpack.c.b16 %v1516, %v1508
    %v1853 = vpack.c.b16 %v1517, %v1509
    %v1854 = vpack.c.b16 %v1518, %v1510
    %v1855 = vpack.c.b16 %v1519, %v1511
    %v1856 = vpack.c.b16 %v1520, %v1512
    %v1857 = vpack.c.b16 %v1521, %v1513
    %v1858 = vpack.c.b16 %v1522, %v1514
    %v1859 = vpack.c.b16 %v1531, %v1523
    %v1860 = vpack.c.b16 %v1532, %v1524
    %v1861 = vpack.c.b16 %v1533, %v1525
    %v1862 = vpack.c.b16 %v1534, %v1526
    %v1863 = vpack.c.b16 %v1535, %v1527
    %v1864 = vpack.c.b16 %v1536, %v1528
    %v1865 = vpack.c.b16 %v1537, %v1529
    %v1866 = vpack.c.b16 %v1538, %v1530
    %v1867 = vpack.c.b16 %v1547, %v1539
    %v1868 = vpack.c.b16 %v1548, %v1540
    %v1869 = vpack.c.b16 %v1549, %v1541
    %v1870 = vpack.c.b16 %v1550, %v1542
    %v1871 = vpack.c.b16 %v1551, %v1543
    %v1872 = vpack.c.b16 %v1552, %v1544
    %v1873 = vpack.c.b16 %v1553, %v1545
    %v1874 = vpack.c.b16 %v1554, %v1546
    %v1875 = vpack.c.b16 %v1563, %v1555
    %v1876 = vpack.c.b16 %v1564, %v1556
    %v1877 = vpack.c.b16 %v1565, %v1557
    %v1878 = vpack.c.b16 %v1566, %v1558
    %v1879 = vpack.c.b16 %v1567, %v1559
    %v1880 = vpack.c.b16 %v1568, %v1560
    %v1881 = vpack.c.b16 %v1569, %v1561
    %v1882 = vpack.c.b16 %v1570, %v1562
    %v1883 = vpack.c.b16 %v1579, %v1571
    %v1884 = vpack.c.b16 %v1580, %v1572
    %v1885 = vpack.c.b16 %v1581, %v1573
    %v1886 = vpack.c.b16 %v1582, %v1574
    %v1887 = vpack.c.b16 %v1583, %v1575
    %v1888 = vpack.c.b16 %v1584, %v1576
    %v1889 = vpack.c.b16 %v1585, %v1577
    %v1890 = vpack.c.b16 %v1586, %v1578
    %v1891 = vpack.c.b16 %v1595, %v1587
    %v1892 = vpack.c.b16 %v1596, %v1588
    %v1893 = vpack.c.b16 %v1597, %v1589
    %v1894 = vpack.c.b16 %v1598, %v1590
    %v1895 = vpack.c.b16 %v1599, %v1591
    %v1896 = vpack.c.b16 %v1600, %v1592
    %v1897 = vpack.c.b16 %v1601, %v1593
    %v1898 = vpack.c.b16 %v1602, %v1594
    %v1899 = vpack.c.b16 %v1611, %v1603
    %v1900 = vpack.c.b16 %v1612, %v1604
    %v1901 = vpack.c.b16 %v1613, %v1605
    %v1902 = vpack.c.b16 %v1614, %v1606
    %v1903 = vpack.c.b16 %v1615, %v1607
    %v1904 = vpack.c.b16 %v1616, %v1608
    %v1905 = vpack.c.b16 %v1617, %v1609
    %v1906 = vpack.c.b16 %v1618, %v1610
    %v1907 = vpack.c.b16 %v1627, %v1619
    %v1908 = vpack.c.b16 %v1628, %v1620
    %v1909 = vpack.c.b16 %v1629, %v1621
    %v1910 = vpack.c.b16 %v1630, %v1622
    %v1911 = vpack.c.b16 %v1631, %v1623
    %v1912 = vpack.c.b16 %v1632, %v1624
    %v1913 = vpack.c.b16 %v1633, %v1625
    %v1914 = vpack.c.b16 %v1634, %v1626
    %v1915 = vpack.c.b16 %v1643, %v1635
    %v1916 = vpack.c.b16 %v1644, %v1636
    %v1917 = vpack.c.b16 %v1645, %v1637
    %v1918 = vpack.c.b16 %v1646, %v1638
    %v1919 = vpack.c.b16 %v1647, %v1639
    %v1920 = vpack.c.b16 %v1648, %v1640
    %v1921 = vpack.c.b16 %v1649, %v1641
    %v1922 = vpack.c.b16 %v1650, %v1642
    %v1923 = vpack.c.b16 %v1659, %v1651
    %v1924 = vpack.c.b16 %v1660, %v1652
    %v1925 = vpack.c.b16 %v1661, %v1653
    %v1926 = vpack.c.b16 %v1662, %v1654
    %v1927 = vpack.c.b16 %v1663, %v1655
    %v1928 = vpack.c.b16 %v1664, %v1656
    %v1929 = vpack.c.b16 %v1665, %v1657
    %v1930 = vpack.c.b16 %v1666, %v1658
    %v1931 = vpack.c.b16 %v1675, %v1667
    %v1932 = vpack.c.b16 %v1676, %v1668
    %v1933 = vpack.c.b16 %v1677, %v1669
    %v1934 = vpack.c.b16 %v1678, %v1670
    %v1935 = vpack.c.b16 %v1679, %v1671
    %v1936 = vpack.c.b16 %v1680, %v1672
    %v1937 = vpack.c.b16 %v1681, %v1673
    %v1938 = vpack.c.b16 %v1682, %v1674
    %2195 = vmatprep.subr.bf16.mxu0 %v1684
    %2196 = vmatpush1.bf16.msra.mxu0 %v1683
    %2197 = vmatprep.subr.bf16.mxu0 %v1692
    %2198 = vmatpush1.bf16.msra.mxu0 %v1691
    %2199 = vmatprep.subr.bf16.mxu0 %v1700
    %2200 = vmatpush1.bf16.msra.mxu0 %v1699
    %2201 = vmatprep.subr.bf16.mxu0 %v1708
    %2202 = vmatpush1.bf16.msra.mxu0 %v1707
    %2203 = vmatprep.subr.bf16.mxu0 %v1716
    %2204 = vmatpush1.bf16.msra.mxu0 %v1715
    %2205 = vmatprep.subr.bf16.mxu0 %v1724
    %2206 = vmatpush1.bf16.msra.mxu0 %v1723
    %2207 = vmatprep.subr.bf16.mxu0 %v1732
    %2208 = vmatpush1.bf16.msra.mxu0 %v1731
    %2209 = vmatprep.subr.bf16.mxu0 %v1740
    %2210 = vmatpush1.bf16.msra.mxu0 %v1739
    %2211 = vmatprep.subr.bf16.mxu0 %v1748
    %2212 = vmatpush1.bf16.msra.mxu0 %v1747
    %2213 = vmatprep.subr.bf16.mxu0 %v1756
    %2214 = vmatpush1.bf16.msra.mxu0 %v1755
    %2215 = vmatprep.subr.bf16.mxu0 %v1764
    %2216 = vmatpush1.bf16.msra.mxu0 %v1763
    %2217 = vmatprep.subr.bf16.mxu0 %v1772
    %2218 = vmatpush1.bf16.msra.mxu0 %v1771
    %2219 = vmatprep.subr.bf16.mxu0 %v1780
    %2220 = vmatpush1.bf16.msra.mxu0 %v1779
    %2221 = vmatprep.subr.bf16.mxu0 %v1788
    %2222 = vmatpush1.bf16.msra.mxu0 %v1787
    %2223 = vmatprep.subr.bf16.mxu0 %v1796
    %2224 = vmatpush1.bf16.msra.mxu0 %v1795
    %2225 = vmatprep.subr.bf16.mxu0 %v1804
    %2226 = vmatpush1.bf16.msra.mxu0 %v1803
    %2227 = vmatprep.mubr.bf16.mxu0 %v614
    %2228 = vmatmul.mubr.bf16.gmra.mrb[0].mxu0 %v613
    %v2229 = vpop.f32.mrb[0].mxu0
    %v2230 = vadd.f32 %v878, %v2229
    %v2231 = vpop.f32.mrb[0].mxu0
    %v2232 = vadd.f32 %v882, %v2231
    %v2233 = vpop.f32.mrb[0].mxu0
    %v2234 = vpop.f32.mrb[0].mxu0
    %2235 = vdwg.mxu0
    %2236 = vmatprep.subr.bf16.mxu0 %v1812
    %2237 = vmatpush1.bf16.msra.mxu0 %v1811
    %2238 = vmatprep.subr.bf16.mxu0 %v1820
    %2239 = vmatpush1.bf16.msra.mxu0 %v1819
    %2240 = vmatprep.subr.bf16.mxu0 %v1828
    %2241 = vmatpush1.bf16.msra.mxu0 %v1827
    %2242 = vmatprep.subr.bf16.mxu0 %v1836
    %2243 = vmatpush1.bf16.msra.mxu0 %v1835
    %2244 = vmatprep.subr.bf16.mxu0 %v1844
    %2245 = vmatpush1.bf16.msra.mxu0 %v1843
    %2246 = vmatprep.subr.bf16.mxu0 %v1852
    %2247 = vmatpush1.bf16.msra.mxu0 %v1851
    %2248 = vmatprep.subr.bf16.mxu0 %v1860
    %2249 = vmatpush1.bf16.msra.mxu0 %v1859
    %2250 = vmatprep.subr.bf16.mxu0 %v1868
    %2251 = vmatpush1.bf16.msra.mxu0 %v1867
    %2252 = vmatprep.subr.bf16.mxu0 %v1876
    %2253 = vmatpush1.bf16.msra.mxu0 %v1875
    %2254 = vmatprep.subr.bf16.mxu0 %v1884
    %2255 = vmatpush1.bf16.msra.mxu0 %v1883
    %2256 = vmatprep.subr.bf16.mxu0 %v1892
    %2257 = vmatpush1.bf16.msra.mxu0 %v1891
    %2258 = vmatprep.subr.bf16.mxu0 %v1900
    %2259 = vmatpush1.bf16.msra.mxu0 %v1899
    %2260 = vmatprep.subr.bf16.mxu0 %v1908
    %2261 = vmatpush1.bf16.msra.mxu0 %v1907
    %2262 = vmatprep.subr.bf16.mxu0 %v1916
    %2263 = vmatpush1.bf16.msra.mxu0 %v1915
    %2264 = vmatprep.subr.bf16.mxu0 %v1924
    %2265 = vmatpush1.bf16.msra.mxu0 %v1923
    %2266 = vmatprep.subr.bf16.mxu0 %v1932
    %2267 = vmatpush1.bf16.msra.mxu0 %v1931
    %2268 = vmatprep.mubr.bf16.mxu0 %v616
    %2269 = vmatmul.mubr.bf16.gmra.mrb[0].mxu0 %v615
    %v2270 = vpop.f32.mrb[0].mxu0
    %v2271 = vadd.f32 %v2230, %v2270
    %v2272 = vpop.f32.mrb[0].mxu0
    %v2273 = vadd.f32 %v2232, %v2272
    %v2274 = vpop.f32.mrb[0].mxu0
    %v2275 = vpop.f32.mrb[0].mxu0
    %2276 = vdwg.mxu0
    %2277 = vmatprep.subr.bf16.mxu0 %v1686
    %2278 = vmatpush1.bf16.msra.mxu0 %v1685
    %2279 = vmatprep.subr.bf16.mxu0 %v1694
    %2280 = vmatpush1.bf16.msra.mxu0 %v1693
    %2281 = vmatprep.subr.bf16.mxu0 %v1702
    %2282 = vmatpush1.bf16.msra.mxu0 %v1701
    %2283 = vmatprep.subr.bf16.mxu0 %v1710
    %2284 = vmatpush1.bf16.msra.mxu0 %v1709
    %2285 = vmatprep.subr.bf16.mxu0 %v1718
    %2286 = vmatpush1.bf16.msra.mxu0 %v1717
    %2287 = vmatprep.subr.bf16.mxu0 %v1726
    %2288 = vmatpush1.bf16.msra.mxu0 %v1725
    %2289 = vmatprep.subr.bf16.mxu0 %v1734
    %2290 = vmatpush1.bf16.msra.mxu0 %v1733
    %2291 = vmatprep.subr.bf16.mxu0 %v1742
    %2292 = vmatpush1.bf16.msra.mxu0 %v1741
    %2293 = vmatprep.subr.bf16.mxu0 %v1750
    %2294 = vmatpush1.bf16.msra.mxu0 %v1749
    %2295 = vmatprep.subr.bf16.mxu0 %v1758
    %2296 = vmatpush1.bf16.msra.mxu0 %v1757
    %2297 = vmatprep.subr.bf16.mxu0 %v1766
    %2298 = vmatpush1.bf16.msra.mxu0 %v1765
    %2299 = vmatprep.subr.bf16.mxu0 %v1774
    %2300 = vmatpush1.bf16.msra.mxu0 %v1773
    %2301 = vmatprep.subr.bf16.mxu0 %v1782
    %2302 = vmatpush1.bf16.msra.mxu0 %v1781
    %2303 = vmatprep.subr.bf16.mxu0 %v1790
    %2304 = vmatpush1.bf16.msra.mxu0 %v1789
    %2305 = vmatprep.subr.bf16.mxu0 %v1798
    %2306 = vmatpush1.bf16.msra.mxu0 %v1797
    %2307 = vmatprep.subr.bf16.mxu0 %v1806
    %2308 = vmatpush1.bf16.msra.mxu0 %v1805
    %2309 = vmatprep.mubr.bf16.mxu0 %v614
    %2310 = vmatmul.mubr.bf16.gmra.mrb[0].mxu0 %v613
    %v2311 = vpop.f32.mrb[0].mxu0
    %v2312 = vadd.f32 %v886, %v2311
    %v2313 = vpop.f32.mrb[0].mxu0
    %v2314 = vadd.f32 %v890, %v2313
    %v2315 = vpop.f32.mrb[0].mxu0
    %v2316 = vpop.f32.mrb[0].mxu0
    %2317 = vdwg.mxu0
    %2318 = vmatprep.subr.bf16.mxu0 %v1814
    %2319 = vmatpush1.bf16.msra.mxu0 %v1813
    %2320 = vmatprep.subr.bf16.mxu0 %v1822
    %2321 = vmatpush1.bf16.msra.mxu0 %v1821
    %2322 = vmatprep.subr.bf16.mxu0 %v1830
    %2323 = vmatpush1.bf16.msra.mxu0 %v1829
    %2324 = vmatprep.subr.bf16.mxu0 %v1838
    %2325 = vmatpush1.bf16.msra.mxu0 %v1837
    %2326 = vmatprep.subr.bf16.mxu0 %v1846
    %2327 = vmatpush1.bf16.msra.mxu0 %v1845
    %2328 = vmatprep.subr.bf16.mxu0 %v1854
    %2329 = vmatpush1.bf16.msra.mxu0 %v1853
    %2330 = vmatprep.subr.bf16.mxu0 %v1862
    %2331 = vmatpush1.bf16.msra.mxu0 %v1861
    %2332 = vmatprep.subr.bf16.mxu0 %v1870
    %2333 = vmatpush1.bf16.msra.mxu0 %v1869
    %2334 = vmatprep.subr.bf16.mxu0 %v1878
    %2335 = vmatpush1.bf16.msra.mxu0 %v1877
    %2336 = vmatprep.subr.bf16.mxu0 %v1886
    %2337 = vmatpush1.bf16.msra.mxu0 %v1885
    %2338 = vmatprep.subr.bf16.mxu0 %v1894
    %2339 = vmatpush1.bf16.msra.mxu0 %v1893
    %2340 = vmatprep.subr.bf16.mxu0 %v1902
    %2341 = vmatpush1.bf16.msra.mxu0 %v1901
    %2342 = vmatprep.subr.bf16.mxu0 %v1910
    %2343 = vmatpush1.bf16.msra.mxu0 %v1909
    %2344 = vmatprep.subr.bf16.mxu0 %v1918
    %2345 = vmatpush1.bf16.msra.mxu0 %v1917
    %2346 = vmatprep.subr.bf16.mxu0 %v1926
    %2347 = vmatpush1.bf16.msra.mxu0 %v1925
    %2348 = vmatprep.subr.bf16.mxu0 %v1934
    %2349 = vmatpush1.bf16.msra.mxu0 %v1933
    %2350 = vmatprep.mubr.bf16.mxu0 %v616
    %2351 = vmatmul.mubr.bf16.gmra.mrb[0].mxu0 %v615
    %v2352 = vpop.f32.mrb[0].mxu0
    %v2353 = vadd.f32 %v2312, %v2352
    %v2354 = vpop.f32.mrb[0].mxu0
    %v2355 = vadd.f32 %v2314, %v2354
    %v2356 = vpop.f32.mrb[0].mxu0
    %v2357 = vpop.f32.mrb[0].mxu0
    %2358 = vdwg.mxu0
    %2359 = vmatprep.subr.bf16.mxu0 %v1688
    %2360 = vmatpush1.bf16.msra.mxu0 %v1687
    %2361 = vmatprep.subr.bf16.mxu0 %v1696
    %2362 = vmatpush1.bf16.msra.mxu0 %v1695
    %2363 = vmatprep.subr.bf16.mxu0 %v1704
    %2364 = vmatpush1.bf16.msra.mxu0 %v1703
    %2365 = vmatprep.subr.bf16.mxu0 %v1712
    %2366 = vmatpush1.bf16.msra.mxu0 %v1711
    %2367 = vmatprep.subr.bf16.mxu0 %v1720
    %2368 = vmatpush1.bf16.msra.mxu0 %v1719
    %2369 = vmatprep.subr.bf16.mxu0 %v1728
    %2370 = vmatpush1.bf16.msra.mxu0 %v1727
    %2371 = vmatprep.subr.bf16.mxu0 %v1736
    %2372 = vmatpush1.bf16.msra.mxu0 %v1735
    %2373 = vmatprep.subr.bf16.mxu0 %v1744
    %2374 = vmatpush1.bf16.msra.mxu0 %v1743
    %2375 = vmatprep.subr.bf16.mxu0 %v1752
    %2376 = vmatpush1.bf16.msra.mxu0 %v1751
    %2377 = vmatprep.subr.bf16.mxu0 %v1760
    %2378 = vmatpush1.bf16.msra.mxu0 %v1759
    %2379 = vmatprep.subr.bf16.mxu0 %v1768
    %2380 = vmatpush1.bf16.msra.mxu0 %v1767
    %2381 = vmatprep.subr.bf16.mxu0 %v1776
    %2382 = vmatpush1.bf16.msra.mxu0 %v1775
    %2383 = vmatprep.subr.bf16.mxu0 %v1784
    %2384 = vmatpush1.bf16.msra.mxu0 %v1783
    %2385 = vmatprep.subr.bf16.mxu0 %v1792
    %2386 = vmatpush1.bf16.msra.mxu0 %v1791
    %2387 = vmatprep.subr.bf16.mxu0 %v1800
    %2388 = vmatpush1.bf16.msra.mxu0 %v1799
    %2389 = vmatprep.subr.bf16.mxu0 %v1808
    %2390 = vmatpush1.bf16.msra.mxu0 %v1807
    %2391 = vmatprep.mubr.bf16.mxu0 %v614
    %2392 = vmatmul.mubr.bf16.gmra.mrb[0].mxu0 %v613
    %v2393 = vpop.f32.mrb[0].mxu0
    %v2394 = vadd.f32 %v894, %v2393
    %v2395 = vpop.f32.mrb[0].mxu0
    %v2396 = vadd.f32 %v898, %v2395
    %v2397 = vpop.f32.mrb[0].mxu0
    %v2398 = vpop.f32.mrb[0].mxu0
    %2399 = vdwg.mxu0
    %2400 = vmatprep.subr.bf16.mxu0 %v1816
    %2401 = vmatpush1.bf16.msra.mxu0 %v1815
    %2402 = vmatprep.subr.bf16.mxu0 %v1824
    %2403 = vmatpush1.bf16.msra.mxu0 %v1823
    %2404 = vmatprep.subr.bf16.mxu0 %v1832
    %2405 = vmatpush1.bf16.msra.mxu0 %v1831
    %2406 = vmatprep.subr.bf16.mxu0 %v1840
    %2407 = vmatpush1.bf16.msra.mxu0 %v1839
    %2408 = vmatprep.subr.bf16.mxu0 %v1848
    %2409 = vmatpush1.bf16.msra.mxu0 %v1847
    %2410 = vmatprep.subr.bf16.mxu0 %v1856
    %2411 = vmatpush1.bf16.msra.mxu0 %v1855
    %2412 = vmatprep.subr.bf16.mxu0 %v1864
    %2413 = vmatpush1.bf16.msra.mxu0 %v1863
    %2414 = vmatprep.subr.bf16.mxu0 %v1872
    %2415 = vmatpush1.bf16.msra.mxu0 %v1871
    %2416 = vmatprep.subr.bf16.mxu0 %v1880
    %2417 = vmatpush1.bf16.msra.mxu0 %v1879
    %2418 = vmatprep.subr.bf16.mxu0 %v1888
    %2419 = vmatpush1.bf16.msra.mxu0 %v1887
    %2420 = vmatprep.subr.bf16.mxu0 %v1896
    %2421 = vmatpush1.bf16.msra.mxu0 %v1895
    %2422 = vmatprep.subr.bf16.mxu0 %v1904
    %2423 = vmatpush1.bf16.msra.mxu0 %v1903
    %2424 = vmatprep.subr.bf16.mxu0 %v1912
    %2425 = vmatpush1.bf16.msra.mxu0 %v1911
    %2426 = vmatprep.subr.bf16.mxu0 %v1920
    %2427 = vmatpush1.bf16.msra.mxu0 %v1919
    %2428 = vmatprep.subr.bf16.mxu0 %v1928
    %2429 = vmatpush1.bf16.msra.mxu0 %v1927
    %2430 = vmatprep.subr.bf16.mxu0 %v1936
    %2431 = vmatpush1.bf16.msra.mxu0 %v1935
    %2432 = vmatprep.mubr.bf16.mxu0 %v616
    %2433 = vmatmul.mubr.bf16.gmra.mrb[0].mxu0 %v615
    %v2434 = vpop.f32.mrb[0].mxu0
    %v2435 = vadd.f32 %v2394, %v2434
    %v2436 = vpop.f32.mrb[0].mxu0
    %v2437 = vadd.f32 %v2396, %v2436
    %v2438 = vpop.f32.mrb[0].mxu0
    %v2439 = vpop.f32.mrb[0].mxu0
    %2440 = vdwg.mxu0
    %2441 = vmatprep.subr.bf16.mxu0 %v1690
    %2442 = vmatpush1.bf16.msra.mxu0 %v1689
    %2443 = vmatprep.subr.bf16.mxu0 %v1698
    %2444 = vmatpush1.bf16.msra.mxu0 %v1697
    %2445 = vmatprep.subr.bf16.mxu0 %v1706
    %2446 = vmatpush1.bf16.msra.mxu0 %v1705
    %2447 = vmatprep.subr.bf16.mxu0 %v1714
    %2448 = vmatpush1.bf16.msra.mxu0 %v1713
    %2449 = vmatprep.subr.bf16.mxu0 %v1722
    %2450 = vmatpush1.bf16.msra.mxu0 %v1721
    %2451 = vmatprep.subr.bf16.mxu0 %v1730
    %2452 = vmatpush1.bf16.msra.mxu0 %v1729
    %2453 = vmatprep.subr.bf16.mxu0 %v1738
    %2454 = vmatpush1.bf16.msra.mxu0 %v1737
    %2455 = vmatprep.subr.bf16.mxu0 %v1746
    %2456 = vmatpush1.bf16.msra.mxu0 %v1745
    %2457 = vmatprep.subr.bf16.mxu0 %v1754
    %2458 = vmatpush1.bf16.msra.mxu0 %v1753
    %2459 = vmatprep.subr.bf16.mxu0 %v1762
    %2460 = vmatpush1.bf16.msra.mxu0 %v1761
    %2461 = vmatprep.subr.bf16.mxu0 %v1770
    %2462 = vmatpush1.bf16.msra.mxu0 %v1769
    %2463 = vmatprep.subr.bf16.mxu0 %v1778
    %2464 = vmatpush1.bf16.msra.mxu0 %v1777
    %2465 = vmatprep.subr.bf16.mxu0 %v1786
    %2466 = vmatpush1.bf16.msra.mxu0 %v1785
    %2467 = vmatprep.subr.bf16.mxu0 %v1794
    %2468 = vmatpush1.bf16.msra.mxu0 %v1793
    %2469 = vmatprep.subr.bf16.mxu0 %v1802
    %2470 = vmatpush1.bf16.msra.mxu0 %v1801
    %2471 = vmatprep.subr.bf16.mxu0 %v1810
    %2472 = vmatpush1.bf16.msra.mxu0 %v1809
    %2473 = vmatprep.mubr.bf16.mxu0 %v614
    %2474 = vmatmul.mubr.bf16.gmra.mrb[0].mxu0 %v613
    %v2475 = vpop.f32.mrb[0].mxu0
    %v2476 = vadd.f32 %v902, %v2475
    %v2477 = vpop.f32.mrb[0].mxu0
    %v2478 = vadd.f32 %v906, %v2477
    %v2479 = vpop.f32.mrb[0].mxu0
    %v2480 = vpop.f32.mrb[0].mxu0
    %2481 = vdwg.mxu0
    %2482 = vmatprep.subr.bf16.mxu0 %v1818
    %2483 = vmatpush1.bf16.msra.mxu0 %v1817
    %2484 = vmatprep.subr.bf16.mxu0 %v1826
    %2485 = vmatpush1.bf16.msra.mxu0 %v1825
    %2486 = vmatprep.subr.bf16.mxu0 %v1834
    %2487 = vmatpush1.bf16.msra.mxu0 %v1833
    %2488 = vmatprep.subr.bf16.mxu0 %v1842
    %2489 = vmatpush1.bf16.msra.mxu0 %v1841
    %2490 = vmatprep.subr.bf16.mxu0 %v1850
    %2491 = vmatpush1.bf16.msra.mxu0 %v1849
    %2492 = vmatprep.subr.bf16.mxu0 %v1858
    %2493 = vmatpush1.bf16.msra.mxu0 %v1857
    %2494 = vmatprep.subr.bf16.mxu0 %v1866
    %2495 = vmatpush1.bf16.msra.mxu0 %v1865
    %2496 = vmatprep.subr.bf16.mxu0 %v1874
    %2497 = vmatpush1.bf16.msra.mxu0 %v1873
    %2498 = vmatprep.subr.bf16.mxu0 %v1882
    %2499 = vmatpush1.bf16.msra.mxu0 %v1881
    %2500 = vmatprep.subr.bf16.mxu0 %v1890
    %2501 = vmatpush1.bf16.msra.mxu0 %v1889
    %2502 = vmatprep.subr.bf16.mxu0 %v1898
    %2503 = vmatpush1.bf16.msra.mxu0 %v1897
    %2504 = vmatprep.subr.bf16.mxu0 %v1906
    %2505 = vmatpush1.bf16.msra.mxu0 %v1905
    %2506 = vmatprep.subr.bf16.mxu0 %v1914
    %2507 = vmatpush1.bf16.msra.mxu0 %v1913
    %2508 = vmatprep.subr.bf16.mxu0 %v1922
    %2509 = vmatpush1.bf16.msra.mxu0 %v1921
    %2510 = vmatprep.subr.bf16.mxu0 %v1930
    %2511 = vmatpush1.bf16.msra.mxu0 %v1929
    %2512 = vmatprep.subr.bf16.mxu0 %v1938
    %2513 = vmatpush1.bf16.msra.mxu0 %v1937
    %2514 = vmatprep.mubr.bf16.mxu0 %v616
    %2515 = vmatmul.mubr.bf16.gmra.mrb[0].mxu0 %v615
    %v2516 = vpop.f32.mrb[0].mxu0
    %v2517 = vadd.f32 %v2476, %v2516
    %v2518 = vpop.f32.mrb[0].mxu0
    %v2519 = vadd.f32 %v2478, %v2518
    %v2520 = vpop.f32.mrb[0].mxu0
    %v2521 = vpop.f32.mrb[0].mxu0
    %2522 = vdwg.mxu0
    %v2523 = vmax.f32 %v2271, 0.0
    %v2524 = vmax.f32 %v2273, 0.0
    %v2525 = vmax.f32 %v2353, 0.0
    %v2526 = vmax.f32 %v2355, 0.0
    %v2527 = vmax.f32 %v2435, 0.0
    %v2528 = vmax.f32 %v2437, 0.0
    %v2529 = vmax.f32 %v2517, 0.0
    %v2530 = vmax.f32 %v2519, 0.0
    %v2531 = vpack.c.bf16 %v2523, %v2523
    %v2532 = vpack.c.bf16 %v2524, %v2524
    %v2533 = vpack.c.bf16 %v2525, %v2525
    %v2534 = vpack.c.bf16 %v2526, %v2526
    %v2535 = vpack.c.bf16 %v2527, %v2527
    %v2536 = vpack.c.bf16 %v2528, %v2528
    %v2537 = vpack.c.bf16 %v2529, %v2529
    %v2538 = vpack.c.bf16 %v2530, %v2530
    %v2539 = vld [vmem:[%s7] sm:$0xff]
    %v2540 = vld [vmem:[%s7 + $0x8] sm:$0xff]
    %v2541 = vld [vmem:[%s7 + $0x10] sm:$0xff]
    %v2542 = vld [vmem:[%s7 + $0x18] sm:$0xf]
    %v2543 = vld [vmem:[%s7 + $0x1c] sm:$0xff]
    %v2544 = vld [vmem:[%s7 + $0x24] sm:$0xff]
    %v2545 = vld [vmem:[%s7 + $0x2c] sm:$0xff]
    %v2546 = vld [vmem:[%s7 + $0x34] sm:$0xf]
    %v2547 = vld [vmem:[%s7 + $0x38] sm:$0xff]
    %v2548 = vld [vmem:[%s7 + $0x40] sm:$0xff]
    %v2549 = vld [vmem:[%s7 + $0x48] sm:$0xff]
    %v2550 = vld [vmem:[%s7 + $0x50] sm:$0xf]
    %v2551 = vld [vmem:[%s7 + $0x54] sm:$0xff]
    %v2552 = vld [vmem:[%s7 + $0x5c] sm:$0xff]
    %v2553 = vld [vmem:[%s7 + $0x64] sm:$0xff]
    %v2554 = vld [vmem:[%s7 + $0x6c] sm:$0xf]
    %v2555 = vld [vmem:[%s7 + $0x70] sm:$0xff]
    %v2556 = vld [vmem:[%s7 + $0x78] sm:$0xff]
    %v2557 = vld [vmem:[%s7 + $0x80] sm:$0xff]
    %v2558 = vld [vmem:[%s7 + $0x88] sm:$0xf]
    %v2559 = vld [vmem:[%s7 + $0x8c] sm:$0xff]
    %v2560 = vld [vmem:[%s7 + $0x94] sm:$0xff]
    %v2561 = vld [vmem:[%s7 + $0x9c] sm:$0xff]
    %v2562 = vld [vmem:[%s7 + $0xa4] sm:$0xf]
    %v2563 = vld [vmem:[%s7 + $0xa8] sm:$0xff]
    %v2564 = vld [vmem:[%s7 + $0xb0] sm:$0xff]
    %v2565 = vld [vmem:[%s7 + $0xb8] sm:$0xff]
    %v2566 = vld [vmem:[%s7 + $0xc0] sm:$0xf]
    %v2567 = vld [vmem:[%s7 + $0xc4] sm:$0xff]
    %v2568 = vld [vmem:[%s7 + $0xcc] sm:$0xff]
    %v2569 = vld [vmem:[%s7 + $0xd4] sm:$0xff]
    %v2570 = vld [vmem:[%s7 + $0xdc] sm:$0xf]
    %v2571 = vld [vmem:[%s7 + $0xe0] sm:$0xff]
    %v2572 = vld [vmem:[%s7 + $0xe8] sm:$0xff]
    %v2573 = vld [vmem:[%s7 + $0xf0] sm:$0xff]
    %v2574 = vld [vmem:[%s7 + $0xf8] sm:$0xf]
    %v2575 = vld [vmem:[%s7 + $0xfc] sm:$0xff]
    %v2576 = vld [vmem:[%s7 + $0x104] sm:$0xff]
    %v2577 = vld [vmem:[%s7 + $0x10c] sm:$0xff]
    %v2578 = vld [vmem:[%s7 + $0x114] sm:$0xf]
    %v2579 = vld [vmem:[%s7 + $0x118] sm:$0xff]
    %v2580 = vld [vmem:[%s7 + $0x120] sm:$0xff]
    %v2581 = vld [vmem:[%s7 + $0x128] sm:$0xff]
    %v2582 = vld [vmem:[%s7 + $0x130] sm:$0xf]
    %v2583 = vld [vmem:[%s7 + $0x134] sm:$0xff]
    %v2584 = vld [vmem:[%s7 + $0x13c] sm:$0xff]
    %v2585 = vld [vmem:[%s7 + $0x144] sm:$0xff]
    %v2586 = vld [vmem:[%s7 + $0x14c] sm:$0xf]
    %v2587 = vld [vmem:[%s7 + $0x150] sm:$0xff]
    %v2588 = vld [vmem:[%s7 + $0x158] sm:$0xff]
    %v2589 = vld [vmem:[%s7 + $0x160] sm:$0xff]
    %v2590 = vld [vmem:[%s7 + $0x168] sm:$0xf]
    %v2591 = vld [vmem:[%s7 + $0x16c] sm:$0xff]
    %v2592 = vld [vmem:[%s7 + $0x174] sm:$0xff]
    %v2593 = vld [vmem:[%s7 + $0x17c] sm:$0xff]
    %v2594 = vld [vmem:[%s7 + $0x184] sm:$0xf]
    %v2595 = vld [vmem:[%s7 + $0x188] sm:$0xff]
    %v2596 = vld [vmem:[%s7 + $0x190] sm:$0xff]
    %v2597 = vld [vmem:[%s7 + $0x198] sm:$0xff]
    %v2598 = vld [vmem:[%s7 + $0x1a0] sm:$0xf]
    %v2599 = vld [vmem:[%s7 + $0x1a4] sm:$0xff]
    %v2600 = vld [vmem:[%s7 + $0x1ac] sm:$0xff]
    %v2601 = vld [vmem:[%s7 + $0x1b4] sm:$0xff]
    %v2602 = vld [vmem:[%s7 + $0x1bc] sm:$0xf]
    %v2603 = vld [vmem:[%s7 + $0x1c0] sm:$0xff]
    %v2604 = vld [vmem:[%s7 + $0x1c8] sm:$0xff]
    %v2605 = vld [vmem:[%s7 + $0x1d0] sm:$0xff]
    %v2606 = vld [vmem:[%s7 + $0x1d8] sm:$0xf]
    %v2607 = vld [vmem:[%s7 + $0x1dc] sm:$0xff]
    %v2608 = vld [vmem:[%s7 + $0x1e4] sm:$0xff]
    %v2609 = vld [vmem:[%s7 + $0x1ec] sm:$0xff]
    %v2610 = vld [vmem:[%s7 + $0x1f4] sm:$0xf]
    %v2611 = vld [vmem:[%s7 + $0x1f8] sm:$0xff]
    %v2612 = vld [vmem:[%s7 + $0x200] sm:$0xff]
    %v2613 = vld [vmem:[%s7 + $0x208] sm:$0xff]
    %v2614 = vld [vmem:[%s7 + $0x210] sm:$0xf]
    %v2615 = vld [vmem:[%s7 + $0x214] sm:$0xff]
    %v2616 = vld [vmem:[%s7 + $0x21c] sm:$0xff]
    %v2617 = vld [vmem:[%s7 + $0x224] sm:$0xff]
    %v2618 = vld [vmem:[%s7 + $0x22c] sm:$0xf]
    %v2619 = vld [vmem:[%s7 + $0x230] sm:$0xff]
    %v2620 = vld [vmem:[%s7 + $0x238] sm:$0xff]
    %v2621 = vld [vmem:[%s7 + $0x240] sm:$0xff]
    %v2622 = vld [vmem:[%s7 + $0x248] sm:$0xf]
    %v2623 = vld [vmem:[%s7 + $0x24c] sm:$0xff]
    %v2624 = vld [vmem:[%s7 + $0x254] sm:$0xff]
    %v2625 = vld [vmem:[%s7 + $0x25c] sm:$0xff]
    %v2626 = vld [vmem:[%s7 + $0x264] sm:$0xf]
    %v2627 = vld [vmem:[%s7 + $0x268] sm:$0xff]
    %v2628 = vld [vmem:[%s7 + $0x270] sm:$0xff]
    %v2629 = vld [vmem:[%s7 + $0x278] sm:$0xff]
    %v2630 = vld [vmem:[%s7 + $0x280] sm:$0xf]
    %v2631 = vld [vmem:[%s7 + $0x284] sm:$0xff]
    %v2632 = vld [vmem:[%s7 + $0x28c] sm:$0xff]
    %v2633 = vld [vmem:[%s7 + $0x294] sm:$0xff]
    %v2634 = vld [vmem:[%s7 + $0x29c] sm:$0xf]
    %v2635 = vld [vmem:[%s7 + $0x2a0] sm:$0xff]
    %v2636 = vld [vmem:[%s7 + $0x2a8] sm:$0xff]
    %v2637 = vld [vmem:[%s7 + $0x2b0] sm:$0xff]
    %v2638 = vld [vmem:[%s7 + $0x2b8] sm:$0xf]
    %v2639 = vld [vmem:[%s7 + $0x2bc] sm:$0xff]
    %v2640 = vld [vmem:[%s7 + $0x2c4] sm:$0xff]
    %v2641 = vld [vmem:[%s7 + $0x2cc] sm:$0xff]
    %v2642 = vld [vmem:[%s7 + $0x2d4] sm:$0xf]
    %v2643 = vld [vmem:[%s7 + $0x2d8] sm:$0xff]
    %v2644 = vld [vmem:[%s7 + $0x2e0] sm:$0xff]
    %v2645 = vld [vmem:[%s7 + $0x2e8] sm:$0xff]
    %v2646 = vld [vmem:[%s7 + $0x2f0] sm:$0xf]
    %v2647 = vld [vmem:[%s7 + $0x2f4] sm:$0xff]
    %v2648 = vld [vmem:[%s7 + $0x2fc] sm:$0xff]
    %v2649 = vld [vmem:[%s7 + $0x304] sm:$0xff]
    %v2650 = vld [vmem:[%s7 + $0x30c] sm:$0xf]
    %v2651 = vld [vmem:[%s7 + $0x310] sm:$0xff]
    %v2652 = vld [vmem:[%s7 + $0x318] sm:$0xff]
    %v2653 = vld [vmem:[%s7 + $0x320] sm:$0xff]
    %v2654 = vld [vmem:[%s7 + $0x328] sm:$0xf]
    %v2655 = vld [vmem:[%s7 + $0x32c] sm:$0xff]
    %v2656 = vld [vmem:[%s7 + $0x334] sm:$0xff]
    %v2657 = vld [vmem:[%s7 + $0x33c] sm:$0xff]
    %v2658 = vld [vmem:[%s7 + $0x344] sm:$0xf]
    %v2659 = vld [vmem:[%s7 + $0x348] sm:$0xff]
    %v2660 = vld [vmem:[%s7 + $0x350] sm:$0xff]
    %v2661 = vld [vmem:[%s7 + $0x358] sm:$0xff]
    %v2662 = vld [vmem:[%s7 + $0x360] sm:$0xf]
    %v2663 = vld [vmem:[%s7 + $0x364] sm:$0xff]
    %v2664 = vld [vmem:[%s7 + $0x36c] sm:$0xff]
    %v2665 = vld [vmem:[%s7 + $0x374] sm:$0xff]
    %v2666 = vld [vmem:[%s7 + $0x37c] sm:$0xf]
    %v2667 = vld [vmem:[%s7 + $0x380] sm:$0xff]
    %v2668 = vld [vmem:[%s7 + $0x388] sm:$0xff]
    %v2669 = vld [vmem:[%s7 + $0x390] sm:$0xff]
    %v2670 = vld [vmem:[%s7 + $0x398] sm:$0xf]
    %v2671 = vld [vmem:[%s7 + $0x39c] sm:$0xff]
    %v2672 = vld [vmem:[%s7 + $0x3a4] sm:$0xff]
    %v2673 = vld [vmem:[%s7 + $0x3ac] sm:$0xff]
    %v2674 = vld [vmem:[%s7 + $0x3b4] sm:$0xf]
    %v2675 = vld [vmem:[%s7 + $0x3b8] sm:$0xff]
    %v2676 = vld [vmem:[%s7 + $0x3c0] sm:$0xff]
    %v2677 = vld [vmem:[%s7 + $0x3c8] sm:$0xff]
    %v2678 = vld [vmem:[%s7 + $0x3d0] sm:$0xf]
    %v2679 = vld [vmem:[%s7 + $0x3d4] sm:$0xff]
    %v2680 = vld [vmem:[%s7 + $0x3dc] sm:$0xff]
    %v2681 = vld [vmem:[%s7 + $0x3e4] sm:$0xff]
    %v2682 = vld [vmem:[%s7 + $0x3ec] sm:$0xf]
    %v2683 = vld [vmem:[%s7 + $0x3f0] sm:$0xff]
    %v2684 = vld [vmem:[%s7 + $0x3f8] sm:$0xff]
    %v2685 = vld [vmem:[%s7 + $0x400] sm:$0xff]
    %v2686 = vld [vmem:[%s7 + $0x408] sm:$0xf]
    %v2687 = vld [vmem:[%s7 + $0x40c] sm:$0xff]
    %v2688 = vld [vmem:[%s7 + $0x414] sm:$0xff]
    %v2689 = vld [vmem:[%s7 + $0x41c] sm:$0xff]
    %v2690 = vld [vmem:[%s7 + $0x424] sm:$0xf]
    %v2691 = vld [vmem:[%s7 + $0x428] sm:$0xff]
    %v2692 = vld [vmem:[%s7 + $0x430] sm:$0xff]
    %v2693 = vld [vmem:[%s7 + $0x438] sm:$0xff]
    %v2694 = vld [vmem:[%s7 + $0x440] sm:$0xf]
    %v2695 = vld [vmem:[%s7 + $0x444] sm:$0xff]
    %v2696 = vld [vmem:[%s7 + $0x44c] sm:$0xff]
    %v2697 = vld [vmem:[%s7 + $0x454] sm:$0xff]
    %v2698 = vld [vmem:[%s7 + $0x45c] sm:$0xf]
    %v2699 = vld [vmem:[%s7 + $0x460] sm:$0xff]
    %v2700 = vld [vmem:[%s7 + $0x468] sm:$0xff]
    %v2701 = vld [vmem:[%s7 + $0x470] sm:$0xff]
    %v2702 = vld [vmem:[%s7 + $0x478] sm:$0xf]
    %v2703 = vld [vmem:[%s7 + $0x47c] sm:$0xff]
    %v2704 = vld [vmem:[%s7 + $0x484] sm:$0xff]
    %v2705 = vld [vmem:[%s7 + $0x48c] sm:$0xff]
    %v2706 = vld [vmem:[%s7 + $0x494] sm:$0xf]
    %v2707 = vld [vmem:[%s7 + $0x498] sm:$0xff]
    %v2708 = vld [vmem:[%s7 + $0x4a0] sm:$0xff]
    %v2709 = vld [vmem:[%s7 + $0x4a8] sm:$0xff]
    %v2710 = vld [vmem:[%s7 + $0x4b0] sm:$0xf]
    %v2711 = vld [vmem:[%s7 + $0x4b4] sm:$0xff]
    %v2712 = vld [vmem:[%s7 + $0x4bc] sm:$0xff]
    %v2713 = vld [vmem:[%s7 + $0x4c4] sm:$0xff]
    %v2714 = vld [vmem:[%s7 + $0x4cc] sm:$0xf]
    %v2715 = vld [vmem:[%s7 + $0x4d0] sm:$0xff]
    %v2716 = vld [vmem:[%s7 + $0x4d8] sm:$0xff]
    %v2717 = vld [vmem:[%s7 + $0x4e0] sm:$0xff]
    %v2718 = vld [vmem:[%s7 + $0x4e8] sm:$0xf]
    %v2719 = vld [vmem:[%s7 + $0x4ec] sm:$0xff]
    %v2720 = vld [vmem:[%s7 + $0x4f4] sm:$0xff]
    %v2721 = vld [vmem:[%s7 + $0x4fc] sm:$0xff]
    %v2722 = vld [vmem:[%s7 + $0x504] sm:$0xf]
    %v2723 = vld [vmem:[%s7 + $0x508] sm:$0xff]
    %v2724 = vld [vmem:[%s7 + $0x510] sm:$0xff]
    %v2725 = vld [vmem:[%s7 + $0x518] sm:$0xff]
    %v2726 = vld [vmem:[%s7 + $0x520] sm:$0xf]
    %v2727 = vld [vmem:[%s7 + $0x524] sm:$0xff]
    %v2728 = vld [vmem:[%s7 + $0x52c] sm:$0xff]
    %v2729 = vld [vmem:[%s7 + $0x534] sm:$0xff]
    %v2730 = vld [vmem:[%s7 + $0x53c] sm:$0xf]
    %v2731 = vld [vmem:[%s7 + $0x540] sm:$0xff]
    %v2732 = vld [vmem:[%s7 + $0x548] sm:$0xff]
    %v2733 = vld [vmem:[%s7 + $0x550] sm:$0xff]
    %v2734 = vld [vmem:[%s7 + $0x558] sm:$0xf]
    %v2735 = vld [vmem:[%s7 + $0x55c] sm:$0xff]
    %v2736 = vld [vmem:[%s7 + $0x564] sm:$0xff]
    %v2737 = vld [vmem:[%s7 + $0x56c] sm:$0xff]
    %v2738 = vld [vmem:[%s7 + $0x574] sm:$0xf]
    %v2739 = vld [vmem:[%s7 + $0x578] sm:$0xff]
    %v2740 = vld [vmem:[%s7 + $0x580] sm:$0xff]
    %v2741 = vld [vmem:[%s7 + $0x588] sm:$0xff]
    %v2742 = vld [vmem:[%s7 + $0x590] sm:$0xf]
    %v2743 = vld [vmem:[%s7 + $0x594] sm:$0xff]
    %v2744 = vld [vmem:[%s7 + $0x59c] sm:$0xff]
    %v2745 = vld [vmem:[%s7 + $0x5a4] sm:$0xff]
    %v2746 = vld [vmem:[%s7 + $0x5ac] sm:$0xf]
    %v2747 = vld [vmem:[%s7 + $0x5b0] sm:$0xff]
    %v2748 = vld [vmem:[%s7 + $0x5b8] sm:$0xff]
    %v2749 = vld [vmem:[%s7 + $0x5c0] sm:$0xff]
    %v2750 = vld [vmem:[%s7 + $0x5c8] sm:$0xf]
    %v2751 = vld [vmem:[%s7 + $0x5cc] sm:$0xff]
    %v2752 = vld [vmem:[%s7 + $0x5d4] sm:$0xff]
    %v2753 = vld [vmem:[%s7 + $0x5dc] sm:$0xff]
    %v2754 = vld [vmem:[%s7 + $0x5e4] sm:$0xf]
    %v2755 = vld [vmem:[%s7 + $0x5e8] sm:$0xff]
    %v2756 = vld [vmem:[%s7 + $0x5f0] sm:$0xff]
    %v2757 = vld [vmem:[%s7 + $0x5f8] sm:$0xff]
    %v2758 = vld [vmem:[%s7 + $0x600] sm:$0xf]
    %v2759 = vld [vmem:[%s7 + $0x604] sm:$0xff]
    %v2760 = vld [vmem:[%s7 + $0x60c] sm:$0xff]
    %v2761 = vld [vmem:[%s7 + $0x614] sm:$0xff]
    %v2762 = vld [vmem:[%s7 + $0x61c] sm:$0xf]
    %v2763 = vld [vmem:[%s7 + $0x620] sm:$0xff]
    %v2764 = vld [vmem:[%s7 + $0x628] sm:$0xff]
    %v2765 = vld [vmem:[%s7 + $0x630] sm:$0xff]
    %v2766 = vld [vmem:[%s7 + $0x638] sm:$0xf]
    %v2767 = vld [vmem:[%s7 + $0x63c] sm:$0xff]
    %v2768 = vld [vmem:[%s7 + $0x644] sm:$0xff]
    %v2769 = vld [vmem:[%s7 + $0x64c] sm:$0xff]
    %v2770 = vld [vmem:[%s7 + $0x654] sm:$0xf]
    %v2771 = vld [vmem:[%s7 + $0x658] sm:$0xff]
    %v2772 = vld [vmem:[%s7 + $0x660] sm:$0xff]
    %v2773 = vld [vmem:[%s7 + $0x668] sm:$0xff]
    %v2774 = vld [vmem:[%s7 + $0x670] sm:$0xf]
    %v2775 = vld [vmem:[%s7 + $0x674] sm:$0xff]
    %v2776 = vld [vmem:[%s7 + $0x67c] sm:$0xff]
    %v2777 = vld [vmem:[%s7 + $0x684] sm:$0xff]
    %v2778 = vld [vmem:[%s7 + $0x68c] sm:$0xf]
    %v2779 = vld [vmem:[%s7 + $0x690] sm:$0xff]
    %v2780 = vld [vmem:[%s7 + $0x698] sm:$0xff]
    %v2781 = vld [vmem:[%s7 + $0x6a0] sm:$0xff]
    %v2782 = vld [vmem:[%s7 + $0x6a8] sm:$0xf]
    %v2783 = vld [vmem:[%s7 + $0x6ac] sm:$0xff]
    %v2784 = vld [vmem:[%s7 + $0x6b4] sm:$0xff]
    %v2785 = vld [vmem:[%s7 + $0x6bc] sm:$0xff]
    %v2786 = vld [vmem:[%s7 + $0x6c4] sm:$0xf]
    %v2787 = vld [vmem:[%s7 + $0x6c8] sm:$0xff]
    %v2788 = vld [vmem:[%s7 + $0x6d0] sm:$0xff]
    %v2789 = vld [vmem:[%s7 + $0x6d8] sm:$0xff]
    %v2790 = vld [vmem:[%s7 + $0x6e0] sm:$0xf]
    %v2791 = vld [vmem:[%s7 + $0x6e4] sm:$0xff]
    %v2792 = vld [vmem:[%s7 + $0x6ec] sm:$0xff]
    %v2793 = vld [vmem:[%s7 + $0x6f4] sm:$0xff]
    %v2794 = vld [vmem:[%s7 + $0x6fc] sm:$0xf]
    %v2795 = vld [vmem:[%s7 + $0x700] sm:$0xff]
    %v2796 = vld [vmem:[%s7 + $0x708] sm:$0xff]
    %v2797 = vld [vmem:[%s7 + $0x710] sm:$0xff]
    %v2798 = vld [vmem:[%s7 + $0x718] sm:$0xf]
    %v2799 = vld [vmem:[%s7 + $0x71c] sm:$0xff]
    %v2800 = vld [vmem:[%s7 + $0x724] sm:$0xff]
    %v2801 = vld [vmem:[%s7 + $0x72c] sm:$0xff]
    %v2802 = vld [vmem:[%s7 + $0x734] sm:$0xf]
    %v2803 = vld [vmem:[%s7 + $0x738] sm:$0xff]
    %v2804 = vld [vmem:[%s7 + $0x740] sm:$0xff]
    %v2805 = vld [vmem:[%s7 + $0x748] sm:$0xff]
    %v2806 = vld [vmem:[%s7 + $0x750] sm:$0xf]
    %v2807 = vld [vmem:[%s7 + $0x754] sm:$0xff]
    %v2808 = vld [vmem:[%s7 + $0x75c] sm:$0xff]
    %v2809 = vld [vmem:[%s7 + $0x764] sm:$0xff]
    %v2810 = vld [vmem:[%s7 + $0x76c] sm:$0xf]
    %v2811 = vld [vmem:[%s7 + $0x770] sm:$0xff]
    %v2812 = vld [vmem:[%s7 + $0x778] sm:$0xff]
    %v2813 = vld [vmem:[%s7 + $0x780] sm:$0xff]
    %v2814 = vld [vmem:[%s7 + $0x788] sm:$0xf]
    %v2815 = vld [vmem:[%s7 + $0x78c] sm:$0xff]
    %v2816 = vld [vmem:[%s7 + $0x794] sm:$0xff]
    %v2817 = vld [vmem:[%s7 + $0x79c] sm:$0xff]
    %v2818 = vld [vmem:[%s7 + $0x7a4] sm:$0xf]
    %v2819 = vld [vmem:[%s7 + $0x7a8] sm:$0xff]
    %v2820 = vld [vmem:[%s7 + $0x7b0] sm:$0xff]
    %v2821 = vld [vmem:[%s7 + $0x7b8] sm:$0xff]
    %v2822 = vld [vmem:[%s7 + $0x7c0] sm:$0xf]
    %v2823 = vld [vmem:[%s7 + $0x7c4] sm:$0xff]
    %v2824 = vld [vmem:[%s7 + $0x7cc] sm:$0xff]
    %v2825 = vld [vmem:[%s7 + $0x7d4] sm:$0xff]
    %v2826 = vld [vmem:[%s7 + $0x7dc] sm:$0xf]
    %v2827 = vld [vmem:[%s7 + $0x7e0] sm:$0xff]
    %v2828 = vld [vmem:[%s7 + $0x7e8] sm:$0xff]
    %v2829 = vld [vmem:[%s7 + $0x7f0] sm:$0xff]
    %v2830 = vld [vmem:[%s7 + $0x7f8] sm:$0xf]
    %v2831 = vld [vmem:[%s7 + $0x7fc] sm:$0xff]
    %v2832 = vld [vmem:[%s7 + $0x804] sm:$0xff]
    %v2833 = vld [vmem:[%s7 + $0x80c] sm:$0xff]
    %v2834 = vld [vmem:[%s7 + $0x814] sm:$0xf]
    %v2835 = vld [vmem:[%s7 + $0x818] sm:$0xff]
    %v2836 = vld [vmem:[%s7 + $0x820] sm:$0xff]
    %v2837 = vld [vmem:[%s7 + $0x828] sm:$0xff]
    %v2838 = vld [vmem:[%s7 + $0x830] sm:$0xf]
    %v2839 = vld [vmem:[%s7 + $0x834] sm:$0xff]
    %v2840 = vld [vmem:[%s7 + $0x83c] sm:$0xff]
    %v2841 = vld [vmem:[%s7 + $0x844] sm:$0xff]
    %v2842 = vld [vmem:[%s7 + $0x84c] sm:$0xf]
    %v2843 = vld [vmem:[%s7 + $0x850] sm:$0xff]
    %v2844 = vld [vmem:[%s7 + $0x858] sm:$0xff]
    %v2845 = vld [vmem:[%s7 + $0x860] sm:$0xff]
    %v2846 = vld [vmem:[%s7 + $0x868] sm:$0xf]
    %v2847 = vld [vmem:[%s7 + $0x86c] sm:$0xff]
    %v2848 = vld [vmem:[%s7 + $0x874] sm:$0xff]
    %v2849 = vld [vmem:[%s7 + $0x87c] sm:$0xff]
    %v2850 = vld [vmem:[%s7 + $0x884] sm:$0xf]
    %v2851 = vld [vmem:[%s7 + $0x888] sm:$0xff]
    %v2852 = vld [vmem:[%s7 + $0x890] sm:$0xff]
    %v2853 = vld [vmem:[%s7 + $0x898] sm:$0xff]
    %v2854 = vld [vmem:[%s7 + $0x8a0] sm:$0xf]
    %v2855 = vld [vmem:[%s7 + $0x8a4] sm:$0xff]
    %v2856 = vld [vmem:[%s7 + $0x8ac] sm:$0xff]
    %v2857 = vld [vmem:[%s7 + $0x8b4] sm:$0xff]
    %v2858 = vld [vmem:[%s7 + $0x8bc] sm:$0xf]
    %v2859 = vld [vmem:[%s7 + $0x8c0] sm:$0xff]
    %v2860 = vld [vmem:[%s7 + $0x8c8] sm:$0xff]
    %v2861 = vld [vmem:[%s7 + $0x8d0] sm:$0xff]
    %v2862 = vld [vmem:[%s7 + $0x8d8] sm:$0xf]
    %v2863 = vld [vmem:[%s7 + $0x8dc] sm:$0xff]
    %v2864 = vld [vmem:[%s7 + $0x8e4] sm:$0xff]
    %v2865 = vld [vmem:[%s7 + $0x8ec] sm:$0xff]
    %v2866 = vld [vmem:[%s7 + $0x8f4] sm:$0xf]
    %v2867 = vld [vmem:[%s7 + $0x8f8] sm:$0xff]
    %v2868 = vld [vmem:[%s7 + $0x900] sm:$0xff]
    %v2869 = vld [vmem:[%s7 + $0x908] sm:$0xff]
    %v2870 = vld [vmem:[%s7 + $0x910] sm:$0xf]
    %v2871 = vld [vmem:[%s7 + $0x914] sm:$0xff]
    %v2872 = vld [vmem:[%s7 + $0x91c] sm:$0xff]
    %v2873 = vld [vmem:[%s7 + $0x924] sm:$0xff]
    %v2874 = vld [vmem:[%s7 + $0x92c] sm:$0xf]
    %v2875 = vld [vmem:[%s7 + $0x930] sm:$0xff]
    %v2876 = vld [vmem:[%s7 + $0x938] sm:$0xff]
    %v2877 = vld [vmem:[%s7 + $0x940] sm:$0xff]
    %v2878 = vld [vmem:[%s7 + $0x948] sm:$0xf]
    %v2879 = vld [vmem:[%s7 + $0x94c] sm:$0xff]
    %v2880 = vld [vmem:[%s7 + $0x954] sm:$0xff]
    %v2881 = vld [vmem:[%s7 + $0x95c] sm:$0xff]
    %v2882 = vld [vmem:[%s7 + $0x964] sm:$0xf]
    %v2883 = vld [vmem:[%s7 + $0x968] sm:$0xff]
    %v2884 = vld [vmem:[%s7 + $0x970] sm:$0xff]
    %v2885 = vld [vmem:[%s7 + $0x978] sm:$0xff]
    %v2886 = vld [vmem:[%s7 + $0x980] sm:$0xf]
    %v2887 = vld [vmem:[%s7 + $0x984] sm:$0xff]
    %v2888 = vld [vmem:[%s7 + $0x98c] sm:$0xff]
    %v2889 = vld [vmem:[%s7 + $0x994] sm:$0xff]
    %v2890 = vld [vmem:[%s7 + $0x99c] sm:$0xf]
    %v2891 = vld [vmem:[%s7 + $0x9a0] sm:$0xff]
    %v2892 = vld [vmem:[%s7 + $0x9a8] sm:$0xff]
    %v2893 = vld [vmem:[%s7 + $0x9b0] sm:$0xff]
    %v2894 = vld [vmem:[%s7 + $0x9b8] sm:$0xf]
    %v2895 = vld [vmem:[%s7 + $0x9bc] sm:$0xff]
    %v2896 = vld [vmem:[%s7 + $0x9c4] sm:$0xff]
    %v2897 = vld [vmem:[%s7 + $0x9cc] sm:$0xff]
    %v2898 = vld [vmem:[%s7 + $0x9d4] sm:$0xf]
    %v2899 = vld [vmem:[%s7 + $0x9d8] sm:$0xff]
    %v2900 = vld [vmem:[%s7 + $0x9e0] sm:$0xff]
    %v2901 = vld [vmem:[%s7 + $0x9e8] sm:$0xff]
    %v2902 = vld [vmem:[%s7 + $0x9f0] sm:$0xf]
    %v2903 = vld [vmem:[%s7 + $0x9f4] sm:$0xff]
    %v2904 = vld [vmem:[%s7 + $0x9fc] sm:$0xff]
    %v2905 = vld [vmem:[%s7 + $0xa04] sm:$0xff]
    %v2906 = vld [vmem:[%s7 + $0xa0c] sm:$0xf]
    %v2907 = vld [vmem:[%s7 + $0xa10] sm:$0xff]
    %v2908 = vld [vmem:[%s7 + $0xa18] sm:$0xff]
    %v2909 = vld [vmem:[%s7 + $0xa20] sm:$0xff]
    %v2910 = vld [vmem:[%s7 + $0xa28] sm:$0xf]
    %v2911 = vld [vmem:[%s7 + $0xa2c] sm:$0xff]
    %v2912 = vld [vmem:[%s7 + $0xa34] sm:$0xff]
    %v2913 = vld [vmem:[%s7 + $0xa3c] sm:$0xff]
    %v2914 = vld [vmem:[%s7 + $0xa44] sm:$0xf]
    %v2915 = vld [vmem:[%s7 + $0xa48] sm:$0xff]
    %v2916 = vld [vmem:[%s7 + $0xa50] sm:$0xff]
    %v2917 = vld [vmem:[%s7 + $0xa58] sm:$0xff]
    %v2918 = vld [vmem:[%s7 + $0xa60] sm:$0xf]
    %v2919 = vld [vmem:[%s7 + $0xa64] sm:$0xff]
    %v2920 = vld [vmem:[%s7 + $0xa6c] sm:$0xff]
    %v2921 = vld [vmem:[%s7 + $0xa74] sm:$0xff]
    %v2922 = vld [vmem:[%s7 + $0xa7c] sm:$0xf]
    %v2923 = vld [vmem:[%s7 + $0xa80] sm:$0xff]
    %v2924 = vld [vmem:[%s7 + $0xa88] sm:$0xff]
    %v2925 = vld [vmem:[%s7 + $0xa90] sm:$0xff]
    %v2926 = vld [vmem:[%s7 + $0xa98] sm:$0xf]
    %v2927 = vld [vmem:[%s7 + $0xa9c] sm:$0xff]
    %v2928 = vld [vmem:[%s7 + $0xaa4] sm:$0xff]
    %v2929 = vld [vmem:[%s7 + $0xaac] sm:$0xff]
    %v2930 = vld [vmem:[%s7 + $0xab4] sm:$0xf]
    %v2931 = vld [vmem:[%s7 + $0xab8] sm:$0xff]
    %v2932 = vld [vmem:[%s7 + $0xac0] sm:$0xff]
    %v2933 = vld [vmem:[%s7 + $0xac8] sm:$0xff]
    %v2934 = vld [vmem:[%s7 + $0xad0] sm:$0xf]
    %v2935 = vld [vmem:[%s7 + $0xad4] sm:$0xff]
    %v2936 = vld [vmem:[%s7 + $0xadc] sm:$0xff]
    %v2937 = vld [vmem:[%s7 + $0xae4] sm:$0xff]
    %v2938 = vld [vmem:[%s7 + $0xaec] sm:$0xf]
    %v2939 = vld [vmem:[%s7 + $0xaf0] sm:$0xff]
    %v2940 = vld [vmem:[%s7 + $0xaf8] sm:$0xff]
    %v2941 = vld [vmem:[%s7 + $0xb00] sm:$0xff]
    %v2942 = vld [vmem:[%s7 + $0xb08] sm:$0xf]
    %v2943 = vld [vmem:[%s7 + $0xb0c] sm:$0xff]
    %v2944 = vld [vmem:[%s7 + $0xb14] sm:$0xff]
    %v2945 = vld [vmem:[%s7 + $0xb1c] sm:$0xff]
    %v2946 = vld [vmem:[%s7 + $0xb24] sm:$0xf]
    %v2947 = vld [vmem:[%s7 + $0xb28] sm:$0xff]
    %v2948 = vld [vmem:[%s7 + $0xb30] sm:$0xff]
    %v2949 = vld [vmem:[%s7 + $0xb38] sm:$0xff]
    %v2950 = vld [vmem:[%s7 + $0xb40] sm:$0xf]
    %v2951 = vld [vmem:[%s7 + $0xb44] sm:$0xff]
    %v2952 = vld [vmem:[%s7 + $0xb4c] sm:$0xff]
    %v2953 = vld [vmem:[%s7 + $0xb54] sm:$0xff]
    %v2954 = vld [vmem:[%s7 + $0xb5c] sm:$0xf]
    %v2955 = vld [vmem:[%s7 + $0xb60] sm:$0xff]
    %v2956 = vld [vmem:[%s7 + $0xb68] sm:$0xff]
    %v2957 = vld [vmem:[%s7 + $0xb70] sm:$0xff]
    %v2958 = vld [vmem:[%s7 + $0xb78] sm:$0xf]
    %v2959 = vld [vmem:[%s7 + $0xb7c] sm:$0xff]
    %v2960 = vld [vmem:[%s7 + $0xb84] sm:$0xff]
    %v2961 = vld [vmem:[%s7 + $0xb8c] sm:$0xff]
    %v2962 = vld [vmem:[%s7 + $0xb94] sm:$0xf]
    %v2963 = vld [vmem:[%s7 + $0xb98] sm:$0xff]
    %v2964 = vld [vmem:[%s7 + $0xba0] sm:$0xff]
    %v2965 = vld [vmem:[%s7 + $0xba8] sm:$0xff]
    %v2966 = vld [vmem:[%s7 + $0xbb0] sm:$0xf]
    %v2967 = vld [vmem:[%s7 + $0xbb4] sm:$0xff]
    %v2968 = vld [vmem:[%s7 + $0xbbc] sm:$0xff]
    %v2969 = vld [vmem:[%s7 + $0xbc4] sm:$0xff]
    %v2970 = vld [vmem:[%s7 + $0xbcc] sm:$0xf]
    %v2971 = vld [vmem:[%s7 + $0xbd0] sm:$0xff]
    %v2972 = vld [vmem:[%s7 + $0xbd8] sm:$0xff]
    %v2973 = vld [vmem:[%s7 + $0xbe0] sm:$0xff]
    %v2974 = vld [vmem:[%s7 + $0xbe8] sm:$0xf]
    %v2975 = vld [vmem:[%s7 + $0xbec] sm:$0xff]
    %v2976 = vld [vmem:[%s7 + $0xbf4] sm:$0xff]
    %v2977 = vld [vmem:[%s7 + $0xbfc] sm:$0xff]
    %v2978 = vld [vmem:[%s7 + $0xc04] sm:$0xf]
    %v2979 = vld [vmem:[%s7 + $0xc08] sm:$0xff]
    %v2980 = vld [vmem:[%s7 + $0xc10] sm:$0xff]
    %v2981 = vld [vmem:[%s7 + $0xc18] sm:$0xff]
    %v2982 = vld [vmem:[%s7 + $0xc20] sm:$0xf]
    %v2983 = vld [vmem:[%s7 + $0xc24] sm:$0xff]
    %v2984 = vld [vmem:[%s7 + $0xc2c] sm:$0xff]
    %v2985 = vld [vmem:[%s7 + $0xc34] sm:$0xff]
    %v2986 = vld [vmem:[%s7 + $0xc3c] sm:$0xf]
    %v2987 = vld [vmem:[%s7 + $0xc40] sm:$0xff]
    %v2988 = vld [vmem:[%s7 + $0xc48] sm:$0xff]
    %v2989 = vld [vmem:[%s7 + $0xc50] sm:$0xff]
    %v2990 = vld [vmem:[%s7 + $0xc58] sm:$0xf]
    %v2991 = vld [vmem:[%s7 + $0xc5c] sm:$0xff]
    %v2992 = vld [vmem:[%s7 + $0xc64] sm:$0xff]
    %v2993 = vld [vmem:[%s7 + $0xc6c] sm:$0xff]
    %v2994 = vld [vmem:[%s7 + $0xc74] sm:$0xf]
    %v2995 = vld [vmem:[%s7 + $0xc78] sm:$0xff]
    %v2996 = vld [vmem:[%s7 + $0xc80] sm:$0xff]
    %v2997 = vld [vmem:[%s7 + $0xc88] sm:$0xff]
    %v2998 = vld [vmem:[%s7 + $0xc90] sm:$0xf]
    %v2999 = vld [vmem:[%s7 + $0xc94] sm:$0xff]
    %v3000 = vld [vmem:[%s7 + $0xc9c] sm:$0xff]
    %v3001 = vld [vmem:[%s7 + $0xca4] sm:$0xff]
    %v3002 = vld [vmem:[%s7 + $0xcac] sm:$0xf]
    %v3003 = vld [vmem:[%s7 + $0xcb0] sm:$0xff]
    %v3004 = vld [vmem:[%s7 + $0xcb8] sm:$0xff]
    %v3005 = vld [vmem:[%s7 + $0xcc0] sm:$0xff]
    %v3006 = vld [vmem:[%s7 + $0xcc8] sm:$0xf]
    %v3007 = vld [vmem:[%s7 + $0xccc] sm:$0xff]
    %v3008 = vld [vmem:[%s7 + $0xcd4] sm:$0xff]
    %v3009 = vld [vmem:[%s7 + $0xcdc] sm:$0xff]
    %v3010 = vld [vmem:[%s7 + $0xce4] sm:$0xf]
    %v3011 = vld [vmem:[%s7 + $0xce8] sm:$0xff]
    %v3012 = vld [vmem:[%s7 + $0xcf0] sm:$0xff]
    %v3013 = vld [vmem:[%s7 + $0xcf8] sm:$0xff]
    %v3014 = vld [vmem:[%s7 + $0xd00] sm:$0xf]
    %v3015 = vld [vmem:[%s7 + $0xd04] sm:$0xff]
    %v3016 = vld [vmem:[%s7 + $0xd0c] sm:$0xff]
    %v3017 = vld [vmem:[%s7 + $0xd14] sm:$0xff]
    %v3018 = vld [vmem:[%s7 + $0xd1c] sm:$0xf]
    %v3019 = vld [vmem:[%s7 + $0xd20] sm:$0xff]
    %v3020 = vld [vmem:[%s7 + $0xd28] sm:$0xff]
    %v3021 = vld [vmem:[%s7 + $0xd30] sm:$0xff]
    %v3022 = vld [vmem:[%s7 + $0xd38] sm:$0xf]
    %v3023 = vld [vmem:[%s7 + $0xd3c] sm:$0xff]
    %v3024 = vld [vmem:[%s7 + $0xd44] sm:$0xff]
    %v3025 = vld [vmem:[%s7 + $0xd4c] sm:$0xff]
    %v3026 = vld [vmem:[%s7 + $0xd54] sm:$0xf]
    %v3027 = vld [vmem:[%s7 + $0xd58] sm:$0xff]
    %v3028 = vld [vmem:[%s7 + $0xd60] sm:$0xff]
    %v3029 = vld [vmem:[%s7 + $0xd68] sm:$0xff]
    %v3030 = vld [vmem:[%s7 + $0xd70] sm:$0xf]
    %v3031 = vld [vmem:[%s7 + $0xd74] sm:$0xff]
    %v3032 = vld [vmem:[%s7 + $0xd7c] sm:$0xff]
    %v3033 = vld [vmem:[%s7 + $0xd84] sm:$0xff]
    %v3034 = vld [vmem:[%s7 + $0xd8c] sm:$0xf]
    %v3035 = vld [vmem:[%s7 + $0xd90] sm:$0xff]
    %v3036 = vld [vmem:[%s7 + $0xd98] sm:$0xff]
    %v3037 = vld [vmem:[%s7 + $0xda0] sm:$0xff]
    %v3038 = vld [vmem:[%s7 + $0xda8] sm:$0xf]
    %v3039 = vld [vmem:[%s7 + $0xdac] sm:$0xff]
    %v3040 = vld [vmem:[%s7 + $0xdb4] sm:$0xff]
    %v3041 = vld [vmem:[%s7 + $0xdbc] sm:$0xff]
    %v3042 = vld [vmem:[%s7 + $0xdc4] sm:$0xf]
    %v3043 = vld [vmem:[%s7 + $0xdc8] sm:$0xff]
    %v3044 = vld [vmem:[%s7 + $0xdd0] sm:$0xff]
    %v3045 = vld [vmem:[%s7 + $0xdd8] sm:$0xff]
    %v3046 = vld [vmem:[%s7 + $0xde0] sm:$0xf]
    %v3047 = vld [vmem:[%s7 + $0xde4] sm:$0xff]
    %v3048 = vld [vmem:[%s7 + $0xdec] sm:$0xff]
    %v3049 = vld [vmem:[%s7 + $0xdf4] sm:$0xff]
    %v3050 = vld [vmem:[%s7 + $0xdfc] sm:$0xf]
    %v3051 = vld [vmem:[%s8] sm:$0x7f]
    %v3053 = vlaneseq
    %v3054 = vshrl.u32 %v3053, 7
    %v3055 = vsub.s32 0, %v3054
    %v3056 = vrot.slane %v3051, %v3055
    %v3057 = vlaneseq
    %v3058 = vshrl.u32 %v3057, 7
    %v3059 = vsub.s32 1, %v3058
    %v3060 = vrot.slane %v3051, %v3059
    %v3061 = vlaneseq
    %v3062 = vshrl.u32 %v3061, 7
    %v3063 = vsub.s32 2, %v3062
    %v3064 = vrot.slane %v3051, %v3063
    %v3065 = vlaneseq
    %v3066 = vshrl.u32 %v3065, 7
    %v3067 = vsub.s32 3, %v3066
    %v3068 = vrot.slane %v3051, %v3067
    %v3069 = vlaneseq
    %v3070 = vshrl.u32 %v3069, 7
    %v3071 = vsub.s32 4, %v3070
    %v3072 = vrot.slane %v3051, %v3071
    %v3073 = vlaneseq
    %v3074 = vshrl.u32 %v3073, 7
    %v3075 = vsub.s32 5, %v3074
    %v3076 = vrot.slane %v3051, %v3075
    %v3077 = vlaneseq
    %v3078 = vshrl.u32 %v3077, 7
    %v3079 = vsub.s32 6, %v3078
    %v3080 = vrot.slane %v3051, %v3079
    %v3600 = vunpack.c.l.b16 %v2539
    %v3601 = vunpack.c.h.b16 %v2539
    %v3602 = vunpack.c.l.b16 %v2540
    %v3603 = vunpack.c.h.b16 %v2540
    %v3604 = vunpack.c.l.b16 %v2541
    %v3605 = vunpack.c.h.b16 %v2541
    %v3606 = vunpack.c.l.b16 %v2542
    %v3607 = vunpack.c.l.b16 %v2543
    %v3608 = vunpack.c.h.b16 %v2543
    %v3609 = vunpack.c.l.b16 %v2544
    %v3610 = vunpack.c.h.b16 %v2544
    %v3611 = vunpack.c.l.b16 %v2545
    %v3612 = vunpack.c.h.b16 %v2545
    %v3613 = vunpack.c.l.b16 %v2546
    %v3614 = vunpack.c.l.b16 %v2547
    %v3615 = vunpack.c.h.b16 %v2547
    %v3616 = vunpack.c.l.b16 %v2548
    %v3617 = vunpack.c.h.b16 %v2548
    %v3618 = vunpack.c.l.b16 %v2549
    %v3619 = vunpack.c.h.b16 %v2549
    %v3620 = vunpack.c.l.b16 %v2550
    %v3621 = vunpack.c.l.b16 %v2551
    %v3622 = vunpack.c.h.b16 %v2551
    %v3623 = vunpack.c.l.b16 %v2552
    %v3624 = vunpack.c.h.b16 %v2552
    %v3625 = vunpack.c.l.b16 %v2553
    %v3626 = vunpack.c.h.b16 %v2553
    %v3627 = vunpack.c.l.b16 %v2554
    %v3628 = vunpack.c.l.b16 %v2555
    %v3629 = vunpack.c.h.b16 %v2555
    %v3630 = vunpack.c.l.b16 %v2556
    %v3631 = vunpack.c.h.b16 %v2556
    %v3632 = vunpack.c.l.b16 %v2557
    %v3633 = vunpack.c.h.b16 %v2557
    %v3634 = vunpack.c.l.b16 %v2558
    %v3635 = vunpack.c.l.b16 %v2559
    %v3636 = vunpack.c.h.b16 %v2559
    %v3637 = vunpack.c.l.b16 %v2560
    %v3638 = vunpack.c.h.b16 %v2560
    %v3639 = vunpack.c.l.b16 %v2561
    %v3640 = vunpack.c.h.b16 %v2561
    %v3641 = vunpack.c.l.b16 %v2562
    %v3642 = vunpack.c.l.b16 %v2563
    %v3643 = vunpack.c.h.b16 %v2563
    %v3644 = vunpack.c.l.b16 %v2564
    %v3645 = vunpack.c.h.b16 %v2564
    %v3646 = vunpack.c.l.b16 %v2565
    %v3647 = vunpack.c.h.b16 %v2565
    %v3648 = vunpack.c.l.b16 %v2566
    %v3649 = vunpack.c.l.b16 %v2567
    %v3650 = vunpack.c.h.b16 %v2567
    %v3651 = vunpack.c.l.b16 %v2568
    %v3652 = vunpack.c.h.b16 %v2568
    %v3653 = vunpack.c.l.b16 %v2569
    %v3654 = vunpack.c.h.b16 %v2569
    %v3655 = vunpack.c.l.b16 %v2570
    %v3656 = vunpack.c.l.b16 %v2571
    %v3657 = vunpack.c.h.b16 %v2571
    %v3658 = vunpack.c.l.b16 %v2572
    %v3659 = vunpack.c.h.b16 %v2572
    %v3660 = vunpack.c.l.b16 %v2573
    %v3661 = vunpack.c.h.b16 %v2573
    %v3662 = vunpack.c.l.b16 %v2574
    %v3663 = vunpack.c.l.b16 %v2575
    %v3664 = vunpack.c.h.b16 %v2575
    %v3665 = vunpack.c.l.b16 %v2576
    %v3666 = vunpack.c.h.b16 %v2576
    %v3667 = vunpack.c.l.b16 %v2577
    %v3668 = vunpack.c.h.b16 %v2577
    %v3669 = vunpack.c.l.b16 %v2578
    %v3670 = vunpack.c.l.b16 %v2579
    %v3671 = vunpack.c.h.b16 %v2579
    %v3672 = vunpack.c.l.b16 %v2580
    %v3673 = vunpack.c.h.b16 %v2580
    %v3674 = vunpack.c.l.b16 %v2581
    %v3675 = vunpack.c.h.b16 %v2581
    %v3676 = vunpack.c.l.b16 %v2582
    %v3677 = vunpack.c.l.b16 %v2583
    %v3678 = vunpack.c.h.b16 %v2583
    %v3679 = vunpack.c.l.b16 %v2584
    %v3680 = vunpack.c.h.b16 %v2584
    %v3681 = vunpack.c.l.b16 %v2585
    %v3682 = vunpack.c.h.b16 %v2585
    %v3683 = vunpack.c.l.b16 %v2586
    %v3684 = vunpack.c.l.b16 %v2587
    %v3685 = vunpack.c.h.b16 %v2587
    %v3686 = vunpack.c.l.b16 %v2588
    %v3687 = vunpack.c.h.b16 %v2588
    %v3688 = vunpack.c.l.b16 %v2589
    %v3689 = vunpack.c.h.b16 %v2589
    %v3690 = vunpack.c.l.b16 %v2590
    %v3691 = vunpack.c.l.b16 %v2591
    %v3692 = vunpack.c.h.b16 %v2591
    %v3693 = vunpack.c.l.b16 %v2592
    %v3694 = vunpack.c.h.b16 %v2592
    %v3695 = vunpack.c.l.b16 %v2593
    %v3696 = vunpack.c.h.b16 %v2593
    %v3697 = vunpack.c.l.b16 %v2594
    %v3698 = vunpack.c.l.b16 %v2595
    %v3699 = vunpack.c.h.b16 %v2595
    %v3700 = vunpack.c.l.b16 %v2596
    %v3701 = vunpack.c.h.b16 %v2596
    %v3702 = vunpack.c.l.b16 %v2597
    %v3703 = vunpack.c.h.b16 %v2597
    %v3704 = vunpack.c.l.b16 %v2598
    %v3705 = vunpack.c.l.b16 %v2599
    %v3706 = vunpack.c.h.b16 %v2599
    %v3707 = vunpack.c.l.b16 %v2600
    %v3708 = vunpack.c.h.b16 %v2600
    %v3709 = vunpack.c.l.b16 %v2601
    %v3710 = vunpack.c.h.b16 %v2601
    %v3711 = vunpack.c.l.b16 %v2602
    %v3712 = vunpack.c.l.b16 %v2603
    %v3713 = vunpack.c.h.b16 %v2603
    %v3714 = vunpack.c.l.b16 %v2604
    %v3715 = vunpack.c.h.b16 %v2604
    %v3716 = vunpack.c.l.b16 %v2605
    %v3717 = vunpack.c.h.b16 %v2605
    %v3718 = vunpack.c.l.b16 %v2606
    %v3719 = vunpack.c.l.b16 %v2607
    %v3720 = vunpack.c.h.b16 %v2607
    %v3721 = vunpack.c.l.b16 %v2608
    %v3722 = vunpack.c.h.b16 %v2608
    %v3723 = vunpack.c.l.b16 %v2609
    %v3724 = vunpack.c.h.b16 %v2609
    %v3725 = vunpack.c.l.b16 %v2610
    %v3726 = vunpack.c.l.b16 %v2611
    %v3727 = vunpack.c.h.b16 %v2611
    %v3728 = vunpack.c.l.b16 %v2612
    %v3729 = vunpack.c.h.b16 %v2612
    %v3730 = vunpack.c.l.b16 %v2613
    %v3731 = vunpack.c.h.b16 %v2613
    %v3732 = vunpack.c.l.b16 %v2614
    %v3733 = vunpack.c.l.b16 %v2615
    %v3734 = vunpack.c.h.b16 %v2615
    %v3735 = vunpack.c.l.b16 %v2616
    %v3736 = vunpack.c.h.b16 %v2616
    %v3737 = vunpack.c.l.b16 %v2617
    %v3738 = vunpack.c.h.b16 %v2617
    %v3739 = vunpack.c.l.b16 %v2618
    %v3740 = vunpack.c.l.b16 %v2619
    %v3741 = vunpack.c.h.b16 %v2619
    %v3742 = vunpack.c.l.b16 %v2620
    %v3743 = vunpack.c.h.b16 %v2620
    %v3744 = vunpack.c.l.b16 %v2621
    %v3745 = vunpack.c.h.b16 %v2621
    %v3746 = vunpack.c.l.b16 %v2622
    %v3747 = vunpack.c.l.b16 %v2623
    %v3748 = vunpack.c.h.b16 %v2623
    %v3749 = vunpack.c.l.b16 %v2624
    %v3750 = vunpack.c.h.b16 %v2624
    %v3751 = vunpack.c.l.b16 %v2625
    %v3752 = vunpack.c.h.b16 %v2625
    %v3753 = vunpack.c.l.b16 %v2626
    %v3754 = vunpack.c.l.b16 %v2627
    %v3755 = vunpack.c.h.b16 %v2627
    %v3756 = vunpack.c.l.b16 %v2628
    %v3757 = vunpack.c.h.b16 %v2628
    %v3758 = vunpack.c.l.b16 %v2629
    %v3759 = vunpack.c.h.b16 %v2629
    %v3760 = vunpack.c.l.b16 %v2630
    %v3761 = vunpack.c.l.b16 %v2631
    %v3762 = vunpack.c.h.b16 %v2631
    %v3763 = vunpack.c.l.b16 %v2632
    %v3764 = vunpack.c.h.b16 %v2632
    %v3765 = vunpack.c.l.b16 %v2633
    %v3766 = vunpack.c.h.b16 %v2633
    %v3767 = vunpack.c.l.b16 %v2634
    %v3768 = vunpack.c.l.b16 %v2635
    %v3769 = vunpack.c.h.b16 %v2635
    %v3770 = vunpack.c.l.b16 %v2636
    %v3771 = vunpack.c.h.b16 %v2636
    %v3772 = vunpack.c.l.b16 %v2637
    %v3773 = vunpack.c.h.b16 %v2637
    %v3774 = vunpack.c.l.b16 %v2638
    %v3775 = vunpack.c.l.b16 %v2639
    %v3776 = vunpack.c.h.b16 %v2639
    %v3777 = vunpack.c.l.b16 %v2640
    %v3778 = vunpack.c.h.b16 %v2640
    %v3779 = vunpack.c.l.b16 %v2641
    %v3780 = vunpack.c.h.b16 %v2641
    %v3781 = vunpack.c.l.b16 %v2642
    %v3782 = vunpack.c.l.b16 %v2643
    %v3783 = vunpack.c.h.b16 %v2643
    %v3784 = vunpack.c.l.b16 %v2644
    %v3785 = vunpack.c.h.b16 %v2644
    %v3786 = vunpack.c.l.b16 %v2645
    %v3787 = vunpack.c.h.b16 %v2645
    %v3788 = vunpack.c.l.b16 %v2646
    %v3789 = vunpack.c.l.b16 %v2647
    %v3790 = vunpack.c.h.b16 %v2647
    %v3791 = vunpack.c.l.b16 %v2648
    %v3792 = vunpack.c.h.b16 %v2648
    %v3793 = vunpack.c.l.b16 %v2649
    %v3794 = vunpack.c.h.b16 %v2649
    %v3795 = vunpack.c.l.b16 %v2650
    %v3796 = vunpack.c.l.b16 %v2651
    %v3797 = vunpack.c.h.b16 %v2651
    %v3798 = vunpack.c.l.b16 %v2652
    %v3799 = vunpack.c.h.b16 %v2652
    %v3800 = vunpack.c.l.b16 %v2653
    %v3801 = vunpack.c.h.b16 %v2653
    %v3802 = vunpack.c.l.b16 %v2654
    %v3803 = vunpack.c.l.b16 %v2655
    %v3804 = vunpack.c.h.b16 %v2655
    %v3805 = vunpack.c.l.b16 %v2656
    %v3806 = vunpack.c.h.b16 %v2656
    %v3807 = vunpack.c.l.b16 %v2657
    %v3808 = vunpack.c.h.b16 %v2657
    %v3809 = vunpack.c.l.b16 %v2658
    %v3810 = vunpack.c.l.b16 %v2659
    %v3811 = vunpack.c.h.b16 %v2659
    %v3812 = vunpack.c.l.b16 %v2660
    %v3813 = vunpack.c.h.b16 %v2660
    %v3814 = vunpack.c.l.b16 %v2661
    %v3815 = vunpack.c.h.b16 %v2661
    %v3816 = vunpack.c.l.b16 %v2662
    %v3817 = vunpack.c.l.b16 %v2663
    %v3818 = vunpack.c.h.b16 %v2663
    %v3819 = vunpack.c.l.b16 %v2664
    %v3820 = vunpack.c.h.b16 %v2664
    %v3821 = vunpack.c.l.b16 %v2665
    %v3822 = vunpack.c.h.b16 %v2665
    %v3823 = vunpack.c.l.b16 %v2666
    %v3824 = vunpack.c.l.b16 %v2667
    %v3825 = vunpack.c.h.b16 %v2667
    %v3826 = vunpack.c.l.b16 %v2668
    %v3827 = vunpack.c.h.b16 %v2668
    %v3828 = vunpack.c.l.b16 %v2669
    %v3829 = vunpack.c.h.b16 %v2669
    %v3830 = vunpack.c.l.b16 %v2670
    %v3831 = vunpack.c.l.b16 %v2671
    %v3832 = vunpack.c.h.b16 %v2671
    %v3833 = vunpack.c.l.b16 %v2672
    %v3834 = vunpack.c.h.b16 %v2672
    %v3835 = vunpack.c.l.b16 %v2673
    %v3836 = vunpack.c.h.b16 %v2673
    %v3837 = vunpack.c.l.b16 %v2674
    %v3838 = vunpack.c.l.b16 %v2675
    %v3839 = vunpack.c.h.b16 %v2675
    %v3840 = vunpack.c.l.b16 %v2676
    %v3841 = vunpack.c.h.b16 %v2676
    %v3842 = vunpack.c.l.b16 %v2677
    %v3843 = vunpack.c.h.b16 %v2677
    %v3844 = vunpack.c.l.b16 %v2678
    %v3845 = vunpack.c.l.b16 %v2679
    %v3846 = vunpack.c.h.b16 %v2679
    %v3847 = vunpack.c.l.b16 %v2680
    %v3848 = vunpack.c.h.b16 %v2680
    %v3849 = vunpack.c.l.b16 %v2681
    %v3850 = vunpack.c.h.b16 %v2681
    %v3851 = vunpack.c.l.b16 %v2682
    %v3852 = vunpack.c.l.b16 %v2683
    %v3853 = vunpack.c.h.b16 %v2683
    %v3854 = vunpack.c.l.b16 %v2684
    %v3855 = vunpack.c.h.b16 %v2684
    %v3856 = vunpack.c.l.b16 %v2685
    %v3857 = vunpack.c.h.b16 %v2685
    %v3858 = vunpack.c.l.b16 %v2686
    %v3859 = vunpack.c.l.b16 %v2687
    %v3860 = vunpack.c.h.b16 %v2687
    %v3861 = vunpack.c.l.b16 %v2688
    %v3862 = vunpack.c.h.b16 %v2688
    %v3863 = vunpack.c.l.b16 %v2689
    %v3864 = vunpack.c.h.b16 %v2689
    %v3865 = vunpack.c.l.b16 %v2690
    %v3866 = vunpack.c.l.b16 %v2691
    %v3867 = vunpack.c.h.b16 %v2691
    %v3868 = vunpack.c.l.b16 %v2692
    %v3869 = vunpack.c.h.b16 %v2692
    %v3870 = vunpack.c.l.b16 %v2693
    %v3871 = vunpack.c.h.b16 %v2693
    %v3872 = vunpack.c.l.b16 %v2694
    %v3873 = vunpack.c.l.b16 %v2695
    %v3874 = vunpack.c.h.b16 %v2695
    %v3875 = vunpack.c.l.b16 %v2696
    %v3876 = vunpack.c.h.b16 %v2696
    %v3877 = vunpack.c.l.b16 %v2697
    %v3878 = vunpack.c.h.b16 %v2697
    %v3879 = vunpack.c.l.b16 %v2698
    %v3880 = vunpack.c.l.b16 %v2699
    %v3881 = vunpack.c.h.b16 %v2699
    %v3882 = vunpack.c.l.b16 %v2700
    %v3883 = vunpack.c.h.b16 %v2700
    %v3884 = vunpack.c.l.b16 %v2701
    %v3885 = vunpack.c.h.b16 %v2701
    %v3886 = vunpack.c.l.b16 %v2702
    %v3887 = vunpack.c.l.b16 %v2703
    %v3888 = vunpack.c.h.b16 %v2703
    %v3889 = vunpack.c.l.b16 %v2704
    %v3890 = vunpack.c.h.b16 %v2704
    %v3891 = vunpack.c.l.b16 %v2705
    %v3892 = vunpack.c.h.b16 %v2705
    %v3893 = vunpack.c.l.b16 %v2706
    %v3894 = vunpack.c.l.b16 %v2707
    %v3895 = vunpack.c.h.b16 %v2707
    %v3896 = vunpack.c.l.b16 %v2708
    %v3897 = vunpack.c.h.b16 %v2708
    %v3898 = vunpack.c.l.b16 %v2709
    %v3899 = vunpack.c.h.b16 %v2709
    %v3900 = vunpack.c.l.b16 %v2710
    %v3901 = vunpack.c.l.b16 %v2711
    %v3902 = vunpack.c.h.b16 %v2711
    %v3903 = vunpack.c.l.b16 %v2712
    %v3904 = vunpack.c.h.b16 %v2712
    %v3905 = vunpack.c.l.b16 %v2713
    %v3906 = vunpack.c.h.b16 %v2713
    %v3907 = vunpack.c.l.b16 %v2714
    %v3908 = vunpack.c.l.b16 %v2715
    %v3909 = vunpack.c.h.b16 %v2715
    %v3910 = vunpack.c.l.b16 %v2716
    %v3911 = vunpack.c.h.b16 %v2716
    %v3912 = vunpack.c.l.b16 %v2717
    %v3913 = vunpack.c.h.b16 %v2717
    %v3914 = vunpack.c.l.b16 %v2718
    %v3915 = vunpack.c.l.b16 %v2719
    %v3916 = vunpack.c.h.b16 %v2719
    %v3917 = vunpack.c.l.b16 %v2720
    %v3918 = vunpack.c.h.b16 %v2720
    %v3919 = vunpack.c.l.b16 %v2721
    %v3920 = vunpack.c.h.b16 %v2721
    %v3921 = vunpack.c.l.b16 %v2722
    %v3922 = vunpack.c.l.b16 %v2723
    %v3923 = vunpack.c.h.b16 %v2723
    %v3924 = vunpack.c.l.b16 %v2724
    %v3925 = vunpack.c.h.b16 %v2724
    %v3926 = vunpack.c.l.b16 %v2725
    %v3927 = vunpack.c.h.b16 %v2725
    %v3928 = vunpack.c.l.b16 %v2726
    %v3929 = vunpack.c.l.b16 %v2727
    %v3930 = vunpack.c.h.b16 %v2727
    %v3931 = vunpack.c.l.b16 %v2728
    %v3932 = vunpack.c.h.b16 %v2728
    %v3933 = vunpack.c.l.b16 %v2729
    %v3934 = vunpack.c.h.b16 %v2729
    %v3935 = vunpack.c.l.b16 %v2730
    %v3936 = vunpack.c.l.b16 %v2731
    %v3937 = vunpack.c.h.b16 %v2731
    %v3938 = vunpack.c.l.b16 %v2732
    %v3939 = vunpack.c.h.b16 %v2732
    %v3940 = vunpack.c.l.b16 %v2733
    %v3941 = vunpack.c.h.b16 %v2733
    %v3942 = vunpack.c.l.b16 %v2734
    %v3943 = vunpack.c.l.b16 %v2735
    %v3944 = vunpack.c.h.b16 %v2735
    %v3945 = vunpack.c.l.b16 %v2736
    %v3946 = vunpack.c.h.b16 %v2736
    %v3947 = vunpack.c.l.b16 %v2737
    %v3948 = vunpack.c.h.b16 %v2737
    %v3949 = vunpack.c.l.b16 %v2738
    %v3950 = vunpack.c.l.b16 %v2739
    %v3951 = vunpack.c.h.b16 %v2739
    %v3952 = vunpack.c.l.b16 %v2740
    %v3953 = vunpack.c.h.b16 %v2740
    %v3954 = vunpack.c.l.b16 %v2741
    %v3955 = vunpack.c.h.b16 %v2741
    %v3956 = vunpack.c.l.b16 %v2742
    %v3957 = vunpack.c.l.b16 %v2743
    %v3958 = vunpack.c.h.b16 %v2743
    %v3959 = vunpack.c.l.b16 %v2744
    %v3960 = vunpack.c.h.b16 %v2744
    %v3961 = vunpack.c.l.b16 %v2745
    %v3962 = vunpack.c.h.b16 %v2745
    %v3963 = vunpack.c.l.b16 %v2746
    %v3964 = vunpack.c.l.b16 %v2747
    %v3965 = vunpack.c.h.b16 %v2747
    %v3966 = vunpack.c.l.b16 %v2748
    %v3967 = vunpack.c.h.b16 %v2748
    %v3968 = vunpack.c.l.b16 %v2749
    %v3969 = vunpack.c.h.b16 %v2749
    %v3970 = vunpack.c.l.b16 %v2750
    %v3971 = vunpack.c.l.b16 %v2751
    %v3972 = vunpack.c.h.b16 %v2751
    %v3973 = vunpack.c.l.b16 %v2752
    %v3974 = vunpack.c.h.b16 %v2752
    %v3975 = vunpack.c.l.b16 %v2753
    %v3976 = vunpack.c.h.b16 %v2753
    %v3977 = vunpack.c.l.b16 %v2754
    %v3978 = vunpack.c.l.b16 %v2755
    %v3979 = vunpack.c.h.b16 %v2755
    %v3980 = vunpack.c.l.b16 %v2756
    %v3981 = vunpack.c.h.b16 %v2756
    %v3982 = vunpack.c.l.b16 %v2757
    %v3983 = vunpack.c.h.b16 %v2757
    %v3984 = vunpack.c.l.b16 %v2758
    %v3985 = vunpack.c.l.b16 %v2759
    %v3986 = vunpack.c.h.b16 %v2759
    %v3987 = vunpack.c.l.b16 %v2760
    %v3988 = vunpack.c.h.b16 %v2760
    %v3989 = vunpack.c.l.b16 %v2761
    %v3990 = vunpack.c.h.b16 %v2761
    %v3991 = vunpack.c.l.b16 %v2762
    %v3992 = vunpack.c.l.b16 %v2763
    %v3993 = vunpack.c.h.b16 %v2763
    %v3994 = vunpack.c.l.b16 %v2764
    %v3995 = vunpack.c.h.b16 %v2764
    %v3996 = vunpack.c.l.b16 %v2765
    %v3997 = vunpack.c.h.b16 %v2765
    %v3998 = vunpack.c.l.b16 %v2766
    %v3999 = vunpack.c.l.b16 %v2767
    %v4000 = vunpack.c.h.b16 %v2767
    %v4001 = vunpack.c.l.b16 %v2768
    %v4002 = vunpack.c.h.b16 %v2768
    %v4003 = vunpack.c.l.b16 %v2769
    %v4004 = vunpack.c.h.b16 %v2769
    %v4005 = vunpack.c.l.b16 %v2770
    %v4006 = vunpack.c.l.b16 %v2771
    %v4007 = vunpack.c.h.b16 %v2771
    %v4008 = vunpack.c.l.b16 %v2772
    %v4009 = vunpack.c.h.b16 %v2772
    %v4010 = vunpack.c.l.b16 %v2773
    %v4011 = vunpack.c.h.b16 %v2773
    %v4012 = vunpack.c.l.b16 %v2774
    %v4013 = vunpack.c.l.b16 %v2775
    %v4014 = vunpack.c.h.b16 %v2775
    %v4015 = vunpack.c.l.b16 %v2776
    %v4016 = vunpack.c.h.b16 %v2776
    %v4017 = vunpack.c.l.b16 %v2777
    %v4018 = vunpack.c.h.b16 %v2777
    %v4019 = vunpack.c.l.b16 %v2778
    %v4020 = vunpack.c.l.b16 %v2779
    %v4021 = vunpack.c.h.b16 %v2779
    %v4022 = vunpack.c.l.b16 %v2780
    %v4023 = vunpack.c.h.b16 %v2780
    %v4024 = vunpack.c.l.b16 %v2781
    %v4025 = vunpack.c.h.b16 %v2781
    %v4026 = vunpack.c.l.b16 %v2782
    %v4027 = vunpack.c.l.b16 %v2783
    %v4028 = vunpack.c.h.b16 %v2783
    %v4029 = vunpack.c.l.b16 %v2784
    %v4030 = vunpack.c.h.b16 %v2784
    %v4031 = vunpack.c.l.b16 %v2785
    %v4032 = vunpack.c.h.b16 %v2785
    %v4033 = vunpack.c.l.b16 %v2786
    %v4034 = vunpack.c.l.b16 %v2787
    %v4035 = vunpack.c.h.b16 %v2787
    %v4036 = vunpack.c.l.b16 %v2788
    %v4037 = vunpack.c.h.b16 %v2788
    %v4038 = vunpack.c.l.b16 %v2789
    %v4039 = vunpack.c.h.b16 %v2789
    %v4040 = vunpack.c.l.b16 %v2790
    %v4041 = vunpack.c.l.b16 %v2791
    %v4042 = vunpack.c.h.b16 %v2791
    %v4043 = vunpack.c.l.b16 %v2792
    %v4044 = vunpack.c.h.b16 %v2792
    %v4045 = vunpack.c.l.b16 %v2793
    %v4046 = vunpack.c.h.b16 %v2793
    %v4047 = vunpack.c.l.b16 %v2794
    %v4048 = vunpack.c.l.b16 %v2795
    %v4049 = vunpack.c.h.b16 %v2795
    %v4050 = vunpack.c.l.b16 %v2796
    %v4051 = vunpack.c.h.b16 %v2796
    %v4052 = vunpack.c.l.b16 %v2797
    %v4053 = vunpack.c.h.b16 %v2797
    %v4054 = vunpack.c.l.b16 %v2798
    %v4055 = vunpack.c.l.b16 %v2799
    %v4056 = vunpack.c.h.b16 %v2799
    %v4057 = vunpack.c.l.b16 %v2800
    %v4058 = vunpack.c.h.b16 %v2800
    %v4059 = vunpack.c.l.b16 %v2801
    %v4060 = vunpack.c.h.b16 %v2801
    %v4061 = vunpack.c.l.b16 %v2802
    %v4062 = vunpack.c.l.b16 %v2803
    %v4063 = vunpack.c.h.b16 %v2803
    %v4064 = vunpack.c.l.b16 %v2804
    %v4065 = vunpack.c.h.b16 %v2804
    %v4066 = vunpack.c.l.b16 %v2805
    %v4067 = vunpack.c.h.b16 %v2805
    %v4068 = vunpack.c.l.b16 %v2806
    %v4069 = vunpack.c.l.b16 %v2807
    %v4070 = vunpack.c.h.b16 %v2807
    %v4071 = vunpack.c.l.b16 %v2808
    %v4072 = vunpack.c.h.b16 %v2808
    %v4073 = vunpack.c.l.b16 %v2809
    %v4074 = vunpack.c.h.b16 %v2809
    %v4075 = vunpack.c.l.b16 %v2810
    %v4076 = vunpack.c.l.b16 %v2811
    %v4077 = vunpack.c.h.b16 %v2811
    %v4078 = vunpack.c.l.b16 %v2812
    %v4079 = vunpack.c.h.b16 %v2812
    %v4080 = vunpack.c.l.b16 %v2813
    %v4081 = vunpack.c.h.b16 %v2813
    %v4082 = vunpack.c.l.b16 %v2814
    %v4083 = vunpack.c.l.b16 %v2815
    %v4084 = vunpack.c.h.b16 %v2815
    %v4085 = vunpack.c.l.b16 %v2816
    %v4086 = vunpack.c.h.b16 %v2816
    %v4087 = vunpack.c.l.b16 %v2817
    %v4088 = vunpack.c.h.b16 %v2817
    %v4089 = vunpack.c.l.b16 %v2818
    %v4090 = vunpack.c.l.b16 %v2819
    %v4091 = vunpack.c.h.b16 %v2819
    %v4092 = vunpack.c.l.b16 %v2820
    %v4093 = vunpack.c.h.b16 %v2820
    %v4094 = vunpack.c.l.b16 %v2821
    %v4095 = vunpack.c.h.b16 %v2821
    %v4096 = vunpack.c.l.b16 %v2822
    %v4097 = vunpack.c.l.b16 %v2823
    %v4098 = vunpack.c.h.b16 %v2823
    %v4099 = vunpack.c.l.b16 %v2824
    %v4100 = vunpack.c.h.b16 %v2824
    %v4101 = vunpack.c.l.b16 %v2825
    %v4102 = vunpack.c.h.b16 %v2825
    %v4103 = vunpack.c.l.b16 %v2826
    %v4104 = vunpack.c.l.b16 %v2827
    %v4105 = vunpack.c.h.b16 %v2827
    %v4106 = vunpack.c.l.b16 %v2828
    %v4107 = vunpack.c.h.b16 %v2828
    %v4108 = vunpack.c.l.b16 %v2829
    %v4109 = vunpack.c.h.b16 %v2829
    %v4110 = vunpack.c.l.b16 %v2830
    %v4111 = vunpack.c.l.b16 %v2831
    %v4112 = vunpack.c.h.b16 %v2831
    %v4113 = vunpack.c.l.b16 %v2832
    %v4114 = vunpack.c.h.b16 %v2832
    %v4115 = vunpack.c.l.b16 %v2833
    %v4116 = vunpack.c.h.b16 %v2833
    %v4117 = vunpack.c.l.b16 %v2834
    %v4118 = vunpack.c.l.b16 %v2835
    %v4119 = vunpack.c.h.b16 %v2835
    %v4120 = vunpack.c.l.b16 %v2836
    %v4121 = vunpack.c.h.b16 %v2836
    %v4122 = vunpack.c.l.b16 %v2837
    %v4123 = vunpack.c.h.b16 %v2837
    %v4124 = vunpack.c.l.b16 %v2838
    %v4125 = vunpack.c.l.b16 %v2839
    %v4126 = vunpack.c.h.b16 %v2839
    %v4127 = vunpack.c.l.b16 %v2840
    %v4128 = vunpack.c.h.b16 %v2840
    %v4129 = vunpack.c.l.b16 %v2841
    %v4130 = vunpack.c.h.b16 %v2841
    %v4131 = vunpack.c.l.b16 %v2842
    %v4132 = vunpack.c.l.b16 %v2843
    %v4133 = vunpack.c.h.b16 %v2843
    %v4134 = vunpack.c.l.b16 %v2844
    %v4135 = vunpack.c.h.b16 %v2844
    %v4136 = vunpack.c.l.b16 %v2845
    %v4137 = vunpack.c.h.b16 %v2845
    %v4138 = vunpack.c.l.b16 %v2846
    %v4139 = vunpack.c.l.b16 %v2847
    %v4140 = vunpack.c.h.b16 %v2847
    %v4141 = vunpack.c.l.b16 %v2848
    %v4142 = vunpack.c.h.b16 %v2848
    %v4143 = vunpack.c.l.b16 %v2849
    %v4144 = vunpack.c.h.b16 %v2849
    %v4145 = vunpack.c.l.b16 %v2850
    %v4146 = vunpack.c.l.b16 %v2851
    %v4147 = vunpack.c.h.b16 %v2851
    %v4148 = vunpack.c.l.b16 %v2852
    %v4149 = vunpack.c.h.b16 %v2852
    %v4150 = vunpack.c.l.b16 %v2853
    %v4151 = vunpack.c.h.b16 %v2853
    %v4152 = vunpack.c.l.b16 %v2854
    %v4153 = vunpack.c.l.b16 %v2855
    %v4154 = vunpack.c.h.b16 %v2855
    %v4155 = vunpack.c.l.b16 %v2856
    %v4156 = vunpack.c.h.b16 %v2856
    %v4157 = vunpack.c.l.b16 %v2857
    %v4158 = vunpack.c.h.b16 %v2857
    %v4159 = vunpack.c.l.b16 %v2858
    %v4160 = vunpack.c.l.b16 %v2859
    %v4161 = vunpack.c.h.b16 %v2859
    %v4162 = vunpack.c.l.b16 %v2860
    %v4163 = vunpack.c.h.b16 %v2860
    %v4164 = vunpack.c.l.b16 %v2861
    %v4165 = vunpack.c.h.b16 %v2861
    %v4166 = vunpack.c.l.b16 %v2862
    %v4167 = vunpack.c.l.b16 %v2863
    %v4168 = vunpack.c.h.b16 %v2863
    %v4169 = vunpack.c.l.b16 %v2864
    %v4170 = vunpack.c.h.b16 %v2864
    %v4171 = vunpack.c.l.b16 %v2865
    %v4172 = vunpack.c.h.b16 %v2865
    %v4173 = vunpack.c.l.b16 %v2866
    %v4174 = vunpack.c.l.b16 %v2867
    %v4175 = vunpack.c.h.b16 %v2867
    %v4176 = vunpack.c.l.b16 %v2868
    %v4177 = vunpack.c.h.b16 %v2868
    %v4178 = vunpack.c.l.b16 %v2869
    %v4179 = vunpack.c.h.b16 %v2869
    %v4180 = vunpack.c.l.b16 %v2870
    %v4181 = vunpack.c.l.b16 %v2871
    %v4182 = vunpack.c.h.b16 %v2871
    %v4183 = vunpack.c.l.b16 %v2872
    %v4184 = vunpack.c.h.b16 %v2872
    %v4185 = vunpack.c.l.b16 %v2873
    %v4186 = vunpack.c.h.b16 %v2873
    %v4187 = vunpack.c.l.b16 %v2874
    %v4188 = vunpack.c.l.b16 %v2875
    %v4189 = vunpack.c.h.b16 %v2875
    %v4190 = vunpack.c.l.b16 %v2876
    %v4191 = vunpack.c.h.b16 %v2876
    %v4192 = vunpack.c.l.b16 %v2877
    %v4193 = vunpack.c.h.b16 %v2877
    %v4194 = vunpack.c.l.b16 %v2878
    %v4195 = vunpack.c.l.b16 %v2879
    %v4196 = vunpack.c.h.b16 %v2879
    %v4197 = vunpack.c.l.b16 %v2880
    %v4198 = vunpack.c.h.b16 %v2880
    %v4199 = vunpack.c.l.b16 %v2881
    %v4200 = vunpack.c.h.b16 %v2881
    %v4201 = vunpack.c.l.b16 %v2882
    %v4202 = vunpack.c.l.b16 %v2883
    %v4203 = vunpack.c.h.b16 %v2883
    %v4204 = vunpack.c.l.b16 %v2884
    %v4205 = vunpack.c.h.b16 %v2884
    %v4206 = vunpack.c.l.b16 %v2885
    %v4207 = vunpack.c.h.b16 %v2885
    %v4208 = vunpack.c.l.b16 %v2886
    %v4209 = vunpack.c.l.b16 %v2887
    %v4210 = vunpack.c.h.b16 %v2887
    %v4211 = vunpack.c.l.b16 %v2888
    %v4212 = vunpack.c.h.b16 %v2888
    %v4213 = vunpack.c.l.b16 %v2889
    %v4214 = vunpack.c.h.b16 %v2889
    %v4215 = vunpack.c.l.b16 %v2890
    %v4216 = vunpack.c.l.b16 %v2891
    %v4217 = vunpack.c.h.b16 %v2891
    %v4218 = vunpack.c.l.b16 %v2892
    %v4219 = vunpack.c.h.b16 %v2892
    %v4220 = vunpack.c.l.b16 %v2893
    %v4221 = vunpack.c.h.b16 %v2893
    %v4222 = vunpack.c.l.b16 %v2894
    %v4223 = vunpack.c.l.b16 %v2895
    %v4224 = vunpack.c.h.b16 %v2895
    %v4225 = vunpack.c.l.b16 %v2896
    %v4226 = vunpack.c.h.b16 %v2896
    %v4227 = vunpack.c.l.b16 %v2897
    %v4228 = vunpack.c.h.b16 %v2897
    %v4229 = vunpack.c.l.b16 %v2898
    %v4230 = vunpack.c.l.b16 %v2899
    %v4231 = vunpack.c.h.b16 %v2899
    %v4232 = vunpack.c.l.b16 %v2900
    %v4233 = vunpack.c.h.b16 %v2900
    %v4234 = vunpack.c.l.b16 %v2901
    %v4235 = vunpack.c.h.b16 %v2901
    %v4236 = vunpack.c.l.b16 %v2902
    %v4237 = vunpack.c.l.b16 %v2903
    %v4238 = vunpack.c.h.b16 %v2903
    %v4239 = vunpack.c.l.b16 %v2904
    %v4240 = vunpack.c.h.b16 %v2904
    %v4241 = vunpack.c.l.b16 %v2905
    %v4242 = vunpack.c.h.b16 %v2905
    %v4243 = vunpack.c.l.b16 %v2906
    %v4244 = vunpack.c.l.b16 %v2907
    %v4245 = vunpack.c.h.b16 %v2907
    %v4246 = vunpack.c.l.b16 %v2908
    %v4247 = vunpack.c.h.b16 %v2908
    %v4248 = vunpack.c.l.b16 %v2909
    %v4249 = vunpack.c.h.b16 %v2909
    %v4250 = vunpack.c.l.b16 %v2910
    %v4251 = vunpack.c.l.b16 %v2911
    %v4252 = vunpack.c.h.b16 %v2911
    %v4253 = vunpack.c.l.b16 %v2912
    %v4254 = vunpack.c.h.b16 %v2912
    %v4255 = vunpack.c.l.b16 %v2913
    %v4256 = vunpack.c.h.b16 %v2913
    %v4257 = vunpack.c.l.b16 %v2914
    %v4258 = vunpack.c.l.b16 %v2915
    %v4259 = vunpack.c.h.b16 %v2915
    %v4260 = vunpack.c.l.b16 %v2916
    %v4261 = vunpack.c.h.b16 %v2916
    %v4262 = vunpack.c.l.b16 %v2917
    %v4263 = vunpack.c.h.b16 %v2917
    %v4264 = vunpack.c.l.b16 %v2918
    %v4265 = vunpack.c.l.b16 %v2919
    %v4266 = vunpack.c.h.b16 %v2919
    %v4267 = vunpack.c.l.b16 %v2920
    %v4268 = vunpack.c.h.b16 %v2920
    %v4269 = vunpack.c.l.b16 %v2921
    %v4270 = vunpack.c.h.b16 %v2921
    %v4271 = vunpack.c.l.b16 %v2922
    %v4272 = vunpack.c.l.b16 %v2923
    %v4273 = vunpack.c.h.b16 %v2923
    %v4274 = vunpack.c.l.b16 %v2924
    %v4275 = vunpack.c.h.b16 %v2924
    %v4276 = vunpack.c.l.b16 %v2925
    %v4277 = vunpack.c.h.b16 %v2925
    %v4278 = vunpack.c.l.b16 %v2926
    %v4279 = vunpack.c.l.b16 %v2927
    %v4280 = vunpack.c.h.b16 %v2927
    %v4281 = vunpack.c.l.b16 %v2928
    %v4282 = vunpack.c.h.b16 %v2928
    %v4283 = vunpack.c.l.b16 %v2929
    %v4284 = vunpack.c.h.b16 %v2929
    %v4285 = vunpack.c.l.b16 %v2930
    %v4286 = vunpack.c.l.b16 %v2931
    %v4287 = vunpack.c.h.b16 %v2931
    %v4288 = vunpack.c.l.b16 %v2932
    %v4289 = vunpack.c.h.b16 %v2932
    %v4290 = vunpack.c.l.b16 %v2933
    %v4291 = vunpack.c.h.b16 %v2933
    %v4292 = vunpack.c.l.b16 %v2934
    %v4293 = vunpack.c.l.b16 %v2935
    %v4294 = vunpack.c.h.b16 %v2935
    %v4295 = vunpack.c.l.b16 %v2936
    %v4296 = vunpack.c.h.b16 %v2936
    %v4297 = vunpack.c.l.b16 %v2937
    %v4298 = vunpack.c.h.b16 %v2937
    %v4299 = vunpack.c.l.b16 %v2938
    %v4300 = vunpack.c.l.b16 %v2939
    %v4301 = vunpack.c.h.b16 %v2939
    %v4302 = vunpack.c.l.b16 %v2940
    %v4303 = vunpack.c.h.b16 %v2940
    %v4304 = vunpack.c.l.b16 %v2941
    %v4305 = vunpack.c.h.b16 %v2941
    %v4306 = vunpack.c.l.b16 %v2942
    %v4307 = vunpack.c.l.b16 %v2943
    %v4308 = vunpack.c.h.b16 %v2943
    %v4309 = vunpack.c.l.b16 %v2944
    %v4310 = vunpack.c.h.b16 %v2944
    %v4311 = vunpack.c.l.b16 %v2945
    %v4312 = vunpack.c.h.b16 %v2945
    %v4313 = vunpack.c.l.b16 %v2946
    %v4314 = vunpack.c.l.b16 %v2947
    %v4315 = vunpack.c.h.b16 %v2947
    %v4316 = vunpack.c.l.b16 %v2948
    %v4317 = vunpack.c.h.b16 %v2948
    %v4318 = vunpack.c.l.b16 %v2949
    %v4319 = vunpack.c.h.b16 %v2949
    %v4320 = vunpack.c.l.b16 %v2950
    %v4321 = vunpack.c.l.b16 %v2951
    %v4322 = vunpack.c.h.b16 %v2951
    %v4323 = vunpack.c.l.b16 %v2952
    %v4324 = vunpack.c.h.b16 %v2952
    %v4325 = vunpack.c.l.b16 %v2953
    %v4326 = vunpack.c.h.b16 %v2953
    %v4327 = vunpack.c.l.b16 %v2954
    %v4328 = vunpack.c.l.b16 %v2955
    %v4329 = vunpack.c.h.b16 %v2955
    %v4330 = vunpack.c.l.b16 %v2956
    %v4331 = vunpack.c.h.b16 %v2956
    %v4332 = vunpack.c.l.b16 %v2957
    %v4333 = vunpack.c.h.b16 %v2957
    %v4334 = vunpack.c.l.b16 %v2958
    %v4335 = vunpack.c.l.b16 %v2959
    %v4336 = vunpack.c.h.b16 %v2959
    %v4337 = vunpack.c.l.b16 %v2960
    %v4338 = vunpack.c.h.b16 %v2960
    %v4339 = vunpack.c.l.b16 %v2961
    %v4340 = vunpack.c.h.b16 %v2961
    %v4341 = vunpack.c.l.b16 %v2962
    %v4342 = vunpack.c.l.b16 %v2963
    %v4343 = vunpack.c.h.b16 %v2963
    %v4344 = vunpack.c.l.b16 %v2964
    %v4345 = vunpack.c.h.b16 %v2964
    %v4346 = vunpack.c.l.b16 %v2965
    %v4347 = vunpack.c.h.b16 %v2965
    %v4348 = vunpack.c.l.b16 %v2966
    %v4349 = vunpack.c.l.b16 %v2967
    %v4350 = vunpack.c.h.b16 %v2967
    %v4351 = vunpack.c.l.b16 %v2968
    %v4352 = vunpack.c.h.b16 %v2968
    %v4353 = vunpack.c.l.b16 %v2969
    %v4354 = vunpack.c.h.b16 %v2969
    %v4355 = vunpack.c.l.b16 %v2970
    %v4356 = vunpack.c.l.b16 %v2971
    %v4357 = vunpack.c.h.b16 %v2971
    %v4358 = vunpack.c.l.b16 %v2972
    %v4359 = vunpack.c.h.b16 %v2972
    %v4360 = vunpack.c.l.b16 %v2973
    %v4361 = vunpack.c.h.b16 %v2973
    %v4362 = vunpack.c.l.b16 %v2974
    %v4363 = vunpack.c.l.b16 %v2975
    %v4364 = vunpack.c.h.b16 %v2975
    %v4365 = vunpack.c.l.b16 %v2976
    %v4366 = vunpack.c.h.b16 %v2976
    %v4367 = vunpack.c.l.b16 %v2977
    %v4368 = vunpack.c.h.b16 %v2977
    %v4369 = vunpack.c.l.b16 %v2978
    %v4370 = vunpack.c.l.b16 %v2979
    %v4371 = vunpack.c.h.b16 %v2979
    %v4372 = vunpack.c.l.b16 %v2980
    %v4373 = vunpack.c.h.b16 %v2980
    %v4374 = vunpack.c.l.b16 %v2981
    %v4375 = vunpack.c.h.b16 %v2981
    %v4376 = vunpack.c.l.b16 %v2982
    %v4377 = vunpack.c.l.b16 %v2983
    %v4378 = vunpack.c.h.b16 %v2983
    %v4379 = vunpack.c.l.b16 %v2984
    %v4380 = vunpack.c.h.b16 %v2984
    %v4381 = vunpack.c.l.b16 %v2985
    %v4382 = vunpack.c.h.b16 %v2985
    %v4383 = vunpack.c.l.b16 %v2986
    %v4384 = vunpack.c.l.b16 %v2987
    %v4385 = vunpack.c.h.b16 %v2987
    %v4386 = vunpack.c.l.b16 %v2988
    %v4387 = vunpack.c.h.b16 %v2988
    %v4388 = vunpack.c.l.b16 %v2989
    %v4389 = vunpack.c.h.b16 %v2989
    %v4390 = vunpack.c.l.b16 %v2990
    %v4391 = vunpack.c.l.b16 %v2991
    %v4392 = vunpack.c.h.b16 %v2991
    %v4393 = vunpack.c.l.b16 %v2992
    %v4394 = vunpack.c.h.b16 %v2992
    %v4395 = vunpack.c.l.b16 %v2993
    %v4396 = vunpack.c.h.b16 %v2993
    %v4397 = vunpack.c.l.b16 %v2994
    %v4398 = vunpack.c.l.b16 %v2995
    %v4399 = vunpack.c.h.b16 %v2995
    %v4400 = vunpack.c.l.b16 %v2996
    %v4401 = vunpack.c.h.b16 %v2996
    %v4402 = vunpack.c.l.b16 %v2997
    %v4403 = vunpack.c.h.b16 %v2997
    %v4404 = vunpack.c.l.b16 %v2998
    %v4405 = vunpack.c.l.b16 %v2999
    %v4406 = vunpack.c.h.b16 %v2999
    %v4407 = vunpack.c.l.b16 %v3000
    %v4408 = vunpack.c.h.b16 %v3000
    %v4409 = vunpack.c.l.b16 %v3001
    %v4410 = vunpack.c.h.b16 %v3001
    %v4411 = vunpack.c.l.b16 %v3002
    %v4412 = vunpack.c.l.b16 %v3003
    %v4413 = vunpack.c.h.b16 %v3003
    %v4414 = vunpack.c.l.b16 %v3004
    %v4415 = vunpack.c.h.b16 %v3004
    %v4416 = vunpack.c.l.b16 %v3005
    %v4417 = vunpack.c.h.b16 %v3005
    %v4418 = vunpack.c.l.b16 %v3006
    %v4419 = vunpack.c.l.b16 %v3007
    %v4420 = vunpack.c.h.b16 %v3007
    %v4421 = vunpack.c.l.b16 %v3008
    %v4422 = vunpack.c.h.b16 %v3008
    %v4423 = vunpack.c.l.b16 %v3009
    %v4424 = vunpack.c.h.b16 %v3009
    %v4425 = vunpack.c.l.b16 %v3010
    %v4426 = vunpack.c.l.b16 %v3011
    %v4427 = vunpack.c.h.b16 %v3011
    %v4428 = vunpack.c.l.b16 %v3012
    %v4429 = vunpack.c.h.b16 %v3012
    %v4430 = vunpack.c.l.b16 %v3013
    %v4431 = vunpack.c.h.b16 %v3013
    %v4432 = vunpack.c.l.b16 %v3014
    %v4433 = vunpack.c.l.b16 %v3015
    %v4434 = vunpack.c.h.b16 %v3015
    %v4435 = vunpack.c.l.b16 %v3016
    %v4436 = vunpack.c.h.b16 %v3016
    %v4437 = vunpack.c.l.b16 %v3017
    %v4438 = vunpack.c.h.b16 %v3017
    %v4439 = vunpack.c.l.b16 %v3018
    %v4440 = vunpack.c.l.b16 %v3019
    %v4441 = vunpack.c.h.b16 %v3019
    %v4442 = vunpack.c.l.b16 %v3020
    %v4443 = vunpack.c.h.b16 %v3020
    %v4444 = vunpack.c.l.b16 %v3021
    %v4445 = vunpack.c.h.b16 %v3021
    %v4446 = vunpack.c.l.b16 %v3022
    %v4447 = vunpack.c.l.b16 %v3023
    %v4448 = vunpack.c.h.b16 %v3023
    %v4449 = vunpack.c.l.b16 %v3024
    %v4450 = vunpack.c.h.b16 %v3024
    %v4451 = vunpack.c.l.b16 %v3025
    %v4452 = vunpack.c.h.b16 %v3025
    %v4453 = vunpack.c.l.b16 %v3026
    %v4454 = vunpack.c.l.b16 %v3027
    %v4455 = vunpack.c.h.b16 %v3027
    %v4456 = vunpack.c.l.b16 %v3028
    %v4457 = vunpack.c.h.b16 %v3028
    %v4458 = vunpack.c.l.b16 %v3029
    %v4459 = vunpack.c.h.b16 %v3029
    %v4460 = vunpack.c.l.b16 %v3030
    %v4461 = vunpack.c.l.b16 %v3031
    %v4462 = vunpack.c.h.b16 %v3031
    %v4463 = vunpack.c.l.b16 %v3032
    %v4464 = vunpack.c.h.b16 %v3032
    %v4465 = vunpack.c.l.b16 %v3033
    %v4466 = vunpack.c.h.b16 %v3033
    %v4467 = vunpack.c.l.b16 %v3034
    %v4468 = vunpack.c.l.b16 %v3035
    %v4469 = vunpack.c.h.b16 %v3035
    %v4470 = vunpack.c.l.b16 %v3036
    %v4471 = vunpack.c.h.b16 %v3036
    %v4472 = vunpack.c.l.b16 %v3037
    %v4473 = vunpack.c.h.b16 %v3037
    %v4474 = vunpack.c.l.b16 %v3038
    %v4475 = vunpack.c.l.b16 %v3039
    %v4476 = vunpack.c.h.b16 %v3039
    %v4477 = vunpack.c.l.b16 %v3040
    %v4478 = vunpack.c.h.b16 %v3040
    %v4479 = vunpack.c.l.b16 %v3041
    %v4480 = vunpack.c.h.b16 %v3041
    %v4481 = vunpack.c.l.b16 %v3042
    %v4482 = vunpack.c.l.b16 %v3043
    %v4483 = vunpack.c.h.b16 %v3043
    %v4484 = vunpack.c.l.b16 %v3044
    %v4485 = vunpack.c.h.b16 %v3044
    %v4486 = vunpack.c.l.b16 %v3045
    %v4487 = vunpack.c.h.b16 %v3045
    %v4488 = vunpack.c.l.b16 %v3046
    %v4489 = vunpack.c.l.b16 %v3047
    %v4490 = vunpack.c.h.b16 %v3047
    %v4491 = vunpack.c.l.b16 %v3048
    %v4492 = vunpack.c.h.b16 %v3048
    %v4493 = vunpack.c.l.b16 %v3049
    %v4494 = vunpack.c.h.b16 %v3049
    %v4495 = vunpack.c.l.b16 %v3050
    %v4496 = vpack.c.b16 %v3607, %v3600
    %v4497 = vpack.c.b16 %v3608, %v3601
    %v4498 = vpack.c.b16 %v3609, %v3602
    %v4499 = vpack.c.b16 %v3610, %v3603
    %v4500 = vpack.c.b16 %v3611, %v3604
    %v4501 = vpack.c.b16 %v3612, %v3605
    %v4502 = vpack.c.b16 %v3613, %v3606
    %v4503 = vpack.c.b16 %v3621, %v3614
    %v4504 = vpack.c.b16 %v3622, %v3615
    %v4505 = vpack.c.b16 %v3623, %v3616
    %v4506 = vpack.c.b16 %v3624, %v3617
    %v4507 = vpack.c.b16 %v3625, %v3618
    %v4508 = vpack.c.b16 %v3626, %v3619
    %v4509 = vpack.c.b16 %v3627, %v3620
    %v4510 = vpack.c.b16 %v3635, %v3628
    %v4511 = vpack.c.b16 %v3636, %v3629
    %v4512 = vpack.c.b16 %v3637, %v3630
    %v4513 = vpack.c.b16 %v3638, %v3631
    %v4514 = vpack.c.b16 %v3639, %v3632
    %v4515 = vpack.c.b16 %v3640, %v3633
    %v4516 = vpack.c.b16 %v3641, %v3634
    %v4517 = vpack.c.b16 %v3649, %v3642
    %v4518 = vpack.c.b16 %v3650, %v3643
    %v4519 = vpack.c.b16 %v3651, %v3644
    %v4520 = vpack.c.b16 %v3652, %v3645
    %v4521 = vpack.c.b16 %v3653, %v3646
    %v4522 = vpack.c.b16 %v3654, %v3647
    %v4523 = vpack.c.b16 %v3655, %v3648
    %v4524 = vpack.c.b16 %v3663, %v3656
    %v4525 = vpack.c.b16 %v3664, %v3657
    %v4526 = vpack.c.b16 %v3665, %v3658
    %v4527 = vpack.c.b16 %v3666, %v3659
    %v4528 = vpack.c.b16 %v3667, %v3660
    %v4529 = vpack.c.b16 %v3668, %v3661
    %v4530 = vpack.c.b16 %v3669, %v3662
    %v4531 = vpack.c.b16 %v3677, %v3670
    %v4532 = vpack.c.b16 %v3678, %v3671
    %v4533 = vpack.c.b16 %v3679, %v3672
    %v4534 = vpack.c.b16 %v3680, %v3673
    %v4535 = vpack.c.b16 %v3681, %v3674
    %v4536 = vpack.c.b16 %v3682, %v3675
    %v4537 = vpack.c.b16 %v3683, %v3676
    %v4538 = vpack.c.b16 %v3691, %v3684
    %v4539 = vpack.c.b16 %v3692, %v3685
    %v4540 = vpack.c.b16 %v3693, %v3686
    %v4541 = vpack.c.b16 %v3694, %v3687
    %v4542 = vpack.c.b16 %v3695, %v3688
    %v4543 = vpack.c.b16 %v3696, %v3689
    %v4544 = vpack.c.b16 %v3697, %v3690
    %v4545 = vpack.c.b16 %v3705, %v3698
    %v4546 = vpack.c.b16 %v3706, %v3699
    %v4547 = vpack.c.b16 %v3707, %v3700
    %v4548 = vpack.c.b16 %v3708, %v3701
    %v4549 = vpack.c.b16 %v3709, %v3702
    %v4550 = vpack.c.b16 %v3710, %v3703
    %v4551 = vpack.c.b16 %v3711, %v3704
    %v4552 = vpack.c.b16 %v3719, %v3712
    %v4553 = vpack.c.b16 %v3720, %v3713
    %v4554 = vpack.c.b16 %v3721, %v3714
    %v4555 = vpack.c.b16 %v3722, %v3715
    %v4556 = vpack.c.b16 %v3723, %v3716
    %v4557 = vpack.c.b16 %v3724, %v3717
    %v4558 = vpack.c.b16 %v3725, %v3718
    %v4559 = vpack.c.b16 %v3733, %v3726
    %v4560 = vpack.c.b16 %v3734, %v3727
    %v4561 = vpack.c.b16 %v3735, %v3728
    %v4562 = vpack.c.b16 %v3736, %v3729
    %v4563 = vpack.c.b16 %v3737, %v3730
    %v4564 = vpack.c.b16 %v3738, %v3731
    %v4565 = vpack.c.b16 %v3739, %v3732
    %v4566 = vpack.c.b16 %v3747, %v3740
    %v4567 = vpack.c.b16 %v3748, %v3741
    %v4568 = vpack.c.b16 %v3749, %v3742
    %v4569 = vpack.c.b16 %v3750, %v3743
    %v4570 = vpack.c.b16 %v3751, %v3744
    %v4571 = vpack.c.b16 %v3752, %v3745
    %v4572 = vpack.c.b16 %v3753, %v3746
    %v4573 = vpack.c.b16 %v3761, %v3754
    %v4574 = vpack.c.b16 %v3762, %v3755
    %v4575 = vpack.c.b16 %v3763, %v3756
    %v4576 = vpack.c.b16 %v3764, %v3757
    %v4577 = vpack.c.b16 %v3765, %v3758
    %v4578 = vpack.c.b16 %v3766, %v3759
    %v4579 = vpack.c.b16 %v3767, %v3760
    %v4580 = vpack.c.b16 %v3775, %v3768
    %v4581 = vpack.c.b16 %v3776, %v3769
    %v4582 = vpack.c.b16 %v3777, %v3770
    %v4583 = vpack.c.b16 %v3778, %v3771
    %v4584 = vpack.c.b16 %v3779, %v3772
    %v4585 = vpack.c.b16 %v3780, %v3773
    %v4586 = vpack.c.b16 %v3781, %v3774
    %v4587 = vpack.c.b16 %v3789, %v3782
    %v4588 = vpack.c.b16 %v3790, %v3783
    %v4589 = vpack.c.b16 %v3791, %v3784
    %v4590 = vpack.c.b16 %v3792, %v3785
    %v4591 = vpack.c.b16 %v3793, %v3786
    %v4592 = vpack.c.b16 %v3794, %v3787
    %v4593 = vpack.c.b16 %v3795, %v3788
    %v4594 = vpack.c.b16 %v3803, %v3796
    %v4595 = vpack.c.b16 %v3804, %v3797
    %v4596 = vpack.c.b16 %v3805, %v3798
    %v4597 = vpack.c.b16 %v3806, %v3799
    %v4598 = vpack.c.b16 %v3807, %v3800
    %v4599 = vpack.c.b16 %v3808, %v3801
    %v4600 = vpack.c.b16 %v3809, %v3802
    %v4601 = vpack.c.b16 %v3817, %v3810
    %v4602 = vpack.c.b16 %v3818, %v3811
    %v4603 = vpack.c.b16 %v3819, %v3812
    %v4604 = vpack.c.b16 %v3820, %v3813
    %v4605 = vpack.c.b16 %v3821, %v3814
    %v4606 = vpack.c.b16 %v3822, %v3815
    %v4607 = vpack.c.b16 %v3823, %v3816
    %v4608 = vpack.c.b16 %v3831, %v3824
    %v4609 = vpack.c.b16 %v3832, %v3825
    %v4610 = vpack.c.b16 %v3833, %v3826
    %v4611 = vpack.c.b16 %v3834, %v3827
    %v4612 = vpack.c.b16 %v3835, %v3828
    %v4613 = vpack.c.b16 %v3836, %v3829
    %v4614 = vpack.c.b16 %v3837, %v3830
    %v4615 = vpack.c.b16 %v3845, %v3838
    %v4616 = vpack.c.b16 %v3846, %v3839
    %v4617 = vpack.c.b16 %v3847, %v3840
    %v4618 = vpack.c.b16 %v3848, %v3841
    %v4619 = vpack.c.b16 %v3849, %v3842
    %v4620 = vpack.c.b16 %v3850, %v3843
    %v4621 = vpack.c.b16 %v3851, %v3844
    %v4622 = vpack.c.b16 %v3859, %v3852
    %v4623 = vpack.c.b16 %v3860, %v3853
    %v4624 = vpack.c.b16 %v3861, %v3854
    %v4625 = vpack.c.b16 %v3862, %v3855
    %v4626 = vpack.c.b16 %v3863, %v3856
    %v4627 = vpack.c.b16 %v3864, %v3857
    %v4628 = vpack.c.b16 %v3865, %v3858
    %v4629 = vpack.c.b16 %v3873, %v3866
    %v4630 = vpack.c.b16 %v3874, %v3867
    %v4631 = vpack.c.b16 %v3875, %v3868
    %v4632 = vpack.c.b16 %v3876, %v3869
    %v4633 = vpack.c.b16 %v3877, %v3870
    %v4634 = vpack.c.b16 %v3878, %v3871
    %v4635 = vpack.c.b16 %v3879, %v3872
    %v4636 = vpack.c.b16 %v3887, %v3880
    %v4637 = vpack.c.b16 %v3888, %v3881
    %v4638 = vpack.c.b16 %v3889, %v3882
    %v4639 = vpack.c.b16 %v3890, %v3883
    %v4640 = vpack.c.b16 %v3891, %v3884
    %v4641 = vpack.c.b16 %v3892, %v3885
    %v4642 = vpack.c.b16 %v3893, %v3886
    %v4643 = vpack.c.b16 %v3901, %v3894
    %v4644 = vpack.c.b16 %v3902, %v3895
    %v4645 = vpack.c.b16 %v3903, %v3896
    %v4646 = vpack.c.b16 %v3904, %v3897
    %v4647 = vpack.c.b16 %v3905, %v3898
    %v4648 = vpack.c.b16 %v3906, %v3899
    %v4649 = vpack.c.b16 %v3907, %v3900
    %v4650 = vpack.c.b16 %v3915, %v3908
    %v4651 = vpack.c.b16 %v3916, %v3909
    %v4652 = vpack.c.b16 %v3917, %v3910
    %v4653 = vpack.c.b16 %v3918, %v3911
    %v4654 = vpack.c.b16 %v3919, %v3912
    %v4655 = vpack.c.b16 %v3920, %v3913
    %v4656 = vpack.c.b16 %v3921, %v3914
    %v4657 = vpack.c.b16 %v3929, %v3922
    %v4658 = vpack.c.b16 %v3930, %v3923
    %v4659 = vpack.c.b16 %v3931, %v3924
    %v4660 = vpack.c.b16 %v3932, %v3925
    %v4661 = vpack.c.b16 %v3933, %v3926
    %v4662 = vpack.c.b16 %v3934, %v3927
    %v4663 = vpack.c.b16 %v3935, %v3928
    %v4664 = vpack.c.b16 %v3943, %v3936
    %v4665 = vpack.c.b16 %v3944, %v3937
    %v4666 = vpack.c.b16 %v3945, %v3938
    %v4667 = vpack.c.b16 %v3946, %v3939
    %v4668 = vpack.c.b16 %v3947, %v3940
    %v4669 = vpack.c.b16 %v3948, %v3941
    %v4670 = vpack.c.b16 %v3949, %v3942
    %v4671 = vpack.c.b16 %v3957, %v3950
    %v4672 = vpack.c.b16 %v3958, %v3951
    %v4673 = vpack.c.b16 %v3959, %v3952
    %v4674 = vpack.c.b16 %v3960, %v3953
    %v4675 = vpack.c.b16 %v3961, %v3954
    %v4676 = vpack.c.b16 %v3962, %v3955
    %v4677 = vpack.c.b16 %v3963, %v3956
    %v4678 = vpack.c.b16 %v3971, %v3964
    %v4679 = vpack.c.b16 %v3972, %v3965
    %v4680 = vpack.c.b16 %v3973, %v3966
    %v4681 = vpack.c.b16 %v3974, %v3967
    %v4682 = vpack.c.b16 %v3975, %v3968
    %v4683 = vpack.c.b16 %v3976, %v3969
    %v4684 = vpack.c.b16 %v3977, %v3970
    %v4685 = vpack.c.b16 %v3985, %v3978
    %v4686 = vpack.c.b16 %v3986, %v3979
    %v4687 = vpack.c.b16 %v3987, %v3980
    %v4688 = vpack.c.b16 %v3988, %v3981
    %v4689 = vpack.c.b16 %v3989, %v3982
    %v4690 = vpack.c.b16 %v3990, %v3983
    %v4691 = vpack.c.b16 %v3991, %v3984
    %v4692 = vpack.c.b16 %v3999, %v3992
    %v4693 = vpack.c.b16 %v4000, %v3993
    %v4694 = vpack.c.b16 %v4001, %v3994
    %v4695 = vpack.c.b16 %v4002, %v3995
    %v4696 = vpack.c.b16 %v4003, %v3996
    %v4697 = vpack.c.b16 %v4004, %v3997
    %v4698 = vpack.c.b16 %v4005, %v3998
    %v4699 = vpack.c.b16 %v4013, %v4006
    %v4700 = vpack.c.b16 %v4014, %v4007
    %v4701 = vpack.c.b16 %v4015, %v4008
    %v4702 = vpack.c.b16 %v4016, %v4009
    %v4703 = vpack.c.b16 %v4017, %v4010
    %v4704 = vpack.c.b16 %v4018, %v4011
    %v4705 = vpack.c.b16 %v4019, %v4012
    %v4706 = vpack.c.b16 %v4027, %v4020
    %v4707 = vpack.c.b16 %v4028, %v4021
    %v4708 = vpack.c.b16 %v4029, %v4022
    %v4709 = vpack.c.b16 %v4030, %v4023
    %v4710 = vpack.c.b16 %v4031, %v4024
    %v4711 = vpack.c.b16 %v4032, %v4025
    %v4712 = vpack.c.b16 %v4033, %v4026
    %v4713 = vpack.c.b16 %v4041, %v4034
    %v4714 = vpack.c.b16 %v4042, %v4035
    %v4715 = vpack.c.b16 %v4043, %v4036
    %v4716 = vpack.c.b16 %v4044, %v4037
    %v4717 = vpack.c.b16 %v4045, %v4038
    %v4718 = vpack.c.b16 %v4046, %v4039
    %v4719 = vpack.c.b16 %v4047, %v4040
    %v4720 = vpack.c.b16 %v4055, %v4048
    %v4721 = vpack.c.b16 %v4056, %v4049
    %v4722 = vpack.c.b16 %v4057, %v4050
    %v4723 = vpack.c.b16 %v4058, %v4051
    %v4724 = vpack.c.b16 %v4059, %v4052
    %v4725 = vpack.c.b16 %v4060, %v4053
    %v4726 = vpack.c.b16 %v4061, %v4054
    %v4727 = vpack.c.b16 %v4069, %v4062
    %v4728 = vpack.c.b16 %v4070, %v4063
    %v4729 = vpack.c.b16 %v4071, %v4064
    %v4730 = vpack.c.b16 %v4072, %v4065
    %v4731 = vpack.c.b16 %v4073, %v4066
    %v4732 = vpack.c.b16 %v4074, %v4067
    %v4733 = vpack.c.b16 %v4075, %v4068
    %v4734 = vpack.c.b16 %v4083, %v4076
    %v4735 = vpack.c.b16 %v4084, %v4077
    %v4736 = vpack.c.b16 %v4085, %v4078
    %v4737 = vpack.c.b16 %v4086, %v4079
    %v4738 = vpack.c.b16 %v4087, %v4080
    %v4739 = vpack.c.b16 %v4088, %v4081
    %v4740 = vpack.c.b16 %v4089, %v4082
    %v4741 = vpack.c.b16 %v4097, %v4090
    %v4742 = vpack.c.b16 %v4098, %v4091
    %v4743 = vpack.c.b16 %v4099, %v4092
    %v4744 = vpack.c.b16 %v4100, %v4093
    %v4745 = vpack.c.b16 %v4101, %v4094
    %v4746 = vpack.c.b16 %v4102, %v4095
    %v4747 = vpack.c.b16 %v4103, %v4096
    %v4748 = vpack.c.b16 %v4111, %v4104
    %v4749 = vpack.c.b16 %v4112, %v4105
    %v4750 = vpack.c.b16 %v4113, %v4106
    %v4751 = vpack.c.b16 %v4114, %v4107
    %v4752 = vpack.c.b16 %v4115, %v4108
    %v4753 = vpack.c.b16 %v4116, %v4109
    %v4754 = vpack.c.b16 %v4117, %v4110
    %v4755 = vpack.c.b16 %v4125, %v4118
    %v4756 = vpack.c.b16 %v4126, %v4119
    %v4757 = vpack.c.b16 %v4127, %v4120
    %v4758 = vpack.c.b16 %v4128, %v4121
    %v4759 = vpack.c.b16 %v4129, %v4122
    %v4760 = vpack.c.b16 %v4130, %v4123
    %v4761 = vpack.c.b16 %v4131, %v4124
    %v4762 = vpack.c.b16 %v4139, %v4132
    %v4763 = vpack.c.b16 %v4140, %v4133
    %v4764 = vpack.c.b16 %v4141, %v4134
    %v4765 = vpack.c.b16 %v4142, %v4135
    %v4766 = vpack.c.b16 %v4143, %v4136
    %v4767 = vpack.c.b16 %v4144, %v4137
    %v4768 = vpack.c.b16 %v4145, %v4138
    %v4769 = vpack.c.b16 %v4153, %v4146
    %v4770 = vpack.c.b16 %v4154, %v4147
    %v4771 = vpack.c.b16 %v4155, %v4148
    %v4772 = vpack.c.b16 %v4156, %v4149
    %v4773 = vpack.c.b16 %v4157, %v4150
    %v4774 = vpack.c.b16 %v4158, %v4151
    %v4775 = vpack.c.b16 %v4159, %v4152
    %v4776 = vpack.c.b16 %v4167, %v4160
    %v4777 = vpack.c.b16 %v4168, %v4161
    %v4778 = vpack.c.b16 %v4169, %v4162
    %v4779 = vpack.c.b16 %v4170, %v4163
    %v4780 = vpack.c.b16 %v4171, %v4164
    %v4781 = vpack.c.b16 %v4172, %v4165
    %v4782 = vpack.c.b16 %v4173, %v4166
    %v4783 = vpack.c.b16 %v4181, %v4174
    %v4784 = vpack.c.b16 %v4182, %v4175
    %v4785 = vpack.c.b16 %v4183, %v4176
    %v4786 = vpack.c.b16 %v4184, %v4177
    %v4787 = vpack.c.b16 %v4185, %v4178
    %v4788 = vpack.c.b16 %v4186, %v4179
    %v4789 = vpack.c.b16 %v4187, %v4180
    %v4790 = vpack.c.b16 %v4195, %v4188
    %v4791 = vpack.c.b16 %v4196, %v4189
    %v4792 = vpack.c.b16 %v4197, %v4190
    %v4793 = vpack.c.b16 %v4198, %v4191
    %v4794 = vpack.c.b16 %v4199, %v4192
    %v4795 = vpack.c.b16 %v4200, %v4193
    %v4796 = vpack.c.b16 %v4201, %v4194
    %v4797 = vpack.c.b16 %v4209, %v4202
    %v4798 = vpack.c.b16 %v4210, %v4203
    %v4799 = vpack.c.b16 %v4211, %v4204
    %v4800 = vpack.c.b16 %v4212, %v4205
    %v4801 = vpack.c.b16 %v4213, %v4206
    %v4802 = vpack.c.b16 %v4214, %v4207
    %v4803 = vpack.c.b16 %v4215, %v4208
    %v4804 = vpack.c.b16 %v4223, %v4216
    %v4805 = vpack.c.b16 %v4224, %v4217
    %v4806 = vpack.c.b16 %v4225, %v4218
    %v4807 = vpack.c.b16 %v4226, %v4219
    %v4808 = vpack.c.b16 %v4227, %v4220
    %v4809 = vpack.c.b16 %v4228, %v4221
    %v4810 = vpack.c.b16 %v4229, %v4222
    %v4811 = vpack.c.b16 %v4237, %v4230
    %v4812 = vpack.c.b16 %v4238, %v4231
    %v4813 = vpack.c.b16 %v4239, %v4232
    %v4814 = vpack.c.b16 %v4240, %v4233
    %v4815 = vpack.c.b16 %v4241, %v4234
    %v4816 = vpack.c.b16 %v4242, %v4235
    %v4817 = vpack.c.b16 %v4243, %v4236
    %v4818 = vpack.c.b16 %v4251, %v4244
    %v4819 = vpack.c.b16 %v4252, %v4245
    %v4820 = vpack.c.b16 %v4253, %v4246
    %v4821 = vpack.c.b16 %v4254, %v4247
    %v4822 = vpack.c.b16 %v4255, %v4248
    %v4823 = vpack.c.b16 %v4256, %v4249
    %v4824 = vpack.c.b16 %v4257, %v4250
    %v4825 = vpack.c.b16 %v4265, %v4258
    %v4826 = vpack.c.b16 %v4266, %v4259
    %v4827 = vpack.c.b16 %v4267, %v4260
    %v4828 = vpack.c.b16 %v4268, %v4261
    %v4829 = vpack.c.b16 %v4269, %v4262
    %v4830 = vpack.c.b16 %v4270, %v4263
    %v4831 = vpack.c.b16 %v4271, %v4264
    %v4832 = vpack.c.b16 %v4279, %v4272
    %v4833 = vpack.c.b16 %v4280, %v4273
    %v4834 = vpack.c.b16 %v4281, %v4274
    %v4835 = vpack.c.b16 %v4282, %v4275
    %v4836 = vpack.c.b16 %v4283, %v4276
    %v4837 = vpack.c.b16 %v4284, %v4277
    %v4838 = vpack.c.b16 %v4285, %v4278
    %v4839 = vpack.c.b16 %v4293, %v4286
    %v4840 = vpack.c.b16 %v4294, %v4287
    %v4841 = vpack.c.b16 %v4295, %v4288
    %v4842 = vpack.c.b16 %v4296, %v4289
    %v4843 = vpack.c.b16 %v4297, %v4290
    %v4844 = vpack.c.b16 %v4298, %v4291
    %v4845 = vpack.c.b16 %v4299, %v4292
    %v4846 = vpack.c.b16 %v4307, %v4300
    %v4847 = vpack.c.b16 %v4308, %v4301
    %v4848 = vpack.c.b16 %v4309, %v4302
    %v4849 = vpack.c.b16 %v4310, %v4303
    %v4850 = vpack.c.b16 %v4311, %v4304
    %v4851 = vpack.c.b16 %v4312, %v4305
    %v4852 = vpack.c.b16 %v4313, %v4306
    %v4853 = vpack.c.b16 %v4321, %v4314
    %v4854 = vpack.c.b16 %v4322, %v4315
    %v4855 = vpack.c.b16 %v4323, %v4316
    %v4856 = vpack.c.b16 %v4324, %v4317
    %v4857 = vpack.c.b16 %v4325, %v4318
    %v4858 = vpack.c.b16 %v4326, %v4319
    %v4859 = vpack.c.b16 %v4327, %v4320
    %v4860 = vpack.c.b16 %v4335, %v4328
    %v4861 = vpack.c.b16 %v4336, %v4329
    %v4862 = vpack.c.b16 %v4337, %v4330
    %v4863 = vpack.c.b16 %v4338, %v4331
    %v4864 = vpack.c.b16 %v4339, %v4332
    %v4865 = vpack.c.b16 %v4340, %v4333
    %v4866 = vpack.c.b16 %v4341, %v4334
    %v4867 = vpack.c.b16 %v4349, %v4342
    %v4868 = vpack.c.b16 %v4350, %v4343
    %v4869 = vpack.c.b16 %v4351, %v4344
    %v4870 = vpack.c.b16 %v4352, %v4345
    %v4871 = vpack.c.b16 %v4353, %v4346
    %v4872 = vpack.c.b16 %v4354, %v4347
    %v4873 = vpack.c.b16 %v4355, %v4348
    %v4874 = vpack.c.b16 %v4363, %v4356
    %v4875 = vpack.c.b16 %v4364, %v4357
    %v4876 = vpack.c.b16 %v4365, %v4358
    %v4877 = vpack.c.b16 %v4366, %v4359
    %v4878 = vpack.c.b16 %v4367, %v4360
    %v4879 = vpack.c.b16 %v4368, %v4361
    %v4880 = vpack.c.b16 %v4369, %v4362
    %v4881 = vpack.c.b16 %v4377, %v4370
    %v4882 = vpack.c.b16 %v4378, %v4371
    %v4883 = vpack.c.b16 %v4379, %v4372
    %v4884 = vpack.c.b16 %v4380, %v4373
    %v4885 = vpack.c.b16 %v4381, %v4374
    %v4886 = vpack.c.b16 %v4382, %v4375
    %v4887 = vpack.c.b16 %v4383, %v4376
    %v4888 = vpack.c.b16 %v4391, %v4384
    %v4889 = vpack.c.b16 %v4392, %v4385
    %v4890 = vpack.c.b16 %v4393, %v4386
    %v4891 = vpack.c.b16 %v4394, %v4387
    %v4892 = vpack.c.b16 %v4395, %v4388
    %v4893 = vpack.c.b16 %v4396, %v4389
    %v4894 = vpack.c.b16 %v4397, %v4390
    %v4895 = vpack.c.b16 %v4405, %v4398
    %v4896 = vpack.c.b16 %v4406, %v4399
    %v4897 = vpack.c.b16 %v4407, %v4400
    %v4898 = vpack.c.b16 %v4408, %v4401
    %v4899 = vpack.c.b16 %v4409, %v4402
    %v4900 = vpack.c.b16 %v4410, %v4403
    %v4901 = vpack.c.b16 %v4411, %v4404
    %v4902 = vpack.c.b16 %v4419, %v4412
    %v4903 = vpack.c.b16 %v4420, %v4413
    %v4904 = vpack.c.b16 %v4421, %v4414
    %v4905 = vpack.c.b16 %v4422, %v4415
    %v4906 = vpack.c.b16 %v4423, %v4416
    %v4907 = vpack.c.b16 %v4424, %v4417
    %v4908 = vpack.c.b16 %v4425, %v4418
    %v4909 = vpack.c.b16 %v4433, %v4426
    %v4910 = vpack.c.b16 %v4434, %v4427
    %v4911 = vpack.c.b16 %v4435, %v4428
    %v4912 = vpack.c.b16 %v4436, %v4429
    %v4913 = vpack.c.b16 %v4437, %v4430
    %v4914 = vpack.c.b16 %v4438, %v4431
    %v4915 = vpack.c.b16 %v4439, %v4432
    %v4916 = vpack.c.b16 %v4447, %v4440
    %v4917 = vpack.c.b16 %v4448, %v4441
    %v4918 = vpack.c.b16 %v4449, %v4442
    %v4919 = vpack.c.b16 %v4450, %v4443
    %v4920 = vpack.c.b16 %v4451, %v4444
    %v4921 = vpack.c.b16 %v4452, %v4445
    %v4922 = vpack.c.b16 %v4453, %v4446
    %v4923 = vpack.c.b16 %v4461, %v4454
    %v4924 = vpack.c.b16 %v4462, %v4455
    %v4925 = vpack.c.b16 %v4463, %v4456
    %v4926 = vpack.c.b16 %v4464, %v4457
    %v4927 = vpack.c.b16 %v4465, %v4458
    %v4928 = vpack.c.b16 %v4466, %v4459
    %v4929 = vpack.c.b16 %v4467, %v4460
    %v4930 = vpack.c.b16 %v4475, %v4468
    %v4931 = vpack.c.b16 %v4476, %v4469
    %v4932 = vpack.c.b16 %v4477, %v4470
    %v4933 = vpack.c.b16 %v4478, %v4471
    %v4934 = vpack.c.b16 %v4479, %v4472
    %v4935 = vpack.c.b16 %v4480, %v4473
    %v4936 = vpack.c.b16 %v4481, %v4474
    %v4937 = vpack.c.b16 %v4489, %v4482
    %v4938 = vpack.c.b16 %v4490, %v4483
    %v4939 = vpack.c.b16 %v4491, %v4484
    %v4940 = vpack.c.b16 %v4492, %v4485
    %v4941 = vpack.c.b16 %v4493, %v4486
    %v4942 = vpack.c.b16 %v4494, %v4487
    %v4943 = vpack.c.b16 %v4495, %v4488
    %5392 = vmatprep.subr.bf16.mxu0 %v4497
    %5393 = vmatpush1.bf16.msra.mxu0 %v4496
    %5394 = vmatprep.subr.bf16.mxu0 %v4504
    %5395 = vmatpush1.bf16.msra.mxu0 %v4503
    %5396 = vmatprep.subr.bf16.mxu0 %v4511
    %5397 = vmatpush1.bf16.msra.mxu0 %v4510
    %5398 = vmatprep.subr.bf16.mxu0 %v4518
    %5399 = vmatpush1.bf16.msra.mxu0 %v4517
    %5400 = vmatprep.subr.bf16.mxu0 %v4525
    %5401 = vmatpush1.bf16.msra.mxu0 %v4524
    %5402 = vmatprep.subr.bf16.mxu0 %v4532
    %5403 = vmatpush1.bf16.msra.mxu0 %v4531
    %5404 = vmatprep.subr.bf16.mxu0 %v4539
    %5405 = vmatpush1.bf16.msra.mxu0 %v4538
    %5406 = vmatprep.subr.bf16.mxu0 %v4546
    %5407 = vmatpush1.bf16.msra.mxu0 %v4545
    %5408 = vmatprep.subr.bf16.mxu0 %v4553
    %5409 = vmatpush1.bf16.msra.mxu0 %v4552
    %5410 = vmatprep.subr.bf16.mxu0 %v4560
    %5411 = vmatpush1.bf16.msra.mxu0 %v4559
    %5412 = vmatprep.subr.bf16.mxu0 %v4567
    %5413 = vmatpush1.bf16.msra.mxu0 %v4566
    %5414 = vmatprep.subr.bf16.mxu0 %v4574
    %5415 = vmatpush1.bf16.msra.mxu0 %v4573
    %5416 = vmatprep.subr.bf16.mxu0 %v4581
    %5417 = vmatpush1.bf16.msra.mxu0 %v4580
    %5418 = vmatprep.subr.bf16.mxu0 %v4588
    %5419 = vmatpush1.bf16.msra.mxu0 %v4587
    %5420 = vmatprep.subr.bf16.mxu0 %v4595
    %5421 = vmatpush1.bf16.msra.mxu0 %v4594
    %5422 = vmatprep.subr.bf16.mxu0 %v4602
    %5423 = vmatpush1.bf16.msra.mxu0 %v4601
    %5424 = vmatprep.mubr.bf16.mxu0 %v2532
    %5425 = vmatmul.mubr.bf16.gmra.mrb[0].mxu0 %v2531
    %v5426 = vpop.f32.mrb[0].mxu0
    %v5427 = vadd.f32 %v3056, %v5426
    %v5428 = vpop.f32.mrb[0].mxu0
    %v5429 = vadd.f32 %v3060, %v5428
    %v5430 = vpop.f32.mrb[0].mxu0
    %v5431 = vpop.f32.mrb[0].mxu0
    %5432 = vdwg.mxu0
    %5433 = vmatprep.subr.bf16.mxu0 %v4609
    %5434 = vmatpush1.bf16.msra.mxu0 %v4608
    %5435 = vmatprep.subr.bf16.mxu0 %v4616
    %5436 = vmatpush1.bf16.msra.mxu0 %v4615
    %5437 = vmatprep.subr.bf16.mxu0 %v4623
    %5438 = vmatpush1.bf16.msra.mxu0 %v4622
    %5439 = vmatprep.subr.bf16.mxu0 %v4630
    %5440 = vmatpush1.bf16.msra.mxu0 %v4629
    %5441 = vmatprep.subr.bf16.mxu0 %v4637
    %5442 = vmatpush1.bf16.msra.mxu0 %v4636
    %5443 = vmatprep.subr.bf16.mxu0 %v4644
    %5444 = vmatpush1.bf16.msra.mxu0 %v4643
    %5445 = vmatprep.subr.bf16.mxu0 %v4651
    %5446 = vmatpush1.bf16.msra.mxu0 %v4650
    %5447 = vmatprep.subr.bf16.mxu0 %v4658
    %5448 = vmatpush1.bf16.msra.mxu0 %v4657
    %5449 = vmatprep.subr.bf16.mxu0 %v4665
    %5450 = vmatpush1.bf16.msra.mxu0 %v4664
    %5451 = vmatprep.subr.bf16.mxu0 %v4672
    %5452 = vmatpush1.bf16.msra.mxu0 %v4671
    %5453 = vmatprep.subr.bf16.mxu0 %v4679
    %5454 = vmatpush1.bf16.msra.mxu0 %v4678
    %5455 = vmatprep.subr.bf16.mxu0 %v4686
    %5456 = vmatpush1.bf16.msra.mxu0 %v4685
    %5457 = vmatprep.subr.bf16.mxu0 %v4693
    %5458 = vmatpush1.bf16.msra.mxu0 %v4692
    %5459 = vmatprep.subr.bf16.mxu0 %v4700
    %5460 = vmatpush1.bf16.msra.mxu0 %v4699
    %5461 = vmatprep.subr.bf16.mxu0 %v4707
    %5462 = vmatpush1.bf16.msra.mxu0 %v4706
    %5463 = vmatprep.subr.bf16.mxu0 %v4714
    %5464 = vmatpush1.bf16.msra.mxu0 %v4713
    %5465 = vmatprep.mubr.bf16.mxu0 %v2534
    %5466 = vmatmul.mubr.bf16.gmra.mrb[0].mxu0 %v2533
    %v5467 = vpop.f32.mrb[0].mxu0
    %v5468 = vadd.f32 %v5427, %v5467
    %v5469 = vpop.f32.mrb[0].mxu0
    %v5470 = vadd.f32 %v5429, %v5469
    %v5471 = vpop.f32.mrb[0].mxu0
    %v5472 = vpop.f32.mrb[0].mxu0
    %5473 = vdwg.mxu0
    %5474 = vmatprep.subr.bf16.mxu0 %v4721
    %5475 = vmatpush1.bf16.msra.mxu0 %v4720
    %5476 = vmatprep.subr.bf16.mxu0 %v4728
    %5477 = vmatpush1.bf16.msra.mxu0 %v4727
    %5478 = vmatprep.subr.bf16.mxu0 %v4735
    %5479 = vmatpush1.bf16.msra.mxu0 %v4734
    %5480 = vmatprep.subr.bf16.mxu0 %v4742
    %5481 = vmatpush1.bf16.msra.mxu0 %v4741
    %5482 = vmatprep.subr.bf16.mxu0 %v4749
    %5483 = vmatpush1.bf16.msra.mxu0 %v4748
    %5484 = vmatprep.subr.bf16.mxu0 %v4756
    %5485 = vmatpush1.bf16.msra.mxu0 %v4755
    %5486 = vmatprep.subr.bf16.mxu0 %v4763
    %5487 = vmatpush1.bf16.msra.mxu0 %v4762
    %5488 = vmatprep.subr.bf16.mxu0 %v4770
    %5489 = vmatpush1.bf16.msra.mxu0 %v4769
    %5490 = vmatprep.subr.bf16.mxu0 %v4777
    %5491 = vmatpush1.bf16.msra.mxu0 %v4776
    %5492 = vmatprep.subr.bf16.mxu0 %v4784
    %5493 = vmatpush1.bf16.msra.mxu0 %v4783
    %5494 = vmatprep.subr.bf16.mxu0 %v4791
    %5495 = vmatpush1.bf16.msra.mxu0 %v4790
    %5496 = vmatprep.subr.bf16.mxu0 %v4798
    %5497 = vmatpush1.bf16.msra.mxu0 %v4797
    %5498 = vmatprep.subr.bf16.mxu0 %v4805
    %5499 = vmatpush1.bf16.msra.mxu0 %v4804
    %5500 = vmatprep.subr.bf16.mxu0 %v4812
    %5501 = vmatpush1.bf16.msra.mxu0 %v4811
    %5502 = vmatprep.subr.bf16.mxu0 %v4819
    %5503 = vmatpush1.bf16.msra.mxu0 %v4818
    %5504 = vmatprep.subr.bf16.mxu0 %v4826
    %5505 = vmatpush1.bf16.msra.mxu0 %v4825
    %5506 = vmatprep.mubr.bf16.mxu0 %v2536
    %5507 = vmatmul.mubr.bf16.gmra.mrb[0].mxu0 %v2535
    %v5508 = vpop.f32.mrb[0].mxu0
    %v5509 = vadd.f32 %v5468, %v5508
    %v5510 = vpop.f32.mrb[0].mxu0
    %v5511 = vadd.f32 %v5470, %v5510
    %v5512 = vpop.f32.mrb[0].mxu0
    %v5513 = vpop.f32.mrb[0].mxu0
    %5514 = vdwg.mxu0
    %5515 = vmatprep.subr.bf16.mxu0 %v4833
    %5516 = vmatpush1.bf16.msra.mxu0 %v4832
    %5517 = vmatprep.subr.bf16.mxu0 %v4840
    %5518 = vmatpush1.bf16.msra.mxu0 %v4839
    %5519 = vmatprep.subr.bf16.mxu0 %v4847
    %5520 = vmatpush1.bf16.msra.mxu0 %v4846
    %5521 = vmatprep.subr.bf16.mxu0 %v4854
    %5522 = vmatpush1.bf16.msra.mxu0 %v4853
    %5523 = vmatprep.subr.bf16.mxu0 %v4861
    %5524 = vmatpush1.bf16.msra.mxu0 %v4860
    %5525 = vmatprep.subr.bf16.mxu0 %v4868
    %5526 = vmatpush1.bf16.msra.mxu0 %v4867
    %5527 = vmatprep.subr.bf16.mxu0 %v4875
    %5528 = vmatpush1.bf16.msra.mxu0 %v4874
    %5529 = vmatprep.subr.bf16.mxu0 %v4882
    %5530 = vmatpush1.bf16.msra.mxu0 %v4881
    %5531 = vmatprep.subr.bf16.mxu0 %v4889
    %5532 = vmatpush1.bf16.msra.mxu0 %v4888
    %5533 = vmatprep.subr.bf16.mxu0 %v4896
    %5534 = vmatpush1.bf16.msra.mxu0 %v4895
    %5535 = vmatprep.subr.bf16.mxu0 %v4903
    %5536 = vmatpush1.bf16.msra.mxu0 %v4902
    %5537 = vmatprep.subr.bf16.mxu0 %v4910
    %5538 = vmatpush1.bf16.msra.mxu0 %v4909
    %5539 = vmatprep.subr.bf16.mxu0 %v4917
    %5540 = vmatpush1.bf16.msra.mxu0 %v4916
    %5541 = vmatprep.subr.bf16.mxu0 %v4924
    %5542 = vmatpush1.bf16.msra.mxu0 %v4923
    %5543 = vmatprep.subr.bf16.mxu0 %v4931
    %5544 = vmatpush1.bf16.msra.mxu0 %v4930
    %5545 = vmatprep.subr.bf16.mxu0 %v4938
    %5546 = vmatpush1.bf16.msra.mxu0 %v4937
    %5547 = vmatprep.mubr.bf16.mxu0 %v2538
    %5548 = vmatmul.mubr.bf16.gmra.mrb[0].mxu0 %v2537
    %v5549 = vpop.f32.mrb[0].mxu0
    %v5550 = vadd.f32 %v5509, %v5549
    %v5551 = vpop.f32.mrb[0].mxu0
    %v5552 = vadd.f32 %v5511, %v5551
    %v5553 = vpop.f32.mrb[0].mxu0
    %v5554 = vpop.f32.mrb[0].mxu0
    %5555 = vdwg.mxu0
    %5556 = vmatprep.subr.bf16.mxu0 %v4499
    %5557 = vmatpush1.bf16.msra.mxu0 %v4498
    %5558 = vmatprep.subr.bf16.mxu0 %v4506
    %5559 = vmatpush1.bf16.msra.mxu0 %v4505
    %5560 = vmatprep.subr.bf16.mxu0 %v4513
    %5561 = vmatpush1.bf16.msra.mxu0 %v4512
    %5562 = vmatprep.subr.bf16.mxu0 %v4520
    %5563 = vmatpush1.bf16.msra.mxu0 %v4519
    %5564 = vmatprep.subr.bf16.mxu0 %v4527
    %5565 = vmatpush1.bf16.msra.mxu0 %v4526
    %5566 = vmatprep.subr.bf16.mxu0 %v4534
    %5567 = vmatpush1.bf16.msra.mxu0 %v4533
    %5568 = vmatprep.subr.bf16.mxu0 %v4541
    %5569 = vmatpush1.bf16.msra.mxu0 %v4540
    %5570 = vmatprep.subr.bf16.mxu0 %v4548
    %5571 = vmatpush1.bf16.msra.mxu0 %v4547
    %5572 = vmatprep.subr.bf16.mxu0 %v4555
    %5573 = vmatpush1.bf16.msra.mxu0 %v4554
    %5574 = vmatprep.subr.bf16.mxu0 %v4562
    %5575 = vmatpush1.bf16.msra.mxu0 %v4561
    %5576 = vmatprep.subr.bf16.mxu0 %v4569
    %5577 = vmatpush1.bf16.msra.mxu0 %v4568
    %5578 = vmatprep.subr.bf16.mxu0 %v4576
    %5579 = vmatpush1.bf16.msra.mxu0 %v4575
    %5580 = vmatprep.subr.bf16.mxu0 %v4583
    %5581 = vmatpush1.bf16.msra.mxu0 %v4582
    %5582 = vmatprep.subr.bf16.mxu0 %v4590
    %5583 = vmatpush1.bf16.msra.mxu0 %v4589
    %5584 = vmatprep.subr.bf16.mxu0 %v4597
    %5585 = vmatpush1.bf16.msra.mxu0 %v4596
    %5586 = vmatprep.subr.bf16.mxu0 %v4604
    %5587 = vmatpush1.bf16.msra.mxu0 %v4603
    %5588 = vmatprep.mubr.bf16.mxu0 %v2532
    %5589 = vmatmul.mubr.bf16.gmra.mrb[0].mxu0 %v2531
    %v5590 = vpop.f32.mrb[0].mxu0
    %v5591 = vadd.f32 %v3064, %v5590
    %v5592 = vpop.f32.mrb[0].mxu0
    %v5593 = vadd.f32 %v3068, %v5592
    %v5594 = vpop.f32.mrb[0].mxu0
    %v5595 = vpop.f32.mrb[0].mxu0
    %5596 = vdwg.mxu0
    %5597 = vmatprep.subr.bf16.mxu0 %v4611
    %5598 = vmatpush1.bf16.msra.mxu0 %v4610
    %5599 = vmatprep.subr.bf16.mxu0 %v4618
    %5600 = vmatpush1.bf16.msra.mxu0 %v4617
    %5601 = vmatprep.subr.bf16.mxu0 %v4625
    %5602 = vmatpush1.bf16.msra.mxu0 %v4624
    %5603 = vmatprep.subr.bf16.mxu0 %v4632
    %5604 = vmatpush1.bf16.msra.mxu0 %v4631
    %5605 = vmatprep.subr.bf16.mxu0 %v4639
    %5606 = vmatpush1.bf16.msra.mxu0 %v4638
    %5607 = vmatprep.subr.bf16.mxu0 %v4646
    %5608 = vmatpush1.bf16.msra.mxu0 %v4645
    %5609 = vmatprep.subr.bf16.mxu0 %v4653
    %5610 = vmatpush1.bf16.msra.mxu0 %v4652
    %5611 = vmatprep.subr.bf16.mxu0 %v4660
    %5612 = vmatpush1.bf16.msra.mxu0 %v4659
    %5613 = vmatprep.subr.bf16.mxu0 %v4667
    %5614 = vmatpush1.bf16.msra.mxu0 %v4666
    %5615 = vmatprep.subr.bf16.mxu0 %v4674
    %5616 = vmatpush1.bf16.msra.mxu0 %v4673
    %5617 = vmatprep.subr.bf16.mxu0 %v4681
    %5618 = vmatpush1.bf16.msra.mxu0 %v4680
    %5619 = vmatprep.subr.bf16.mxu0 %v4688
    %5620 = vmatpush1.bf16.msra.mxu0 %v4687
    %5621 = vmatprep.subr.bf16.mxu0 %v4695
    %5622 = vmatpush1.bf16.msra.mxu0 %v4694
    %5623 = vmatprep.subr.bf16.mxu0 %v4702
    %5624 = vmatpush1.bf16.msra.mxu0 %v4701
    %5625 = vmatprep.subr.bf16.mxu0 %v4709
    %5626 = vmatpush1.bf16.msra.mxu0 %v4708
    %5627 = vmatprep.subr.bf16.mxu0 %v4716
    %5628 = vmatpush1.bf16.msra.mxu0 %v4715
    %5629 = vmatprep.mubr.bf16.mxu0 %v2534
    %5630 = vmatmul.mubr.bf16.gmra.mrb[0].mxu0 %v2533
    %v5631 = vpop.f32.mrb[0].mxu0
    %v5632 = vadd.f32 %v5591, %v5631
    %v5633 = vpop.f32.mrb[0].mxu0
    %v5634 = vadd.f32 %v5593, %v5633
    %v5635 = vpop.f32.mrb[0].mxu0
    %v5636 = vpop.f32.mrb[0].mxu0
    %5637 = vdwg.mxu0
    %5638 = vmatprep.subr.bf16.mxu0 %v4723
    %5639 = vmatpush1.bf16.msra.mxu0 %v4722
    %5640 = vmatprep.subr.bf16.mxu0 %v4730
    %5641 = vmatpush1.bf16.msra.mxu0 %v4729
    %5642 = vmatprep.subr.bf16.mxu0 %v4737
    %5643 = vmatpush1.bf16.msra.mxu0 %v4736
    %5644 = vmatprep.subr.bf16.mxu0 %v4744
    %5645 = vmatpush1.bf16.msra.mxu0 %v4743
    %5646 = vmatprep.subr.bf16.mxu0 %v4751
    %5647 = vmatpush1.bf16.msra.mxu0 %v4750
    %5648 = vmatprep.subr.bf16.mxu0 %v4758
    %5649 = vmatpush1.bf16.msra.mxu0 %v4757
    %5650 = vmatprep.subr.bf16.mxu0 %v4765
    %5651 = vmatpush1.bf16.msra.mxu0 %v4764
    %5652 = vmatprep.subr.bf16.mxu0 %v4772
    %5653 = vmatpush1.bf16.msra.mxu0 %v4771
    %5654 = vmatprep.subr.bf16.mxu0 %v4779
    %5655 = vmatpush1.bf16.msra.mxu0 %v4778
    %5656 = vmatprep.subr.bf16.mxu0 %v4786
    %5657 = vmatpush1.bf16.msra.mxu0 %v4785
    %5658 = vmatprep.subr.bf16.mxu0 %v4793
    %5659 = vmatpush1.bf16.msra.mxu0 %v4792
    %5660 = vmatprep.subr.bf16.mxu0 %v4800
    %5661 = vmatpush1.bf16.msra.mxu0 %v4799
    %5662 = vmatprep.subr.bf16.mxu0 %v4807
    %5663 = vmatpush1.bf16.msra.mxu0 %v4806
    %5664 = vmatprep.subr.bf16.mxu0 %v4814
    %5665 = vmatpush1.bf16.msra.mxu0 %v4813
    %5666 = vmatprep.subr.bf16.mxu0 %v4821
    %5667 = vmatpush1.bf16.msra.mxu0 %v4820
    %5668 = vmatprep.subr.bf16.mxu0 %v4828
    %5669 = vmatpush1.bf16.msra.mxu0 %v4827
    %5670 = vmatprep.mubr.bf16.mxu0 %v2536
    %5671 = vmatmul.mubr.bf16.gmra.mrb[0].mxu0 %v2535
    %v5672 = vpop.f32.mrb[0].mxu0
    %v5673 = vadd.f32 %v5632, %v5672
    %v5674 = vpop.f32.mrb[0].mxu0
    %v5675 = vadd.f32 %v5634, %v5674
    %v5676 = vpop.f32.mrb[0].mxu0
    %v5677 = vpop.f32.mrb[0].mxu0
    %5678 = vdwg.mxu0
    %5679 = vmatprep.subr.bf16.mxu0 %v4835
    %5680 = vmatpush1.bf16.msra.mxu0 %v4834
    %5681 = vmatprep.subr.bf16.mxu0 %v4842
    %5682 = vmatpush1.bf16.msra.mxu0 %v4841
    %5683 = vmatprep.subr.bf16.mxu0 %v4849
    %5684 = vmatpush1.bf16.msra.mxu0 %v4848
    %5685 = vmatprep.subr.bf16.mxu0 %v4856
    %5686 = vmatpush1.bf16.msra.mxu0 %v4855
    %5687 = vmatprep.subr.bf16.mxu0 %v4863
    %5688 = vmatpush1.bf16.msra.mxu0 %v4862
    %5689 = vmatprep.subr.bf16.mxu0 %v4870
    %5690 = vmatpush1.bf16.msra.mxu0 %v4869
    %5691 = vmatprep.subr.bf16.mxu0 %v4877
    %5692 = vmatpush1.bf16.msra.mxu0 %v4876
    %5693 = vmatprep.subr.bf16.mxu0 %v4884
    %5694 = vmatpush1.bf16.msra.mxu0 %v4883
    %5695 = vmatprep.subr.bf16.mxu0 %v4891
    %5696 = vmatpush1.bf16.msra.mxu0 %v4890
    %5697 = vmatprep.subr.bf16.mxu0 %v4898
    %5698 = vmatpush1.bf16.msra.mxu0 %v4897
    %5699 = vmatprep.subr.bf16.mxu0 %v4905
    %5700 = vmatpush1.bf16.msra.mxu0 %v4904
    %5701 = vmatprep.subr.bf16.mxu0 %v4912
    %5702 = vmatpush1.bf16.msra.mxu0 %v4911
    %5703 = vmatprep.subr.bf16.mxu0 %v4919
    %5704 = vmatpush1.bf16.msra.mxu0 %v4918
    %5705 = vmatprep.subr.bf16.mxu0 %v4926
    %5706 = vmatpush1.bf16.msra.mxu0 %v4925
    %5707 = vmatprep.subr.bf16.mxu0 %v4933
    %5708 = vmatpush1.bf16.msra.mxu0 %v4932
    %5709 = vmatprep.subr.bf16.mxu0 %v4940
    %5710 = vmatpush1.bf16.msra.mxu0 %v4939
    %5711 = vmatprep.mubr.bf16.mxu0 %v2538
    %5712 = vmatmul.mubr.bf16.gmra.mrb[0].mxu0 %v2537
    %v5713 = vpop.f32.mrb[0].mxu0
    %v5714 = vadd.f32 %v5673, %v5713
    %v5715 = vpop.f32.mrb[0].mxu0
    %v5716 = vadd.f32 %v5675, %v5715
    %v5717 = vpop.f32.mrb[0].mxu0
    %v5718 = vpop.f32.mrb[0].mxu0
    %5719 = vdwg.mxu0
    %5720 = vmatprep.subr.bf16.mxu0 %v4501
    %5721 = vmatpush1.bf16.msra.mxu0 %v4500
    %5722 = vmatprep.subr.bf16.mxu0 %v4508
    %5723 = vmatpush1.bf16.msra.mxu0 %v4507
    %5724 = vmatprep.subr.bf16.mxu0 %v4515
    %5725 = vmatpush1.bf16.msra.mxu0 %v4514
    %5726 = vmatprep.subr.bf16.mxu0 %v4522
    %5727 = vmatpush1.bf16.msra.mxu0 %v4521
    %5728 = vmatprep.subr.bf16.mxu0 %v4529
    %5729 = vmatpush1.bf16.msra.mxu0 %v4528
    %5730 = vmatprep.subr.bf16.mxu0 %v4536
    %5731 = vmatpush1.bf16.msra.mxu0 %v4535
    %5732 = vmatprep.subr.bf16.mxu0 %v4543
    %5733 = vmatpush1.bf16.msra.mxu0 %v4542
    %5734 = vmatprep.subr.bf16.mxu0 %v4550
    %5735 = vmatpush1.bf16.msra.mxu0 %v4549
    %5736 = vmatprep.subr.bf16.mxu0 %v4557
    %5737 = vmatpush1.bf16.msra.mxu0 %v4556
    %5738 = vmatprep.subr.bf16.mxu0 %v4564
    %5739 = vmatpush1.bf16.msra.mxu0 %v4563
    %5740 = vmatprep.subr.bf16.mxu0 %v4571
    %5741 = vmatpush1.bf16.msra.mxu0 %v4570
    %5742 = vmatprep.subr.bf16.mxu0 %v4578
    %5743 = vmatpush1.bf16.msra.mxu0 %v4577
    %5744 = vmatprep.subr.bf16.mxu0 %v4585
    %5745 = vmatpush1.bf16.msra.mxu0 %v4584
    %5746 = vmatprep.subr.bf16.mxu0 %v4592
    %5747 = vmatpush1.bf16.msra.mxu0 %v4591
    %5748 = vmatprep.subr.bf16.mxu0 %v4599
    %5749 = vmatpush1.bf16.msra.mxu0 %v4598
    %5750 = vmatprep.subr.bf16.mxu0 %v4606
    %5751 = vmatpush1.bf16.msra.mxu0 %v4605
    %5752 = vmatprep.mubr.bf16.mxu0 %v2532
    %5753 = vmatmul.mubr.bf16.gmra.mrb[0].mxu0 %v2531
    %v5754 = vpop.f32.mrb[0].mxu0
    %v5755 = vadd.f32 %v3072, %v5754
    %v5756 = vpop.f32.mrb[0].mxu0
    %v5757 = vadd.f32 %v3076, %v5756
    %v5758 = vpop.f32.mrb[0].mxu0
    %v5759 = vpop.f32.mrb[0].mxu0
    %5760 = vdwg.mxu0
    %5761 = vmatprep.subr.bf16.mxu0 %v4613
    %5762 = vmatpush1.bf16.msra.mxu0 %v4612
    %5763 = vmatprep.subr.bf16.mxu0 %v4620
    %5764 = vmatpush1.bf16.msra.mxu0 %v4619
    %5765 = vmatprep.subr.bf16.mxu0 %v4627
    %5766 = vmatpush1.bf16.msra.mxu0 %v4626
    %5767 = vmatprep.subr.bf16.mxu0 %v4634
    %5768 = vmatpush1.bf16.msra.mxu0 %v4633
    %5769 = vmatprep.subr.bf16.mxu0 %v4641
    %5770 = vmatpush1.bf16.msra.mxu0 %v4640
    %5771 = vmatprep.subr.bf16.mxu0 %v4648
    %5772 = vmatpush1.bf16.msra.mxu0 %v4647
    %5773 = vmatprep.subr.bf16.mxu0 %v4655
    %5774 = vmatpush1.bf16.msra.mxu0 %v4654
    %5775 = vmatprep.subr.bf16.mxu0 %v4662
    %5776 = vmatpush1.bf16.msra.mxu0 %v4661
    %5777 = vmatprep.subr.bf16.mxu0 %v4669
    %5778 = vmatpush1.bf16.msra.mxu0 %v4668
    %5779 = vmatprep.subr.bf16.mxu0 %v4676
    %5780 = vmatpush1.bf16.msra.mxu0 %v4675
    %5781 = vmatprep.subr.bf16.mxu0 %v4683
    %5782 = vmatpush1.bf16.msra.mxu0 %v4682
    %5783 = vmatprep.subr.bf16.mxu0 %v4690
    %5784 = vmatpush1.bf16.msra.mxu0 %v4689
    %5785 = vmatprep.subr.bf16.mxu0 %v4697
    %5786 = vmatpush1.bf16.msra.mxu0 %v4696
    %5787 = vmatprep.subr.bf16.mxu0 %v4704
    %5788 = vmatpush1.bf16.msra.mxu0 %v4703
    %5789 = vmatprep.subr.bf16.mxu0 %v4711
    %5790 = vmatpush1.bf16.msra.mxu0 %v4710
    %5791 = vmatprep.subr.bf16.mxu0 %v4718
    %5792 = vmatpush1.bf16.msra.mxu0 %v4717
    %5793 = vmatprep.mubr.bf16.mxu0 %v2534
    %5794 = vmatmul.mubr.bf16.gmra.mrb[0].mxu0 %v2533
    %v5795 = vpop.f32.mrb[0].mxu0
    %v5796 = vadd.f32 %v5755, %v5795
    %v5797 = vpop.f32.mrb[0].mxu0
    %v5798 = vadd.f32 %v5757, %v5797
    %v5799 = vpop.f32.mrb[0].mxu0
    %v5800 = vpop.f32.mrb[0].mxu0
    %5801 = vdwg.mxu0
    %5802 = vmatprep.subr.bf16.mxu0 %v4725
    %5803 = vmatpush1.bf16.msra.mxu0 %v4724
    %5804 = vmatprep.subr.bf16.mxu0 %v4732
    %5805 = vmatpush1.bf16.msra.mxu0 %v4731
    %5806 = vmatprep.subr.bf16.mxu0 %v4739
    %5807 = vmatpush1.bf16.msra.mxu0 %v4738
    %5808 = vmatprep.subr.bf16.mxu0 %v4746
    %5809 = vmatpush1.bf16.msra.mxu0 %v4745
    %5810 = vmatprep.subr.bf16.mxu0 %v4753
    %5811 = vmatpush1.bf16.msra.mxu0 %v4752
    %5812 = vmatprep.subr.bf16.mxu0 %v4760
    %5813 = vmatpush1.bf16.msra.mxu0 %v4759
    %5814 = vmatprep.subr.bf16.mxu0 %v4767
    %5815 = vmatpush1.bf16.msra.mxu0 %v4766
    %5816 = vmatprep.subr.bf16.mxu0 %v4774
    %5817 = vmatpush1.bf16.msra.mxu0 %v4773
    %5818 = vmatprep.subr.bf16.mxu0 %v4781
    %5819 = vmatpush1.bf16.msra.mxu0 %v4780
    %5820 = vmatprep.subr.bf16.mxu0 %v4788
    %5821 = vmatpush1.bf16.msra.mxu0 %v4787
    %5822 = vmatprep.subr.bf16.mxu0 %v4795
    %5823 = vmatpush1.bf16.msra.mxu0 %v4794
    %5824 = vmatprep.subr.bf16.mxu0 %v4802
    %5825 = vmatpush1.bf16.msra.mxu0 %v4801
    %5826 = vmatprep.subr.bf16.mxu0 %v4809
    %5827 = vmatpush1.bf16.msra.mxu0 %v4808
    %5828 = vmatprep.subr.bf16.mxu0 %v4816
    %5829 = vmatpush1.bf16.msra.mxu0 %v4815
    %5830 = vmatprep.subr.bf16.mxu0 %v4823
    %5831 = vmatpush1.bf16.msra.mxu0 %v4822
    %5832 = vmatprep.subr.bf16.mxu0 %v4830
    %5833 = vmatpush1.bf16.msra.mxu0 %v4829
    %5834 = vmatprep.mubr.bf16.mxu0 %v2536
    %5835 = vmatmul.mubr.bf16.gmra.mrb[0].mxu0 %v2535
    %v5836 = vpop.f32.mrb[0].mxu0
    %v5837 = vadd.f32 %v5796, %v5836
    %v5838 = vpop.f32.mrb[0].mxu0
    %v5839 = vadd.f32 %v5798, %v5838
    %v5840 = vpop.f32.mrb[0].mxu0
    %v5841 = vpop.f32.mrb[0].mxu0
    %5842 = vdwg.mxu0
    %5843 = vmatprep.subr.bf16.mxu0 %v4837
    %5844 = vmatpush1.bf16.msra.mxu0 %v4836
    %5845 = vmatprep.subr.bf16.mxu0 %v4844
    %5846 = vmatpush1.bf16.msra.mxu0 %v4843
    %5847 = vmatprep.subr.bf16.mxu0 %v4851
    %5848 = vmatpush1.bf16.msra.mxu0 %v4850
    %5849 = vmatprep.subr.bf16.mxu0 %v4858
    %5850 = vmatpush1.bf16.msra.mxu0 %v4857
    %5851 = vmatprep.subr.bf16.mxu0 %v4865
    %5852 = vmatpush1.bf16.msra.mxu0 %v4864
    %5853 = vmatprep.subr.bf16.mxu0 %v4872
    %5854 = vmatpush1.bf16.msra.mxu0 %v4871
    %5855 = vmatprep.subr.bf16.mxu0 %v4879
    %5856 = vmatpush1.bf16.msra.mxu0 %v4878
    %5857 = vmatprep.subr.bf16.mxu0 %v4886
    %5858 = vmatpush1.bf16.msra.mxu0 %v4885
    %5859 = vmatprep.subr.bf16.mxu0 %v4893
    %5860 = vmatpush1.bf16.msra.mxu0 %v4892
    %5861 = vmatprep.subr.bf16.mxu0 %v4900
    %5862 = vmatpush1.bf16.msra.mxu0 %v4899
    %5863 = vmatprep.subr.bf16.mxu0 %v4907
    %5864 = vmatpush1.bf16.msra.mxu0 %v4906
    %5865 = vmatprep.subr.bf16.mxu0 %v4914
    %5866 = vmatpush1.bf16.msra.mxu0 %v4913
    %5867 = vmatprep.subr.bf16.mxu0 %v4921
    %5868 = vmatpush1.bf16.msra.mxu0 %v4920
    %5869 = vmatprep.subr.bf16.mxu0 %v4928
    %5870 = vmatpush1.bf16.msra.mxu0 %v4927
    %5871 = vmatprep.subr.bf16.mxu0 %v4935
    %5872 = vmatpush1.bf16.msra.mxu0 %v4934
    %5873 = vmatprep.subr.bf16.mxu0 %v4942
    %5874 = vmatpush1.bf16.msra.mxu0 %v4941
    %5875 = vmatprep.mubr.bf16.mxu0 %v2538
    %5876 = vmatmul.mubr.bf16.gmra.mrb[0].mxu0 %v2537
    %v5877 = vpop.f32.mrb[0].mxu0
    %v5878 = vadd.f32 %v5837, %v5877
    %v5879 = vpop.f32.mrb[0].mxu0
    %v5880 = vadd.f32 %v5839, %v5879
    %v5881 = vpop.f32.mrb[0].mxu0
    %v5882 = vpop.f32.mrb[0].mxu0
    %5883 = vdwg.mxu0
    %5884 = vmatprep.subr.bf16.mxu0 0
    %5885 = vmatpush1.bf16.msra.mxu0 %v4502
    %5886 = vmatprep.subr.bf16.mxu0 0
    %5887 = vmatpush1.bf16.msra.mxu0 %v4509
    %5888 = vmatprep.subr.bf16.mxu0 0
    %5889 = vmatpush1.bf16.msra.mxu0 %v4516
    %5890 = vmatprep.subr.bf16.mxu0 0
    %5891 = vmatpush1.bf16.msra.mxu0 %v4523
    %5892 = vmatprep.subr.bf16.mxu0 0
    %5893 = vmatpush1.bf16.msra.mxu0 %v4530
    %5894 = vmatprep.subr.bf16.mxu0 0
    %5895 = vmatpush1.bf16.msra.mxu0 %v4537
    %5896 = vmatprep.subr.bf16.mxu0 0
    %5897 = vmatpush1.bf16.msra.mxu0 %v4544
    %5898 = vmatprep.subr.bf16.mxu0 0
    %5899 = vmatpush1.bf16.msra.mxu0 %v4551
    %5900 = vmatprep.subr.bf16.mxu0 0
    %5901 = vmatpush1.bf16.msra.mxu0 %v4558
    %5902 = vmatprep.subr.bf16.mxu0 0
    %5903 = vmatpush1.bf16.msra.mxu0 %v4565
    %5904 = vmatprep.subr.bf16.mxu0 0
    %5905 = vmatpush1.bf16.msra.mxu0 %v4572
    %5906 = vmatprep.subr.bf16.mxu0 0
    %5907 = vmatpush1.bf16.msra.mxu0 %v4579
    %5908 = vmatprep.subr.bf16.mxu0 0
    %5909 = vmatpush1.bf16.msra.mxu0 %v4586
    %5910 = vmatprep.subr.bf16.mxu0 0
    %5911 = vmatpush1.bf16.msra.mxu0 %v4593
    %5912 = vmatprep.subr.bf16.mxu0 0
    %5913 = vmatpush1.bf16.msra.mxu0 %v4600
    %5914 = vmatprep.subr.bf16.mxu0 0
    %5915 = vmatpush1.bf16.msra.mxu0 %v4607
    %5916 = vmatprep.mubr.bf16.mxu0 %v2532
    %5917 = vmatmul.mubr.bf16.gmra.mrb[0].mxu0 %v2531
    %v5918 = vpop.f32.mrb[0].mxu0
    %v5919 = vadd.f32 %v3080, %v5918
    %v5920 = vpop.f32.mrb[0].mxu0
    %v5921 = vpop.f32.mrb[0].mxu0
    %v5922 = vpop.f32.mrb[0].mxu0
    %5923 = vdwg.mxu0
    %5924 = vmatprep.subr.bf16.mxu0 0
    %5925 = vmatpush1.bf16.msra.mxu0 %v4614
    %5926 = vmatprep.subr.bf16.mxu0 0
    %5927 = vmatpush1.bf16.msra.mxu0 %v4621
    %5928 = vmatprep.subr.bf16.mxu0 0
    %5929 = vmatpush1.bf16.msra.mxu0 %v4628
    %5930 = vmatprep.subr.bf16.mxu0 0
    %5931 = vmatpush1.bf16.msra.mxu0 %v4635
    %5932 = vmatprep.subr.bf16.mxu0 0
    %5933 = vmatpush1.bf16.msra.mxu0 %v4642
    %5934 = vmatprep.subr.bf16.mxu0 0
    %5935 = vmatpush1.bf16.msra.mxu0 %v4649
    %5936 = vmatprep.subr.bf16.mxu0 0
    %5937 = vmatpush1.bf16.msra.mxu0 %v4656
    %5938 = vmatprep.subr.bf16.mxu0 0
    %5939 = vmatpush1.bf16.msra.mxu0 %v4663
    %5940 = vmatprep.subr.bf16.mxu0 0
    %5941 = vmatpush1.bf16.msra.mxu0 %v4670
    %5942 = vmatprep.subr.bf16.mxu0 0
    %5943 = vmatpush1.bf16.msra.mxu0 %v4677
    %5944 = vmatprep.subr.bf16.mxu0 0
    %5945 = vmatpush1.bf16.msra.mxu0 %v4684
    %5946 = vmatprep.subr.bf16.mxu0 0
    %5947 = vmatpush1.bf16.msra.mxu0 %v4691
    %5948 = vmatprep.subr.bf16.mxu0 0
    %5949 = vmatpush1.bf16.msra.mxu0 %v4698
    %5950 = vmatprep.subr.bf16.mxu0 0
    %5951 = vmatpush1.bf16.msra.mxu0 %v4705
    %5952 = vmatprep.subr.bf16.mxu0 0
    %5953 = vmatpush1.bf16.msra.mxu0 %v4712
    %5954 = vmatprep.subr.bf16.mxu0 0
    %5955 = vmatpush1.bf16.msra.mxu0 %v4719
    %5956 = vmatprep.mubr.bf16.mxu0 %v2534
    %5957 = vmatmul.mubr.bf16.gmra.mrb[0].mxu0 %v2533
    %v5958 = vpop.f32.mrb[0].mxu0
    %v5959 = vadd.f32 %v5919, %v5958
    %v5960 = vpop.f32.mrb[0].mxu0
    %v5961 = vpop.f32.mrb[0].mxu0
    %v5962 = vpop.f32.mrb[0].mxu0
    %5963 = vdwg.mxu0
    %5964 = vmatprep.subr.bf16.mxu0 0
    %5965 = vmatpush1.bf16.msra.mxu0 %v4726
    %5966 = vmatprep.subr.bf16.mxu0 0
    %5967 = vmatpush1.bf16.msra.mxu0 %v4733
    %5968 = vmatprep.subr.bf16.mxu0 0
    %5969 = vmatpush1.bf16.msra.mxu0 %v4740
    %5970 = vmatprep.subr.bf16.mxu0 0
    %5971 = vmatpush1.bf16.msra.mxu0 %v4747
    %5972 = vmatprep.subr.bf16.mxu0 0
    %5973 = vmatpush1.bf16.msra.mxu0 %v4754
    %5974 = vmatprep.subr.bf16.mxu0 0
    %5975 = vmatpush1.bf16.msra.mxu0 %v4761
    %5976 = vmatprep.subr.bf16.mxu0 0
    %5977 = vmatpush1.bf16.msra.mxu0 %v4768
    %5978 = vmatprep.subr.bf16.mxu0 0
    %5979 = vmatpush1.bf16.msra.mxu0 %v4775
    %5980 = vmatprep.subr.bf16.mxu0 0
    %5981 = vmatpush1.bf16.msra.mxu0 %v4782
    %5982 = vmatprep.subr.bf16.mxu0 0
    %5983 = vmatpush1.bf16.msra.mxu0 %v4789
    %5984 = vmatprep.subr.bf16.mxu0 0
    %5985 = vmatpush1.bf16.msra.mxu0 %v4796
    %5986 = vmatprep.subr.bf16.mxu0 0
    %5987 = vmatpush1.bf16.msra.mxu0 %v4803
    %5988 = vmatprep.subr.bf16.mxu0 0
    %5989 = vmatpush1.bf16.msra.mxu0 %v4810
    %5990 = vmatprep.subr.bf16.mxu0 0
    %5991 = vmatpush1.bf16.msra.mxu0 %v4817
    %5992 = vmatprep.subr.bf16.mxu0 0
    %5993 = vmatpush1.bf16.msra.mxu0 %v4824
    %5994 = vmatprep.subr.bf16.mxu0 0
    %5995 = vmatpush1.bf16.msra.mxu0 %v4831
    %5996 = vmatprep.mubr.bf16.mxu0 %v2536
    %5997 = vmatmul.mubr.bf16.gmra.mrb[0].mxu0 %v2535
    %v5998 = vpop.f32.mrb[0].mxu0
    %v5999 = vadd.f32 %v5959, %v5998
    %v6000 = vpop.f32.mrb[0].mxu0
    %v6001 = vpop.f32.mrb[0].mxu0
    %v6002 = vpop.f32.mrb[0].mxu0
    %6003 = vdwg.mxu0
    %6004 = vmatprep.subr.bf16.mxu0 0
    %6005 = vmatpush1.bf16.msra.mxu0 %v4838
    %6006 = vmatprep.subr.bf16.mxu0 0
    %6007 = vmatpush1.bf16.msra.mxu0 %v4845
    %6008 = vmatprep.subr.bf16.mxu0 0
    %6009 = vmatpush1.bf16.msra.mxu0 %v4852
    %6010 = vmatprep.subr.bf16.mxu0 0
    %6011 = vmatpush1.bf16.msra.mxu0 %v4859
    %6012 = vmatprep.subr.bf16.mxu0 0
    %6013 = vmatpush1.bf16.msra.mxu0 %v4866
    %6014 = vmatprep.subr.bf16.mxu0 0
    %6015 = vmatpush1.bf16.msra.mxu0 %v4873
    %6016 = vmatprep.subr.bf16.mxu0 0
    %6017 = vmatpush1.bf16.msra.mxu0 %v4880
    %6018 = vmatprep.subr.bf16.mxu0 0
    %6019 = vmatpush1.bf16.msra.mxu0 %v4887
    %6020 = vmatprep.subr.bf16.mxu0 0
    %6021 = vmatpush1.bf16.msra.mxu0 %v4894
    %6022 = vmatprep.subr.bf16.mxu0 0
    %6023 = vmatpush1.bf16.msra.mxu0 %v4901
    %6024 = vmatprep.subr.bf16.mxu0 0
    %6025 = vmatpush1.bf16.msra.mxu0 %v4908
    %6026 = vmatprep.subr.bf16.mxu0 0
    %6027 = vmatpush1.bf16.msra.mxu0 %v4915
    %6028 = vmatprep.subr.bf16.mxu0 0
    %6029 = vmatpush1.bf16.msra.mxu0 %v4922
    %6030 = vmatprep.subr.bf16.mxu0 0
    %6031 = vmatpush1.bf16.msra.mxu0 %v4929
    %6032 = vmatprep.subr.bf16.mxu0 0
    %6033 = vmatpush1.bf16.msra.mxu0 %v4936
    %6034 = vmatprep.subr.bf16.mxu0 0
    %6035 = vmatpush1.bf16.msra.mxu0 %v4943
    %6036 = vmatprep.mubr.bf16.mxu0 %v2538
    %6037 = vmatmul.mubr.bf16.gmra.mrb[0].mxu0 %v2537
    %v6038 = vpop.f32.mrb[0].mxu0
    %v6039 = vadd.f32 %v5999, %v6038
    %v6040 = vpop.f32.mrb[0].mxu0
    %v6041 = vpop.f32.mrb[0].mxu0
    %v6042 = vpop.f32.mrb[0].mxu0
    %6043 = vdwg.mxu0
    %v6044 = vtanh.pop %v5550
    %v6045 = vtanh.pop %v5552
    %v6046 = vtanh.pop %v5714
    %v6047 = vtanh.pop %v5716
    %v6048 = vtanh.pop %v5878
    %v6049 = vtanh.pop %v5880
    %v6050 = vtanh.pop %v6039
    %6051 = vst [vmem:[#allocation2] sm:$0xff] %v6044
    %6052 = vst [vmem:[#allocation2 + $0x8] sm:$0xff] %v6045
    %6053 = vst [vmem:[#allocation2 + $0x10] sm:$0xff] %v6046
    %6054 = vst [vmem:[#allocation2 + $0x18] sm:$0xff] %v6047
    %6055 = vst [vmem:[#allocation2 + $0x20] sm:$0xff] %v6048
    %6056 = vst [vmem:[#allocation2 + $0x28] sm:$0xff] %v6049
    %vm6057 = vcmask 130048
    %6058 = vst.msk [vmem:[#allocation2 + $0x30] sm:$0xff] %vm6057, %v6050
    // Predicated region
    $region38: #{tpu_custom_call.1} parent=1 // pred_check
      _
    $region39: #{tpu_custom_call.1} parent=1 // pred_check_branch
      %6060 = sbr.rel (0) target = $region41
    $region40: #{tpu_custom_call.1} parent=1 // pred_region
      %s6062 = ssub.s32 896, 896
      %6063 = vsyncadd [#allocation3], %s6062
      %s6065 = sshll.u32 [#allocation2], 4
      %s6066 = int_to_ptr.vmem [resolvable:$true] %s6065
      %6068 = dma.vmem_to_hbm [thread:$0]  %s6066, 896, %s9, [#allocation3]
    $region41: #{tpu_custom_call.1} parent=1 // pred_fallthru
      _
    // Predicated region
    $region42: #{tpu_custom_call.1} parent=1 // pred_check
      _
    $region43: #{tpu_custom_call.1} parent=1 // pred_check_branch
      %6070 = sbr.rel (0) target = $region45
    $region44: #{tpu_custom_call.1} parent=1 // pred_region
      %6071 = dma.done [#allocation3], 896
    $region45: #{tpu_custom_call.1} parent=1 // pred_fallthru
      _
    %6072 = vsyncpa [#allocation3], 1

</llo_original>
